<compile_context>
chip_gen: v7x
topology: tpu7x:2x2x1
jax: 0.10.0
libtpu: 0.0.40
codegen_flags: <defaults>
</compile_context>

<pallas_src>
import functools

import jax
import jax.numpy as jnp
import numpy as np
from jax.experimental import pallas as pl
from jax.experimental.pallas import tpu as pltpu

N_BINS = 15
LOW_HIGH_BIN = 0.3
LANES = 128


def _bins_ece_kernel(logits_ref, labels_ref,
                     cnt_ref, conf_ref, lab_ref, nlab_ref, ncor_ref,
                     *, n_bins, sub_n, tile_n, tiles_per_chunk, n_true):
    g = pl.program_id(0)          # parallel chunk
    s = pl.program_id(1)          # sequential tile within the chunk

    @pl.when(s == 0)
    def _init():
        cnt_ref[...] = jnp.zeros_like(cnt_ref)
        conf_ref[...] = jnp.zeros_like(conf_ref)
        lab_ref[...] = jnp.zeros_like(lab_ref)
        nlab_ref[...] = jnp.zeros_like(nlab_ref)
        ncor_ref[...] = jnp.zeros_like(ncor_ref)

    c = logits_ref.shape[0]
    base_col = (g * tiles_per_chunk + s) * tile_n

    # class-index helpers are identical for every sub-chunk -> hoisted
    row = jax.lax.broadcasted_iota(jnp.int32, (c, sub_n), 0)
    rowf = row.astype(jnp.float32)

    n_fold = sub_n // LANES

    def fold(v):                                   # (C, sub_n) -> (C, 128), VPU adds only
        acc = v[:, 0:LANES]
        for t in range(1, n_fold):
            acc = acc + v[:, t * LANES:(t + 1) * LANES]
        return acc

    for j in range(tile_n // sub_n):
        x = logits_ref[:, pl.ds(j * sub_n, sub_n)].astype(jnp.float32)   # (C, sub_n)
        labels = labels_ref[:, pl.ds(j * sub_n, sub_n)]                   # (1, sub_n)

        col = (base_col + j * sub_n
               + jax.lax.broadcasted_iota(jnp.int32, (1, sub_n), 1))
        valid = col < n_true                                               # padded tail mask

        # softmax over classes (sublane axis); exact reciprocal (bin-edge safety)
        m = jnp.max(x, axis=0, keepdims=True)
        e = jnp.exp(x - m)
        soft = e * pl.reciprocal(jnp.sum(e, axis=0, keepdims=True))        # (C, sub_n)

        # argmax over classes on the raw logits (first-max tie behaviour)
        pred = jnp.min(jnp.where(x == m, rowf, jnp.float32(c)),
                       axis=0, keepdims=True)                              # (1, sub_n)
        pred1 = (rowf == pred).astype(jnp.float32)
        # padded label columns are -1, so no extra valid-mask is needed here
        lab1 = (row == labels).astype(jnp.float32)

        nlab_ref[0] += fold(lab1)
        ncor_ref[0] += fold(lab1 * pred1)

        # single bin index with (lo, hi] semantics; -1 => belongs to no bin
        bidx = jnp.ceil(soft * jnp.float32(n_bins)) - 1.0
        bidx = jnp.minimum(bidx, jnp.float32(n_bins - 1))
        bidx = jnp.where(valid, bidx, jnp.float32(-1.0))

        for b in range(n_bins):
            mb = bidx == jnp.float32(b)
            cnt_ref[0, b] += fold(jnp.where(mb, 1.0, 0.0))
            conf_ref[0, b] += fold(jnp.where(mb, soft, 0.0))
            lab_ref[0, b] += fold(jnp.where(mb, lab1, 0.0))


def bins_ece(logits, labels, n_bins=N_BINS, low_high_bin=LOW_HIGH_BIN,
             tile_n=2048, sub_n=512, num_chunks=2, num_classes=None):
    """Pallas implementation of binsECELoss.forward.

    Returns (per_class_sce_high, per_class_sce_low, classes_acc), each of
    length num_classes (defaults to max(labels)+1, like the reference).
    """
    n, c = logits.shape
    if num_classes is None:
        # TODO(synk): forces a device->host sync; prefer passing num_classes.
        num_classes = int(jnp.max(labels)) + 1

    sub_n = max(LANES, (int(sub_n) // LANES) * LANES)
    tile_n = max(sub_n, (int(tile_n) // sub_n) * sub_n)
    tile_n = min(tile_n, max(sub_n, pl.cdiv(n, sub_n) * sub_n))   # no oversized tiles

    total_tiles = pl.cdiv(n, tile_n)
    n_chunks = max(1, min(int(num_chunks), total_tiles))          # parallel axis (v7x: 2 TCs)
    tiles_per_chunk = pl.cdiv(total_tiles, n_chunks)
    n_pad = n_chunks * tiles_per_chunk * tile_n

    logits_t = jnp.transpose(logits)                 # (C, N): batch lane-dense
    labels_i = labels.astype(jnp.int32).reshape(1, n)
    if n_pad != n:
        logits_t = jnp.pad(logits_t, ((0, 0), (0, n_pad - n)))
        labels_i = jnp.pad(labels_i, ((0, 0), (0, n_pad - n)),
                           constant_values=-1)

    kernel = functools.partial(
        _bins_ece_kernel, n_bins=n_bins, sub_n=sub_n, tile_n=tile_n,
        tiles_per_chunk=tiles_per_chunk, n_true=n)

    bin_sds = jax.ShapeDtypeStruct((n_chunks, n_bins, c, LANES), jnp.float32)
    cls_sds = jax.ShapeDtypeStruct((n_chunks, c, LANES), jnp.float32)
    bin_spec = pl.BlockSpec((1, n_bins, c, LANES), lambda gi, si: (gi, 0, 0, 0))
    cls_spec = pl.BlockSpec((1, c, LANES), lambda gi, si: (gi, 0, 0))

    spc = tiles_per_chunk
    cnt_p, conf_p, lab_p, nlab_p, ncor_p = pl.pallas_call(
        kernel,
        out_shape=(bin_sds, bin_sds, bin_sds, cls_sds, cls_sds),
        grid_spec=pltpu.PrefetchScalarGridSpec(
            num_scalar_prefetch=0,
            grid=(n_chunks, tiles_per_chunk),
            in_specs=[pl.BlockSpec((c, tile_n), lambda gi, si: (0, gi * spc + si)),
                      pl.BlockSpec((1, tile_n), lambda gi, si: (0, gi * spc + si))],
            out_specs=(bin_spec, bin_spec, bin_spec, cls_spec, cls_spec)),
        compiler_params=pltpu.CompilerParams(
            dimension_semantics=("parallel", "arbitrary")),
    )(logits_t, labels_i)

    # Tiny finalize in plain JAX: cross-lane / cross-chunk reduce + SCE split.
    cnt = jnp.sum(cnt_p, axis=(0, 3))          # (n_bins, C)
    conf = jnp.sum(conf_p, axis=(0, 3))
    lab = jnp.sum(lab_p, axis=(0, 3))
    nlab = jnp.sum(nlab_p, axis=(0, 2))        # (C,)
    ncor = jnp.sum(ncor_p, axis=(0, 2))

    boundaries = np.linspace(0.0, 1.0, n_bins + 1).astype(np.float32)
    is_high = jnp.asarray(
        np.array([float(lo) > low_high_bin for lo in boundaries[:-1]]))

    safe = jnp.where(cnt > 0, cnt, 1.0)
    contrib = jnp.where(cnt > 0,
                        jnp.abs(conf / safe - lab / safe) * (cnt / float(n)),
                        0.0)                                              # (n_bins, C)
    sce_hi = jnp.sum(jnp.where(is_high[:, None], contrib, 0.0), axis=0)
    sce_lo = jnp.sum(jnp.where(is_high[:, None], 0.0, contrib), axis=0)
    # NOTE: safe divide -> 0.0 for a class absent from labels (reference: NaN).
    cls_acc = ncor / jnp.where(nlab > 0, nlab, 1.0)

    return sce_hi[:num_classes], sce_lo[:num_classes], cls_acc[:num_classes]


def _reference_numpy(logits, labels, n_bins=N_BINS, low_high_bin=LOW_HIGH_BIN):
    """Mirrors binsECELoss.forward (minus its debug prints)."""
    logits = np.asarray(logits, np.float32)
    labels = np.asarray(labels)
    num_classes = int(labels.max()) + 1
    e = np.exp(logits - logits.max(1, keepdims=True))
    soft = e / e.sum(1, keepdims=True)
    choices = soft.argmax(1)
    boundaries = np.linspace(0.0, 1.0, n_bins + 1).astype(np.float32)
    sce_high = np.zeros(num_classes, np.float32)
    sce_low = np.zeros(num_classes, np.float32)
    cls_acc = np.zeros(num_classes, np.float32)
    for i in range(num_classes):
        conf_i = soft[:, i]
        in_class = labels == i
        cls_acc[i] = np.sum(choices[in_class] == i) / np.sum(in_class)
        for lo, up in zip(boundaries[:-1], boundaries[1:]):
            in_bin = (conf_i > lo) & (conf_i <= up)
            prop = in_bin.mean()
            if prop > 0:
                acc_in = in_class[in_bin].astype(np.float32).mean()
                conf_in = conf_i[in_bin].mean()
                term = abs(conf_in - acc_in) * prop
                if float(lo) > low_high_bin:
                    sce_high[i] += term
                else:
                    sce_low[i] += term
    return sce_high, sce_low, cls_acc


if __name__ == "__main__":
    key = jax.random.PRNGKey(0)
    k1, k2, k3, k4, k5, k6 = jax.random.split(key, 6)

    # Case 1: N=256, C=10 — one chunk, two 128-lane sub-chunks, no padding.
    N1, C1 = 256, 10
    logits1 = jax.random.normal(k1, (N1, C1), dtype=jnp.float32) * 3.0
    labels1 = jax.random.permutation(k2, jnp.arange(N1, dtype=jnp.int32) % C1)
    out1 = jax.block_until_ready(
        bins_ece(logits1, labels1, tile_n=256, sub_n=128, num_classes=C1))
    ref1 = _reference_numpy(np.asarray(logits1), np.asarray(labels1))
    for got, want in zip(out1, ref1):
        np.testing.assert_allclose(np.asarray(got), want, rtol=1e-4, atol=1e-6)

    # Case 2: N=1000 (padded tail masked), 7 logit columns but only labels 0..4
    # present (num_classes=5 < C); default tile/sub sizes with lane folding.
    N2, C2, NCLS2 = 1000, 7, 5
    logits2 = jax.random.normal(k3, (N2, C2), dtype=jnp.float32) * 2.0
    labels2 = jax.random.permutation(k4, jnp.arange(N2, dtype=jnp.int32) % NCLS2)
    out2 = jax.block_until_ready(bins_ece(logits2, labels2, num_classes=NCLS2))
    ref2 = _reference_numpy(np.asarray(logits2), np.asarray(labels2))
    for got, want in zip(out2, ref2):
        np.testing.assert_allclose(np.asarray(got), want, rtol=1e-4, atol=1e-6)

    # Case 3: N=1500, C=6 — two parallel chunks x two sequential tiles each,
    # including a fully padded trailing tile (accumulation + masking path).
    N3, C3 = 1500, 6
    logits3 = jax.random.normal(k5, (N3, C3), dtype=jnp.float32) * 2.5
    labels3 = jax.random.permutation(k6, jnp.arange(N3, dtype=jnp.int32) % C3)
    out3 = jax.block_until_ready(
        bins_ece(logits3, labels3, tile_n=512, sub_n=128, num_chunks=2,
                 num_classes=C3))
    ref3 = _reference_numpy(np.asarray(logits3), np.asarray(labels3))
    for got, want in zip(out3, ref3):
        np.testing.assert_allclose(np.asarray(got), want, rtol=1e-4, atol=1e-6)

    print("KERNEL_OK")
</pallas_src>

<mosaic_0001>
module attributes {stable_mosaic.version = 11 : i64} {
  func.func @_bins_ece_kernel(%arg0: i32, %arg1: i32, %arg2: memref<10x256xf32, #tpu.memory_space<vmem>>, %arg3: memref<1x256xi32, #tpu.memory_space<vmem>>, %arg4: memref<1x15x10x128xf32, #tpu.memory_space<vmem>>, %arg5: memref<1x15x10x128xf32, #tpu.memory_space<vmem>>, %arg6: memref<1x15x10x128xf32, #tpu.memory_space<vmem>>, %arg7: memref<1x10x128xf32, #tpu.memory_space<vmem>>, %arg8: memref<1x10x128xf32, #tpu.memory_space<vmem>>) attributes {dimension_semantics = [#tpu.dimension_semantics<parallel>, #tpu.dimension_semantics<arbitrary>], iteration_bounds = array<i64: 1, 1>, scalar_prefetch = 0 : i64, scratch_operands = 0 : i64, tpu.core_type = #tpu.core_type<tc>, window_params = [{transform_indices = @transform_0, window_bounds = array<i64: 10, 256>}, {transform_indices = @transform_1, window_bounds = array<i64: 1, 256>}, {transform_indices = @transform_2, window_bounds = array<i64: 1, 15, 10, 128>}, {transform_indices = @transform_3, window_bounds = array<i64: 1, 15, 10, 128>}, {transform_indices = @transform_4, window_bounds = array<i64: 1, 15, 10, 128>}, {transform_indices = @transform_5, window_bounds = array<i64: 1, 10, 128>}, {transform_indices = @transform_6, window_bounds = array<i64: 1, 10, 128>}]} {
    %c0_i32 = arith.constant 0 : i32
    %0 = arith.cmpi eq, %arg1, %c0_i32 : i32
    %1 = arith.extui %0 : i1 to i32
    %c0_i32_0 = arith.constant 0 : i32
    %2 = arith.cmpi ne, %1, %c0_i32_0 : i32
    scf.if %2 {
      %cst_905 = arith.constant 0.000000e+00 : f32
      %930 = vector.broadcast %cst_905 : f32 to vector<1x15x10x128xf32>
      %c0_906 = arith.constant 0 : index
      %c0_907 = arith.constant 0 : index
      %c0_908 = arith.constant 0 : index
      %c0_909 = arith.constant 0 : index
      %931 = vector.load %arg4[%c0_906, %c0_907, %c0_908, %c0_909] : memref<1x15x10x128xf32, #tpu.memory_space<vmem>>, vector<1x15x10x128xf32>
      tpu.vector_store %arg4[%c0_906, %c0_907, %c0_908, %c0_909], %930 {strides = array<i32>} : memref<1x15x10x128xf32, #tpu.memory_space<vmem>>, vector<1x15x10x128xf32>,
      %cst_910 = arith.constant 0.000000e+00 : f32
      %932 = vector.broadcast %cst_910 : f32 to vector<1x15x10x128xf32>
      %c0_911 = arith.constant 0 : index
      %c0_912 = arith.constant 0 : index
      %c0_913 = arith.constant 0 : index
      %c0_914 = arith.constant 0 : index
      %933 = vector.load %arg5[%c0_911, %c0_912, %c0_913, %c0_914] : memref<1x15x10x128xf32, #tpu.memory_space<vmem>>, vector<1x15x10x128xf32>
      tpu.vector_store %arg5[%c0_911, %c0_912, %c0_913, %c0_914], %932 {strides = array<i32>} : memref<1x15x10x128xf32, #tpu.memory_space<vmem>>, vector<1x15x10x128xf32>,
      %cst_915 = arith.constant 0.000000e+00 : f32
      %934 = vector.broadcast %cst_915 : f32 to vector<1x15x10x128xf32>
      %c0_916 = arith.constant 0 : index
      %c0_917 = arith.constant 0 : index
      %c0_918 = arith.constant 0 : index
      %c0_919 = arith.constant 0 : index
      %935 = vector.load %arg6[%c0_916, %c0_917, %c0_918, %c0_919] : memref<1x15x10x128xf32, #tpu.memory_space<vmem>>, vector<1x15x10x128xf32>
      tpu.vector_store %arg6[%c0_916, %c0_917, %c0_918, %c0_919], %934 {strides = array<i32>} : memref<1x15x10x128xf32, #tpu.memory_space<vmem>>, vector<1x15x10x128xf32>,
      %cst_920 = arith.constant 0.000000e+00 : f32
      %936 = vector.broadcast %cst_920 : f32 to vector<1x10x128xf32>
      %c0_921 = arith.constant 0 : index
      %c0_922 = arith.constant 0 : index
      %c0_923 = arith.constant 0 : index
      %937 = vector.load %arg7[%c0_921, %c0_922, %c0_923] : memref<1x10x128xf32, #tpu.memory_space<vmem>>, vector<1x10x128xf32>
      tpu.vector_store %arg7[%c0_921, %c0_922, %c0_923], %936 {strides = array<i32>} : memref<1x10x128xf32, #tpu.memory_space<vmem>>, vector<1x10x128xf32>,
      %cst_924 = arith.constant 0.000000e+00 : f32
      %938 = vector.broadcast %cst_924 : f32 to vector<1x10x128xf32>
      %c0_925 = arith.constant 0 : index
      %c0_926 = arith.constant 0 : index
      %c0_927 = arith.constant 0 : index
      %939 = vector.load %arg8[%c0_925, %c0_926, %c0_927] : memref<1x10x128xf32, #tpu.memory_space<vmem>>, vector<1x10x128xf32>
      tpu.vector_store %arg8[%c0_925, %c0_926, %c0_927], %938 {strides = array<i32>} : memref<1x10x128xf32, #tpu.memory_space<vmem>>, vector<1x10x128xf32>,
    } else {
    }
    %c1_i32 = arith.constant 1 : i32
    %3 = arith.muli %arg0, %c1_i32 : i32
    %4 = arith.addi %3, %arg1 : i32
    %c256_i32 = arith.constant 256 : i32
    %5 = arith.muli %4, %c256_i32 : i32
    %6 = tpu.iota {dimensions = array<i32: 0>} : vector<10x128xi32>
    %7 = arith.sitofp %6 : vector<10x128xi32> to vector<10x128xf32>
    %c0 = arith.constant 0 : index
    %c0_1 = arith.constant 0 : index
    %8 = vector.load %arg2[%c0, %c0_1] : memref<10x256xf32, #tpu.memory_space<vmem>>, vector<10x128xf32>
    %c0_2 = arith.constant 0 : index
    %c0_3 = arith.constant 0 : index
    %9 = vector.load %arg3[%c0_2, %c0_3] : memref<1x256xi32, #tpu.memory_space<vmem>>, vector<1x128xi32>
    %c0_i32_4 = arith.constant 0 : i32
    %10 = arith.addi %5, %c0_i32_4 : i32
    %11 = tpu.iota {dimensions = array<i32: 1>} : vector<1x128xi32>
    %12 = vector.broadcast %10 : i32 to vector<1x128xi32>
    %13 = arith.addi %12, %11 : vector<1x128xi32>
    %c256_i32_5 = arith.constant 256 : i32
    %14 = vector.broadcast %c256_i32_5 : i32 to vector<1x128xi32>
    %15 = arith.cmpi slt, %13, %14 : vector<1x128xi32>
    %cst = arith.constant dense<0xFF800000> : vector<128xf32>
    %16 = vector.multi_reduction <maximumf>, %8, %cst [0] : vector<10x128xf32> to vector<128xf32>
    %17 = vector.shape_cast %16 : vector<128xf32> to vector<1x128xf32>
    %18 = vector.broadcast %17 : vector<1x128xf32> to vector<10x128xf32>
    %19 = arith.subf %8, %18 : vector<10x128xf32>
    %20 = math.exp %19 : vector<10x128xf32>
    %cst_6 = arith.constant dense<0.000000e+00> : vector<128xf32>
    %21 = vector.multi_reduction <add>, %20, %cst_6 [0] : vector<10x128xf32> to vector<128xf32>
    %22 = vector.shape_cast %21 : vector<128xf32> to vector<1x128xf32>
    %23 = tpu.reciprocal %22 : vector<1x128xf32> -> vector<1x128xf32>
    %24 = vector.broadcast %23 : vector<1x128xf32> to vector<10x128xf32>
    %25 = arith.mulf %20, %24 : vector<10x128xf32>
    %26 = vector.broadcast %17 : vector<1x128xf32> to vector<10x128xf32>
    %27 = arith.cmpf oeq, %8, %26 : vector<10x128xf32>
    %cst_7 = arith.constant 1.000000e+01 : f32
    %28 = vector.broadcast %cst_7 : f32 to vector<10x128xf32>
    %29 = arith.select %27, %7, %28 : vector<10x128xi1>, vector<10x128xf32>
    %cst_8 = arith.constant dense<0x7F800000> : vector<128xf32>
    %30 = vector.multi_reduction <minimumf>, %29, %cst_8 [0] : vector<10x128xf32> to vector<128xf32>
    %31 = vector.shape_cast %30 : vector<128xf32> to vector<1x128xf32>
    %32 = vector.broadcast %31 : vector<1x128xf32> to vector<10x128xf32>
    %33 = arith.cmpf oeq, %7, %32 : vector<10x128xf32>
    %34 = arith.extui %33 : vector<10x128xi1> to vector<10x128xi32>
    %35 = arith.sitofp %34 : vector<10x128xi32> to vector<10x128xf32>
    %36 = vector.broadcast %9 : vector<1x128xi32> to vector<10x128xi32>
    %37 = arith.cmpi eq, %6, %36 : vector<10x128xi32>
    %38 = arith.extui %37 : vector<10x128xi1> to vector<10x128xi32>
    %39 = arith.sitofp %38 : vector<10x128xi32> to vector<10x128xf32>
    %c0_9 = arith.constant 0 : index
    %c0_10 = arith.constant 0 : index
    %c0_11 = arith.constant 0 : index
    %40 = vector.load %arg7[%c0_9, %c0_10, %c0_11] : memref<1x10x128xf32, #tpu.memory_space<vmem>>, vector<1x10x128xf32>
    %41 = vector.shape_cast %40 : vector<1x10x128xf32> to vector<10x128xf32>
    %42 = arith.addf %41, %39 : vector<10x128xf32>
    %c0_12 = arith.constant 0 : index
    %c0_13 = arith.constant 0 : index
    %c0_14 = arith.constant 0 : index
    %43 = vector.load %arg7[%c0_12, %c0_13, %c0_14] : memref<1x10x128xf32, #tpu.memory_space<vmem>>, vector<1x10x128xf32>
    %44 = vector.shape_cast %43 : vector<1x10x128xf32> to vector<10x128xf32>
    %45 = vector.shape_cast %42 : vector<10x128xf32> to vector<1x10x128xf32>
    tpu.vector_store %arg7[%c0_12, %c0_13, %c0_14], %45 {strides = array<i32>} : memref<1x10x128xf32, #tpu.memory_space<vmem>>, vector<1x10x128xf32>,
    %c0_15 = arith.constant 0 : index
    %c0_16 = arith.constant 0 : index
    %c0_17 = arith.constant 0 : index
    %46 = vector.load %arg8[%c0_15, %c0_16, %c0_17] : memref<1x10x128xf32, #tpu.memory_space<vmem>>, vector<1x10x128xf32>
    %47 = vector.shape_cast %46 : vector<1x10x128xf32> to vector<10x128xf32>
    %48 = arith.mulf %39, %35 : vector<10x128xf32>
    %49 = arith.addf %47, %48 : vector<10x128xf32>
    %c0_18 = arith.constant 0 : index
    %c0_19 = arith.constant 0 : index
    %c0_20 = arith.constant 0 : index
    %50 = vector.load %arg8[%c0_18, %c0_19, %c0_20] : memref<1x10x128xf32, #tpu.memory_space<vmem>>, vector<1x10x128xf32>
    %51 = vector.shape_cast %50 : vector<1x10x128xf32> to vector<10x128xf32>
    %52 = vector.shape_cast %49 : vector<10x128xf32> to vector<1x10x128xf32>
    tpu.vector_store %arg8[%c0_18, %c0_19, %c0_20], %52 {strides = array<i32>} : memref<1x10x128xf32, #tpu.memory_space<vmem>>, vector<1x10x128xf32>,
    %cst_21 = arith.constant 1.500000e+01 : f32
    %53 = vector.broadcast %cst_21 : f32 to vector<10x128xf32>
    %54 = arith.mulf %25, %53 : vector<10x128xf32>
    %55 = math.ceil %54 : vector<10x128xf32>
    %cst_22 = arith.constant 1.000000e+00 : f32
    %56 = vector.broadcast %cst_22 : f32 to vector<10x128xf32>
    %57 = arith.subf %55, %56 : vector<10x128xf32>
    %cst_23 = arith.constant 1.400000e+01 : f32
    %58 = vector.broadcast %cst_23 : f32 to vector<10x128xf32>
    %59 = arith.minimumf %57, %58 : vector<10x128xf32>
    %cst_24 = arith.constant -1.000000e+00 : f32
    %60 = vector.shape_cast %15 : vector<1x128xi1> to vector<1x128xi1>
    %61 = vector.broadcast %60 : vector<1x128xi1> to vector<10x128xi1>
    %62 = vector.broadcast %cst_24 : f32 to vector<10x128xf32>
    %63 = arith.select %61, %59, %62 : vector<10x128xi1>, vector<10x128xf32>
    %cst_25 = arith.constant 0.000000e+00 : f32
    %64 = vector.broadcast %cst_25 : f32 to vector<10x128xf32>
    %65 = arith.cmpf oeq, %63, %64 : vector<10x128xf32>
    %c0_26 = arith.constant 0 : index
    %c0_27 = arith.constant 0 : index
    %c0_28 = arith.constant 0 : index
    %c0_29 = arith.constant 0 : index
    %66 = vector.load %arg4[%c0_26, %c0_27, %c0_28, %c0_29] : memref<1x15x10x128xf32, #tpu.memory_space<vmem>>, vector<1x1x10x128xf32>
    %67 = vector.shape_cast %66 : vector<1x1x10x128xf32> to vector<10x128xf32>
    %cst_30 = arith.constant 1.000000e+00 : f32
    %cst_31 = arith.constant 0.000000e+00 : f32
    %68 = vector.broadcast %cst_30 : f32 to vector<10x128xf32>
    %69 = vector.broadcast %cst_31 : f32 to vector<10x128xf32>
    %70 = arith.select %65, %68, %69 : vector<10x128xi1>, vector<10x128xf32>
    %71 = arith.addf %67, %70 : vector<10x128xf32>
    %c0_32 = arith.constant 0 : index
    %c0_33 = arith.constant 0 : index
    %c0_34 = arith.constant 0 : index
    %c0_35 = arith.constant 0 : index
    %72 = vector.load %arg4[%c0_32, %c0_33, %c0_34, %c0_35] : memref<1x15x10x128xf32, #tpu.memory_space<vmem>>, vector<1x1x10x128xf32>
    %73 = vector.shape_cast %72 : vector<1x1x10x128xf32> to vector<10x128xf32>
    %74 = vector.shape_cast %71 : vector<10x128xf32> to vector<1x1x10x128xf32>
    tpu.vector_store %arg4[%c0_32, %c0_33, %c0_34, %c0_35], %74 {strides = array<i32>} : memref<1x15x10x128xf32, #tpu.memory_space<vmem>>, vector<1x1x10x128xf32>,
    %c0_36 = arith.constant 0 : index
    %c0_37 = arith.constant 0 : index
    %c0_38 = arith.constant 0 : index
    %c0_39 = arith.constant 0 : index
    %75 = vector.load %arg5[%c0_36, %c0_37, %c0_38, %c0_39] : memref<1x15x10x128xf32, #tpu.memory_space<vmem>>, vector<1x1x10x128xf32>
    %76 = vector.shape_cast %75 : vector<1x1x10x128xf32> to vector<10x128xf32>
    %cst_40 = arith.constant 0.000000e+00 : f32
    %77 = vector.broadcast %cst_40 : f32 to vector<10x128xf32>
    %78 = arith.select %65, %25, %77 : vector<10x128xi1>, vector<10x128xf32>
    %79 = arith.addf %76, %78 : vector<10x128xf32>
    %c0_41 = arith.constant 0 : index
    %c0_42 = arith.constant 0 : index
    %c0_43 = arith.constant 0 : index
    %c0_44 = arith.constant 0 : index
    %80 = vector.load %arg5[%c0_41, %c0_42, %c0_43, %c0_44] : memref<1x15x10x128xf32, #tpu.memory_space<vmem>>, vector<1x1x10x128xf32>
    %81 = vector.shape_cast %80 : vector<1x1x10x128xf32> to vector<10x128xf32>
    %82 = vector.shape_cast %79 : vector<10x128xf32> to vector<1x1x10x128xf32>
    tpu.vector_store %arg5[%c0_41, %c0_42, %c0_43, %c0_44], %82 {strides = array<i32>} : memref<1x15x10x128xf32, #tpu.memory_space<vmem>>, vector<1x1x10x128xf32>,
    %c0_45 = arith.constant 0 : index
    %c0_46 = arith.constant 0 : index
    %c0_47 = arith.constant 0 : index
    %c0_48 = arith.constant 0 : index
    %83 = vector.load %arg6[%c0_45, %c0_46, %c0_47, %c0_48] : memref<1x15x10x128xf32, #tpu.memory_space<vmem>>, vector<1x1x10x128xf32>
    %84 = vector.shape_cast %83 : vector<1x1x10x128xf32> to vector<10x128xf32>
    %cst_49 = arith.constant 0.000000e+00 : f32
    %85 = vector.broadcast %cst_49 : f32 to vector<10x128xf32>
    %86 = arith.select %65, %39, %85 : vector<10x128xi1>, vector<10x128xf32>
    %87 = arith.addf %84, %86 : vector<10x128xf32>
    %c0_50 = arith.constant 0 : index
    %c0_51 = arith.constant 0 : index
    %c0_52 = arith.constant 0 : index
    %c0_53 = arith.constant 0 : index
    %88 = vector.load %arg6[%c0_50, %c0_51, %c0_52, %c0_53] : memref<1x15x10x128xf32, #tpu.memory_space<vmem>>, vector<1x1x10x128xf32>
    %89 = vector.shape_cast %88 : vector<1x1x10x128xf32> to vector<10x128xf32>
    %90 = vector.shape_cast %87 : vector<10x128xf32> to vector<1x1x10x128xf32>
    tpu.vector_store %arg6[%c0_50, %c0_51, %c0_52, %c0_53], %90 {strides = array<i32>} : memref<1x15x10x128xf32, #tpu.memory_space<vmem>>, vector<1x1x10x128xf32>,
    %cst_54 = arith.constant 1.000000e+00 : f32
    %91 = vector.broadcast %cst_54 : f32 to vector<10x128xf32>
    %92 = arith.cmpf oeq, %63, %91 : vector<10x128xf32>
    %c0_55 = arith.constant 0 : index
    %c1 = arith.constant 1 : index
    %c0_56 = arith.constant 0 : index
    %c0_57 = arith.constant 0 : index
    %93 = vector.load %arg4[%c0_55, %c1, %c0_56, %c0_57] : memref<1x15x10x128xf32, #tpu.memory_space<vmem>>, vector<1x1x10x128xf32>
    %94 = vector.shape_cast %93 : vector<1x1x10x128xf32> to vector<10x128xf32>
    %cst_58 = arith.constant 1.000000e+00 : f32
    %cst_59 = arith.constant 0.000000e+00 : f32
    %95 = vector.broadcast %cst_58 : f32 to vector<10x128xf32>
    %96 = vector.broadcast %cst_59 : f32 to vector<10x128xf32>
    %97 = arith.select %92, %95, %96 : vector<10x128xi1>, vector<10x128xf32>
    %98 = arith.addf %94, %97 : vector<10x128xf32>
    %c0_60 = arith.constant 0 : index
    %c1_61 = arith.constant 1 : index
    %c0_62 = arith.constant 0 : index
    %c0_63 = arith.constant 0 : index
    %99 = vector.load %arg4[%c0_60, %c1_61, %c0_62, %c0_63] : memref<1x15x10x128xf32, #tpu.memory_space<vmem>>, vector<1x1x10x128xf32>
    %100 = vector.shape_cast %99 : vector<1x1x10x128xf32> to vector<10x128xf32>
    %101 = vector.shape_cast %98 : vector<10x128xf32> to vector<1x1x10x128xf32>
    tpu.vector_store %arg4[%c0_60, %c1_61, %c0_62, %c0_63], %101 {strides = array<i32>} : memref<1x15x10x128xf32, #tpu.memory_space<vmem>>, vector<1x1x10x128xf32>,
    %c0_64 = arith.constant 0 : index
    %c1_65 = arith.constant 1 : index
    %c0_66 = arith.constant 0 : index
    %c0_67 = arith.constant 0 : index
    %102 = vector.load %arg5[%c0_64, %c1_65, %c0_66, %c0_67] : memref<1x15x10x128xf32, #tpu.memory_space<vmem>>, vector<1x1x10x128xf32>
    %103 = vector.shape_cast %102 : vector<1x1x10x128xf32> to vector<10x128xf32>
    %cst_68 = arith.constant 0.000000e+00 : f32
    %104 = vector.broadcast %cst_68 : f32 to vector<10x128xf32>
    %105 = arith.select %92, %25, %104 : vector<10x128xi1>, vector<10x128xf32>
    %106 = arith.addf %103, %105 : vector<10x128xf32>
    %c0_69 = arith.constant 0 : index
    %c1_70 = arith.constant 1 : index
    %c0_71 = arith.constant 0 : index
    %c0_72 = arith.constant 0 : index
    %107 = vector.load %arg5[%c0_69, %c1_70, %c0_71, %c0_72] : memref<1x15x10x128xf32, #tpu.memory_space<vmem>>, vector<1x1x10x128xf32>
    %108 = vector.shape_cast %107 : vector<1x1x10x128xf32> to vector<10x128xf32>
    %109 = vector.shape_cast %106 : vector<10x128xf32> to vector<1x1x10x128xf32>
    tpu.vector_store %arg5[%c0_69, %c1_70, %c0_71, %c0_72], %109 {strides = array<i32>} : memref<1x15x10x128xf32, #tpu.memory_space<vmem>>, vector<1x1x10x128xf32>,
    %c0_73 = arith.constant 0 : index
    %c1_74 = arith.constant 1 : index
    %c0_75 = arith.constant 0 : index
    %c0_76 = arith.constant 0 : index
    %110 = vector.load %arg6[%c0_73, %c1_74, %c0_75, %c0_76] : memref<1x15x10x128xf32, #tpu.memory_space<vmem>>, vector<1x1x10x128xf32>
    %111 = vector.shape_cast %110 : vector<1x1x10x128xf32> to vector<10x128xf32>
    %cst_77 = arith.constant 0.000000e+00 : f32
    %112 = vector.broadcast %cst_77 : f32 to vector<10x128xf32>
    %113 = arith.select %92, %39, %112 : vector<10x128xi1>, vector<10x128xf32>
    %114 = arith.addf %111, %113 : vector<10x128xf32>
    %c0_78 = arith.constant 0 : index
    %c1_79 = arith.constant 1 : index
    %c0_80 = arith.constant 0 : index
    %c0_81 = arith.constant 0 : index
    %115 = vector.load %arg6[%c0_78, %c1_79, %c0_80, %c0_81] : memref<1x15x10x128xf32, #tpu.memory_space<vmem>>, vector<1x1x10x128xf32>
    %116 = vector.shape_cast %115 : vector<1x1x10x128xf32> to vector<10x128xf32>
    %117 = vector.shape_cast %114 : vector<10x128xf32> to vector<1x1x10x128xf32>
    tpu.vector_store %arg6[%c0_78, %c1_79, %c0_80, %c0_81], %117 {strides = array<i32>} : memref<1x15x10x128xf32, #tpu.memory_space<vmem>>, vector<1x1x10x128xf32>,
    %cst_82 = arith.constant 2.000000e+00 : f32
    %118 = vector.broadcast %cst_82 : f32 to vector<10x128xf32>
    %119 = arith.cmpf oeq, %63, %118 : vector<10x128xf32>
    %c0_83 = arith.constant 0 : index
    %c2 = arith.constant 2 : index
    %c0_84 = arith.constant 0 : index
    %c0_85 = arith.constant 0 : index
    %120 = vector.load %arg4[%c0_83, %c2, %c0_84, %c0_85] : memref<1x15x10x128xf32, #tpu.memory_space<vmem>>, vector<1x1x10x128xf32>
    %121 = vector.shape_cast %120 : vector<1x1x10x128xf32> to vector<10x128xf32>
    %cst_86 = arith.constant 1.000000e+00 : f32
    %cst_87 = arith.constant 0.000000e+00 : f32
    %122 = vector.broadcast %cst_86 : f32 to vector<10x128xf32>
    %123 = vector.broadcast %cst_87 : f32 to vector<10x128xf32>
    %124 = arith.select %119, %122, %123 : vector<10x128xi1>, vector<10x128xf32>
    %125 = arith.addf %121, %124 : vector<10x128xf32>
    %c0_88 = arith.constant 0 : index
    %c2_89 = arith.constant 2 : index
    %c0_90 = arith.constant 0 : index
    %c0_91 = arith.constant 0 : index
    %126 = vector.load %arg4[%c0_88, %c2_89, %c0_90, %c0_91] : memref<1x15x10x128xf32, #tpu.memory_space<vmem>>, vector<1x1x10x128xf32>
    %127 = vector.shape_cast %126 : vector<1x1x10x128xf32> to vector<10x128xf32>
    %128 = vector.shape_cast %125 : vector<10x128xf32> to vector<1x1x10x128xf32>
    tpu.vector_store %arg4[%c0_88, %c2_89, %c0_90, %c0_91], %128 {strides = array<i32>} : memref<1x15x10x128xf32, #tpu.memory_space<vmem>>, vector<1x1x10x128xf32>,
    %c0_92 = arith.constant 0 : index
    %c2_93 = arith.constant 2 : index
    %c0_94 = arith.constant 0 : index
    %c0_95 = arith.constant 0 : index
    %129 = vector.load %arg5[%c0_92, %c2_93, %c0_94, %c0_95] : memref<1x15x10x128xf32, #tpu.memory_space<vmem>>, vector<1x1x10x128xf32>
    %130 = vector.shape_cast %129 : vector<1x1x10x128xf32> to vector<10x128xf32>
    %cst_96 = arith.constant 0.000000e+00 : f32
    %131 = vector.broadcast %cst_96 : f32 to vector<10x128xf32>
    %132 = arith.select %119, %25, %131 : vector<10x128xi1>, vector<10x128xf32>
    %133 = arith.addf %130, %132 : vector<10x128xf32>
    %c0_97 = arith.constant 0 : index
    %c2_98 = arith.constant 2 : index
    %c0_99 = arith.constant 0 : index
    %c0_100 = arith.constant 0 : index
    %134 = vector.load %arg5[%c0_97, %c2_98, %c0_99, %c0_100] : memref<1x15x10x128xf32, #tpu.memory_space<vmem>>, vector<1x1x10x128xf32>
    %135 = vector.shape_cast %134 : vector<1x1x10x128xf32> to vector<10x128xf32>
    %136 = vector.shape_cast %133 : vector<10x128xf32> to vector<1x1x10x128xf32>
    tpu.vector_store %arg5[%c0_97, %c2_98, %c0_99, %c0_100], %136 {strides = array<i32>} : memref<1x15x10x128xf32, #tpu.memory_space<vmem>>, vector<1x1x10x128xf32>,
    %c0_101 = arith.constant 0 : index
    %c2_102 = arith.constant 2 : index
    %c0_103 = arith.constant 0 : index
    %c0_104 = arith.constant 0 : index
    %137 = vector.load %arg6[%c0_101, %c2_102, %c0_103, %c0_104] : memref<1x15x10x128xf32, #tpu.memory_space<vmem>>, vector<1x1x10x128xf32>
    %138 = vector.shape_cast %137 : vector<1x1x10x128xf32> to vector<10x128xf32>
    %cst_105 = arith.constant 0.000000e+00 : f32
    %139 = vector.broadcast %cst_105 : f32 to vector<10x128xf32>
    %140 = arith.select %119, %39, %139 : vector<10x128xi1>, vector<10x128xf32>
    %141 = arith.addf %138, %140 : vector<10x128xf32>
    %c0_106 = arith.constant 0 : index
    %c2_107 = arith.constant 2 : index
    %c0_108 = arith.constant 0 : index
    %c0_109 = arith.constant 0 : index
    %142 = vector.load %arg6[%c0_106, %c2_107, %c0_108, %c0_109] : memref<1x15x10x128xf32, #tpu.memory_space<vmem>>, vector<1x1x10x128xf32>
    %143 = vector.shape_cast %142 : vector<1x1x10x128xf32> to vector<10x128xf32>
    %144 = vector.shape_cast %141 : vector<10x128xf32> to vector<1x1x10x128xf32>
    tpu.vector_store %arg6[%c0_106, %c2_107, %c0_108, %c0_109], %144 {strides = array<i32>} : memref<1x15x10x128xf32, #tpu.memory_space<vmem>>, vector<1x1x10x128xf32>,
    %cst_110 = arith.constant 3.000000e+00 : f32
    %145 = vector.broadcast %cst_110 : f32 to vector<10x128xf32>
    %146 = arith.cmpf oeq, %63, %145 : vector<10x128xf32>
    %c0_111 = arith.constant 0 : index
    %c3 = arith.constant 3 : index
    %c0_112 = arith.constant 0 : index
    %c0_113 = arith.constant 0 : index
    %147 = vector.load %arg4[%c0_111, %c3, %c0_112, %c0_113] : memref<1x15x10x128xf32, #tpu.memory_space<vmem>>, vector<1x1x10x128xf32>
    %148 = vector.shape_cast %147 : vector<1x1x10x128xf32> to vector<10x128xf32>
    %cst_114 = arith.constant 1.000000e+00 : f32
    %cst_115 = arith.constant 0.000000e+00 : f32
    %149 = vector.broadcast %cst_114 : f32 to vector<10x128xf32>
    %150 = vector.broadcast %cst_115 : f32 to vector<10x128xf32>
    %151 = arith.select %146, %149, %150 : vector<10x128xi1>, vector<10x128xf32>
    %152 = arith.addf %148, %151 : vector<10x128xf32>
    %c0_116 = arith.constant 0 : index
    %c3_117 = arith.constant 3 : index
    %c0_118 = arith.constant 0 : index
    %c0_119 = arith.constant 0 : index
    %153 = vector.load %arg4[%c0_116, %c3_117, %c0_118, %c0_119] : memref<1x15x10x128xf32, #tpu.memory_space<vmem>>, vector<1x1x10x128xf32>
    %154 = vector.shape_cast %153 : vector<1x1x10x128xf32> to vector<10x128xf32>
    %155 = vector.shape_cast %152 : vector<10x128xf32> to vector<1x1x10x128xf32>
    tpu.vector_store %arg4[%c0_116, %c3_117, %c0_118, %c0_119], %155 {strides = array<i32>} : memref<1x15x10x128xf32, #tpu.memory_space<vmem>>, vector<1x1x10x128xf32>,
    %c0_120 = arith.constant 0 : index
    %c3_121 = arith.constant 3 : index
    %c0_122 = arith.constant 0 : index
    %c0_123 = arith.constant 0 : index
    %156 = vector.load %arg5[%c0_120, %c3_121, %c0_122, %c0_123] : memref<1x15x10x128xf32, #tpu.memory_space<vmem>>, vector<1x1x10x128xf32>
    %157 = vector.shape_cast %156 : vector<1x1x10x128xf32> to vector<10x128xf32>
    %cst_124 = arith.constant 0.000000e+00 : f32
    %158 = vector.broadcast %cst_124 : f32 to vector<10x128xf32>
    %159 = arith.select %146, %25, %158 : vector<10x128xi1>, vector<10x128xf32>
    %160 = arith.addf %157, %159 : vector<10x128xf32>
    %c0_125 = arith.constant 0 : index
    %c3_126 = arith.constant 3 : index
    %c0_127 = arith.constant 0 : index
    %c0_128 = arith.constant 0 : index
    %161 = vector.load %arg5[%c0_125, %c3_126, %c0_127, %c0_128] : memref<1x15x10x128xf32, #tpu.memory_space<vmem>>, vector<1x1x10x128xf32>
    %162 = vector.shape_cast %161 : vector<1x1x10x128xf32> to vector<10x128xf32>
    %163 = vector.shape_cast %160 : vector<10x128xf32> to vector<1x1x10x128xf32>
    tpu.vector_store %arg5[%c0_125, %c3_126, %c0_127, %c0_128], %163 {strides = array<i32>} : memref<1x15x10x128xf32, #tpu.memory_space<vmem>>, vector<1x1x10x128xf32>,
    %c0_129 = arith.constant 0 : index
    %c3_130 = arith.constant 3 : index
    %c0_131 = arith.constant 0 : index
    %c0_132 = arith.constant 0 : index
    %164 = vector.load %arg6[%c0_129, %c3_130, %c0_131, %c0_132] : memref<1x15x10x128xf32, #tpu.memory_space<vmem>>, vector<1x1x10x128xf32>
    %165 = vector.shape_cast %164 : vector<1x1x10x128xf32> to vector<10x128xf32>
    %cst_133 = arith.constant 0.000000e+00 : f32
    %166 = vector.broadcast %cst_133 : f32 to vector<10x128xf32>
    %167 = arith.select %146, %39, %166 : vector<10x128xi1>, vector<10x128xf32>
    %168 = arith.addf %165, %167 : vector<10x128xf32>
    %c0_134 = arith.constant 0 : index
    %c3_135 = arith.constant 3 : index
    %c0_136 = arith.constant 0 : index
    %c0_137 = arith.constant 0 : index
    %169 = vector.load %arg6[%c0_134, %c3_135, %c0_136, %c0_137] : memref<1x15x10x128xf32, #tpu.memory_space<vmem>>, vector<1x1x10x128xf32>
    %170 = vector.shape_cast %169 : vector<1x1x10x128xf32> to vector<10x128xf32>
    %171 = vector.shape_cast %168 : vector<10x128xf32> to vector<1x1x10x128xf32>
    tpu.vector_store %arg6[%c0_134, %c3_135, %c0_136, %c0_137], %171 {strides = array<i32>} : memref<1x15x10x128xf32, #tpu.memory_space<vmem>>, vector<1x1x10x128xf32>,
    %cst_138 = arith.constant 4.000000e+00 : f32
    %172 = vector.broadcast %cst_138 : f32 to vector<10x128xf32>
    %173 = arith.cmpf oeq, %63, %172 : vector<10x128xf32>
    %c0_139 = arith.constant 0 : index
    %c4 = arith.constant 4 : index
    %c0_140 = arith.constant 0 : index
    %c0_141 = arith.constant 0 : index
    %174 = vector.load %arg4[%c0_139, %c4, %c0_140, %c0_141] : memref<1x15x10x128xf32, #tpu.memory_space<vmem>>, vector<1x1x10x128xf32>
    %175 = vector.shape_cast %174 : vector<1x1x10x128xf32> to vector<10x128xf32>
    %cst_142 = arith.constant 1.000000e+00 : f32
    %cst_143 = arith.constant 0.000000e+00 : f32
    %176 = vector.broadcast %cst_142 : f32 to vector<10x128xf32>
    %177 = vector.broadcast %cst_143 : f32 to vector<10x128xf32>
    %178 = arith.select %173, %176, %177 : vector<10x128xi1>, vector<10x128xf32>
    %179 = arith.addf %175, %178 : vector<10x128xf32>
    %c0_144 = arith.constant 0 : index
    %c4_145 = arith.constant 4 : index
    %c0_146 = arith.constant 0 : index
    %c0_147 = arith.constant 0 : index
    %180 = vector.load %arg4[%c0_144, %c4_145, %c0_146, %c0_147] : memref<1x15x10x128xf32, #tpu.memory_space<vmem>>, vector<1x1x10x128xf32>
    %181 = vector.shape_cast %180 : vector<1x1x10x128xf32> to vector<10x128xf32>
    %182 = vector.shape_cast %179 : vector<10x128xf32> to vector<1x1x10x128xf32>
    tpu.vector_store %arg4[%c0_144, %c4_145, %c0_146, %c0_147], %182 {strides = array<i32>} : memref<1x15x10x128xf32, #tpu.memory_space<vmem>>, vector<1x1x10x128xf32>,
    %c0_148 = arith.constant 0 : index
    %c4_149 = arith.constant 4 : index
    %c0_150 = arith.constant 0 : index
    %c0_151 = arith.constant 0 : index
    %183 = vector.load %arg5[%c0_148, %c4_149, %c0_150, %c0_151] : memref<1x15x10x128xf32, #tpu.memory_space<vmem>>, vector<1x1x10x128xf32>
    %184 = vector.shape_cast %183 : vector<1x1x10x128xf32> to vector<10x128xf32>
    %cst_152 = arith.constant 0.000000e+00 : f32
    %185 = vector.broadcast %cst_152 : f32 to vector<10x128xf32>
    %186 = arith.select %173, %25, %185 : vector<10x128xi1>, vector<10x128xf32>
    %187 = arith.addf %184, %186 : vector<10x128xf32>
    %c0_153 = arith.constant 0 : index
    %c4_154 = arith.constant 4 : index
    %c0_155 = arith.constant 0 : index
    %c0_156 = arith.constant 0 : index
    %188 = vector.load %arg5[%c0_153, %c4_154, %c0_155, %c0_156] : memref<1x15x10x128xf32, #tpu.memory_space<vmem>>, vector<1x1x10x128xf32>
    %189 = vector.shape_cast %188 : vector<1x1x10x128xf32> to vector<10x128xf32>
    %190 = vector.shape_cast %187 : vector<10x128xf32> to vector<1x1x10x128xf32>
    tpu.vector_store %arg5[%c0_153, %c4_154, %c0_155, %c0_156], %190 {strides = array<i32>} : memref<1x15x10x128xf32, #tpu.memory_space<vmem>>, vector<1x1x10x128xf32>,
    %c0_157 = arith.constant 0 : index
    %c4_158 = arith.constant 4 : index
    %c0_159 = arith.constant 0 : index
    %c0_160 = arith.constant 0 : index
    %191 = vector.load %arg6[%c0_157, %c4_158, %c0_159, %c0_160] : memref<1x15x10x128xf32, #tpu.memory_space<vmem>>, vector<1x1x10x128xf32>
    %192 = vector.shape_cast %191 : vector<1x1x10x128xf32> to vector<10x128xf32>
    %cst_161 = arith.constant 0.000000e+00 : f32
    %193 = vector.broadcast %cst_161 : f32 to vector<10x128xf32>
    %194 = arith.select %173, %39, %193 : vector<10x128xi1>, vector<10x128xf32>
    %195 = arith.addf %192, %194 : vector<10x128xf32>
    %c0_162 = arith.constant 0 : index
    %c4_163 = arith.constant 4 : index
    %c0_164 = arith.constant 0 : index
    %c0_165 = arith.constant 0 : index
    %196 = vector.load %arg6[%c0_162, %c4_163, %c0_164, %c0_165] : memref<1x15x10x128xf32, #tpu.memory_space<vmem>>, vector<1x1x10x128xf32>
    %197 = vector.shape_cast %196 : vector<1x1x10x128xf32> to vector<10x128xf32>
    %198 = vector.shape_cast %195 : vector<10x128xf32> to vector<1x1x10x128xf32>
    tpu.vector_store %arg6[%c0_162, %c4_163, %c0_164, %c0_165], %198 {strides = array<i32>} : memref<1x15x10x128xf32, #tpu.memory_space<vmem>>, vector<1x1x10x128xf32>,
    %cst_166 = arith.constant 5.000000e+00 : f32
    %199 = vector.broadcast %cst_166 : f32 to vector<10x128xf32>
    %200 = arith.cmpf oeq, %63, %199 : vector<10x128xf32>
    %c0_167 = arith.constant 0 : index
    %c5 = arith.constant 5 : index
    %c0_168 = arith.constant 0 : index
    %c0_169 = arith.constant 0 : index
    %201 = vector.load %arg4[%c0_167, %c5, %c0_168, %c0_169] : memref<1x15x10x128xf32, #tpu.memory_space<vmem>>, vector<1x1x10x128xf32>
    %202 = vector.shape_cast %201 : vector<1x1x10x128xf32> to vector<10x128xf32>
    %cst_170 = arith.constant 1.000000e+00 : f32
    %cst_171 = arith.constant 0.000000e+00 : f32
    %203 = vector.broadcast %cst_170 : f32 to vector<10x128xf32>
    %204 = vector.broadcast %cst_171 : f32 to vector<10x128xf32>
    %205 = arith.select %200, %203, %204 : vector<10x128xi1>, vector<10x128xf32>
    %206 = arith.addf %202, %205 : vector<10x128xf32>
    %c0_172 = arith.constant 0 : index
    %c5_173 = arith.constant 5 : index
    %c0_174 = arith.constant 0 : index
    %c0_175 = arith.constant 0 : index
    %207 = vector.load %arg4[%c0_172, %c5_173, %c0_174, %c0_175] : memref<1x15x10x128xf32, #tpu.memory_space<vmem>>, vector<1x1x10x128xf32>
    %208 = vector.shape_cast %207 : vector<1x1x10x128xf32> to vector<10x128xf32>
    %209 = vector.shape_cast %206 : vector<10x128xf32> to vector<1x1x10x128xf32>
    tpu.vector_store %arg4[%c0_172, %c5_173, %c0_174, %c0_175], %209 {strides = array<i32>} : memref<1x15x10x128xf32, #tpu.memory_space<vmem>>, vector<1x1x10x128xf32>,
    %c0_176 = arith.constant 0 : index
    %c5_177 = arith.constant 5 : index
    %c0_178 = arith.constant 0 : index
    %c0_179 = arith.constant 0 : index
    %210 = vector.load %arg5[%c0_176, %c5_177, %c0_178, %c0_179] : memref<1x15x10x128xf32, #tpu.memory_space<vmem>>, vector<1x1x10x128xf32>
    %211 = vector.shape_cast %210 : vector<1x1x10x128xf32> to vector<10x128xf32>
    %cst_180 = arith.constant 0.000000e+00 : f32
    %212 = vector.broadcast %cst_180 : f32 to vector<10x128xf32>
    %213 = arith.select %200, %25, %212 : vector<10x128xi1>, vector<10x128xf32>
    %214 = arith.addf %211, %213 : vector<10x128xf32>
    %c0_181 = arith.constant 0 : index
    %c5_182 = arith.constant 5 : index
    %c0_183 = arith.constant 0 : index
    %c0_184 = arith.constant 0 : index
    %215 = vector.load %arg5[%c0_181, %c5_182, %c0_183, %c0_184] : memref<1x15x10x128xf32, #tpu.memory_space<vmem>>, vector<1x1x10x128xf32>
    %216 = vector.shape_cast %215 : vector<1x1x10x128xf32> to vector<10x128xf32>
    %217 = vector.shape_cast %214 : vector<10x128xf32> to vector<1x1x10x128xf32>
    tpu.vector_store %arg5[%c0_181, %c5_182, %c0_183, %c0_184], %217 {strides = array<i32>} : memref<1x15x10x128xf32, #tpu.memory_space<vmem>>, vector<1x1x10x128xf32>,
    %c0_185 = arith.constant 0 : index
    %c5_186 = arith.constant 5 : index
    %c0_187 = arith.constant 0 : index
    %c0_188 = arith.constant 0 : index
    %218 = vector.load %arg6[%c0_185, %c5_186, %c0_187, %c0_188] : memref<1x15x10x128xf32, #tpu.memory_space<vmem>>, vector<1x1x10x128xf32>
    %219 = vector.shape_cast %218 : vector<1x1x10x128xf32> to vector<10x128xf32>
    %cst_189 = arith.constant 0.000000e+00 : f32
    %220 = vector.broadcast %cst_189 : f32 to vector<10x128xf32>
    %221 = arith.select %200, %39, %220 : vector<10x128xi1>, vector<10x128xf32>
    %222 = arith.addf %219, %221 : vector<10x128xf32>
    %c0_190 = arith.constant 0 : index
    %c5_191 = arith.constant 5 : index
    %c0_192 = arith.constant 0 : index
    %c0_193 = arith.constant 0 : index
    %223 = vector.load %arg6[%c0_190, %c5_191, %c0_192, %c0_193] : memref<1x15x10x128xf32, #tpu.memory_space<vmem>>, vector<1x1x10x128xf32>
    %224 = vector.shape_cast %223 : vector<1x1x10x128xf32> to vector<10x128xf32>
    %225 = vector.shape_cast %222 : vector<10x128xf32> to vector<1x1x10x128xf32>
    tpu.vector_store %arg6[%c0_190, %c5_191, %c0_192, %c0_193], %225 {strides = array<i32>} : memref<1x15x10x128xf32, #tpu.memory_space<vmem>>, vector<1x1x10x128xf32>,
    %cst_194 = arith.constant 6.000000e+00 : f32
    %226 = vector.broadcast %cst_194 : f32 to vector<10x128xf32>
    %227 = arith.cmpf oeq, %63, %226 : vector<10x128xf32>
    %c0_195 = arith.constant 0 : index
    %c6 = arith.constant 6 : index
    %c0_196 = arith.constant 0 : index
    %c0_197 = arith.constant 0 : index
    %228 = vector.load %arg4[%c0_195, %c6, %c0_196, %c0_197] : memref<1x15x10x128xf32, #tpu.memory_space<vmem>>, vector<1x1x10x128xf32>
    %229 = vector.shape_cast %228 : vector<1x1x10x128xf32> to vector<10x128xf32>
    %cst_198 = arith.constant 1.000000e+00 : f32
    %cst_199 = arith.constant 0.000000e+00 : f32
    %230 = vector.broadcast %cst_198 : f32 to vector<10x128xf32>
    %231 = vector.broadcast %cst_199 : f32 to vector<10x128xf32>
    %232 = arith.select %227, %230, %231 : vector<10x128xi1>, vector<10x128xf32>
    %233 = arith.addf %229, %232 : vector<10x128xf32>
    %c0_200 = arith.constant 0 : index
    %c6_201 = arith.constant 6 : index
    %c0_202 = arith.constant 0 : index
    %c0_203 = arith.constant 0 : index
    %234 = vector.load %arg4[%c0_200, %c6_201, %c0_202, %c0_203] : memref<1x15x10x128xf32, #tpu.memory_space<vmem>>, vector<1x1x10x128xf32>
    %235 = vector.shape_cast %234 : vector<1x1x10x128xf32> to vector<10x128xf32>
    %236 = vector.shape_cast %233 : vector<10x128xf32> to vector<1x1x10x128xf32>
    tpu.vector_store %arg4[%c0_200, %c6_201, %c0_202, %c0_203], %236 {strides = array<i32>} : memref<1x15x10x128xf32, #tpu.memory_space<vmem>>, vector<1x1x10x128xf32>,
    %c0_204 = arith.constant 0 : index
    %c6_205 = arith.constant 6 : index
    %c0_206 = arith.constant 0 : index
    %c0_207 = arith.constant 0 : index
    %237 = vector.load %arg5[%c0_204, %c6_205, %c0_206, %c0_207] : memref<1x15x10x128xf32, #tpu.memory_space<vmem>>, vector<1x1x10x128xf32>
    %238 = vector.shape_cast %237 : vector<1x1x10x128xf32> to vector<10x128xf32>
    %cst_208 = arith.constant 0.000000e+00 : f32
    %239 = vector.broadcast %cst_208 : f32 to vector<10x128xf32>
    %240 = arith.select %227, %25, %239 : vector<10x128xi1>, vector<10x128xf32>
    %241 = arith.addf %238, %240 : vector<10x128xf32>
    %c0_209 = arith.constant 0 : index
    %c6_210 = arith.constant 6 : index
    %c0_211 = arith.constant 0 : index
    %c0_212 = arith.constant 0 : index
    %242 = vector.load %arg5[%c0_209, %c6_210, %c0_211, %c0_212] : memref<1x15x10x128xf32, #tpu.memory_space<vmem>>, vector<1x1x10x128xf32>
    %243 = vector.shape_cast %242 : vector<1x1x10x128xf32> to vector<10x128xf32>
    %244 = vector.shape_cast %241 : vector<10x128xf32> to vector<1x1x10x128xf32>
    tpu.vector_store %arg5[%c0_209, %c6_210, %c0_211, %c0_212], %244 {strides = array<i32>} : memref<1x15x10x128xf32, #tpu.memory_space<vmem>>, vector<1x1x10x128xf32>,
    %c0_213 = arith.constant 0 : index
    %c6_214 = arith.constant 6 : index
    %c0_215 = arith.constant 0 : index
    %c0_216 = arith.constant 0 : index
    %245 = vector.load %arg6[%c0_213, %c6_214, %c0_215, %c0_216] : memref<1x15x10x128xf32, #tpu.memory_space<vmem>>, vector<1x1x10x128xf32>
    %246 = vector.shape_cast %245 : vector<1x1x10x128xf32> to vector<10x128xf32>
    %cst_217 = arith.constant 0.000000e+00 : f32
    %247 = vector.broadcast %cst_217 : f32 to vector<10x128xf32>
    %248 = arith.select %227, %39, %247 : vector<10x128xi1>, vector<10x128xf32>
    %249 = arith.addf %246, %248 : vector<10x128xf32>
    %c0_218 = arith.constant 0 : index
    %c6_219 = arith.constant 6 : index
    %c0_220 = arith.constant 0 : index
    %c0_221 = arith.constant 0 : index
    %250 = vector.load %arg6[%c0_218, %c6_219, %c0_220, %c0_221] : memref<1x15x10x128xf32, #tpu.memory_space<vmem>>, vector<1x1x10x128xf32>
    %251 = vector.shape_cast %250 : vector<1x1x10x128xf32> to vector<10x128xf32>
    %252 = vector.shape_cast %249 : vector<10x128xf32> to vector<1x1x10x128xf32>
    tpu.vector_store %arg6[%c0_218, %c6_219, %c0_220, %c0_221], %252 {strides = array<i32>} : memref<1x15x10x128xf32, #tpu.memory_space<vmem>>, vector<1x1x10x128xf32>,
    %cst_222 = arith.constant 7.000000e+00 : f32
    %253 = vector.broadcast %cst_222 : f32 to vector<10x128xf32>
    %254 = arith.cmpf oeq, %63, %253 : vector<10x128xf32>
    %c0_223 = arith.constant 0 : index
    %c7 = arith.constant 7 : index
    %c0_224 = arith.constant 0 : index
    %c0_225 = arith.constant 0 : index
    %255 = vector.load %arg4[%c0_223, %c7, %c0_224, %c0_225] : memref<1x15x10x128xf32, #tpu.memory_space<vmem>>, vector<1x1x10x128xf32>
    %256 = vector.shape_cast %255 : vector<1x1x10x128xf32> to vector<10x128xf32>
    %cst_226 = arith.constant 1.000000e+00 : f32
    %cst_227 = arith.constant 0.000000e+00 : f32
    %257 = vector.broadcast %cst_226 : f32 to vector<10x128xf32>
    %258 = vector.broadcast %cst_227 : f32 to vector<10x128xf32>
    %259 = arith.select %254, %257, %258 : vector<10x128xi1>, vector<10x128xf32>
    %260 = arith.addf %256, %259 : vector<10x128xf32>
    %c0_228 = arith.constant 0 : index
    %c7_229 = arith.constant 7 : index
    %c0_230 = arith.constant 0 : index
    %c0_231 = arith.constant 0 : index
    %261 = vector.load %arg4[%c0_228, %c7_229, %c0_230, %c0_231] : memref<1x15x10x128xf32, #tpu.memory_space<vmem>>, vector<1x1x10x128xf32>
    %262 = vector.shape_cast %261 : vector<1x1x10x128xf32> to vector<10x128xf32>
    %263 = vector.shape_cast %260 : vector<10x128xf32> to vector<1x1x10x128xf32>
    tpu.vector_store %arg4[%c0_228, %c7_229, %c0_230, %c0_231], %263 {strides = array<i32>} : memref<1x15x10x128xf32, #tpu.memory_space<vmem>>, vector<1x1x10x128xf32>,
    %c0_232 = arith.constant 0 : index
    %c7_233 = arith.constant 7 : index
    %c0_234 = arith.constant 0 : index
    %c0_235 = arith.constant 0 : index
    %264 = vector.load %arg5[%c0_232, %c7_233, %c0_234, %c0_235] : memref<1x15x10x128xf32, #tpu.memory_space<vmem>>, vector<1x1x10x128xf32>
    %265 = vector.shape_cast %264 : vector<1x1x10x128xf32> to vector<10x128xf32>
    %cst_236 = arith.constant 0.000000e+00 : f32
    %266 = vector.broadcast %cst_236 : f32 to vector<10x128xf32>
    %267 = arith.select %254, %25, %266 : vector<10x128xi1>, vector<10x128xf32>
    %268 = arith.addf %265, %267 : vector<10x128xf32>
    %c0_237 = arith.constant 0 : index
    %c7_238 = arith.constant 7 : index
    %c0_239 = arith.constant 0 : index
    %c0_240 = arith.constant 0 : index
    %269 = vector.load %arg5[%c0_237, %c7_238, %c0_239, %c0_240] : memref<1x15x10x128xf32, #tpu.memory_space<vmem>>, vector<1x1x10x128xf32>
    %270 = vector.shape_cast %269 : vector<1x1x10x128xf32> to vector<10x128xf32>
    %271 = vector.shape_cast %268 : vector<10x128xf32> to vector<1x1x10x128xf32>
    tpu.vector_store %arg5[%c0_237, %c7_238, %c0_239, %c0_240], %271 {strides = array<i32>} : memref<1x15x10x128xf32, #tpu.memory_space<vmem>>, vector<1x1x10x128xf32>,
    %c0_241 = arith.constant 0 : index
    %c7_242 = arith.constant 7 : index
    %c0_243 = arith.constant 0 : index
    %c0_244 = arith.constant 0 : index
    %272 = vector.load %arg6[%c0_241, %c7_242, %c0_243, %c0_244] : memref<1x15x10x128xf32, #tpu.memory_space<vmem>>, vector<1x1x10x128xf32>
    %273 = vector.shape_cast %272 : vector<1x1x10x128xf32> to vector<10x128xf32>
    %cst_245 = arith.constant 0.000000e+00 : f32
    %274 = vector.broadcast %cst_245 : f32 to vector<10x128xf32>
    %275 = arith.select %254, %39, %274 : vector<10x128xi1>, vector<10x128xf32>
    %276 = arith.addf %273, %275 : vector<10x128xf32>
    %c0_246 = arith.constant 0 : index
    %c7_247 = arith.constant 7 : index
    %c0_248 = arith.constant 0 : index
    %c0_249 = arith.constant 0 : index
    %277 = vector.load %arg6[%c0_246, %c7_247, %c0_248, %c0_249] : memref<1x15x10x128xf32, #tpu.memory_space<vmem>>, vector<1x1x10x128xf32>
    %278 = vector.shape_cast %277 : vector<1x1x10x128xf32> to vector<10x128xf32>
    %279 = vector.shape_cast %276 : vector<10x128xf32> to vector<1x1x10x128xf32>
    tpu.vector_store %arg6[%c0_246, %c7_247, %c0_248, %c0_249], %279 {strides = array<i32>} : memref<1x15x10x128xf32, #tpu.memory_space<vmem>>, vector<1x1x10x128xf32>,
    %cst_250 = arith.constant 8.000000e+00 : f32
    %280 = vector.broadcast %cst_250 : f32 to vector<10x128xf32>
    %281 = arith.cmpf oeq, %63, %280 : vector<10x128xf32>
    %c0_251 = arith.constant 0 : index
    %c8 = arith.constant 8 : index
    %c0_252 = arith.constant 0 : index
    %c0_253 = arith.constant 0 : index
    %282 = vector.load %arg4[%c0_251, %c8, %c0_252, %c0_253] : memref<1x15x10x128xf32, #tpu.memory_space<vmem>>, vector<1x1x10x128xf32>
    %283 = vector.shape_cast %282 : vector<1x1x10x128xf32> to vector<10x128xf32>
    %cst_254 = arith.constant 1.000000e+00 : f32
    %cst_255 = arith.constant 0.000000e+00 : f32
    %284 = vector.broadcast %cst_254 : f32 to vector<10x128xf32>
    %285 = vector.broadcast %cst_255 : f32 to vector<10x128xf32>
    %286 = arith.select %281, %284, %285 : vector<10x128xi1>, vector<10x128xf32>
    %287 = arith.addf %283, %286 : vector<10x128xf32>
    %c0_256 = arith.constant 0 : index
    %c8_257 = arith.constant 8 : index
    %c0_258 = arith.constant 0 : index
    %c0_259 = arith.constant 0 : index
    %288 = vector.load %arg4[%c0_256, %c8_257, %c0_258, %c0_259] : memref<1x15x10x128xf32, #tpu.memory_space<vmem>>, vector<1x1x10x128xf32>
    %289 = vector.shape_cast %288 : vector<1x1x10x128xf32> to vector<10x128xf32>
    %290 = vector.shape_cast %287 : vector<10x128xf32> to vector<1x1x10x128xf32>
    tpu.vector_store %arg4[%c0_256, %c8_257, %c0_258, %c0_259], %290 {strides = array<i32>} : memref<1x15x10x128xf32, #tpu.memory_space<vmem>>, vector<1x1x10x128xf32>,
    %c0_260 = arith.constant 0 : index
    %c8_261 = arith.constant 8 : index
    %c0_262 = arith.constant 0 : index
    %c0_263 = arith.constant 0 : index
    %291 = vector.load %arg5[%c0_260, %c8_261, %c0_262, %c0_263] : memref<1x15x10x128xf32, #tpu.memory_space<vmem>>, vector<1x1x10x128xf32>
    %292 = vector.shape_cast %291 : vector<1x1x10x128xf32> to vector<10x128xf32>
    %cst_264 = arith.constant 0.000000e+00 : f32
    %293 = vector.broadcast %cst_264 : f32 to vector<10x128xf32>
    %294 = arith.select %281, %25, %293 : vector<10x128xi1>, vector<10x128xf32>
    %295 = arith.addf %292, %294 : vector<10x128xf32>
    %c0_265 = arith.constant 0 : index
    %c8_266 = arith.constant 8 : index
    %c0_267 = arith.constant 0 : index
    %c0_268 = arith.constant 0 : index
    %296 = vector.load %arg5[%c0_265, %c8_266, %c0_267, %c0_268] : memref<1x15x10x128xf32, #tpu.memory_space<vmem>>, vector<1x1x10x128xf32>
    %297 = vector.shape_cast %296 : vector<1x1x10x128xf32> to vector<10x128xf32>
    %298 = vector.shape_cast %295 : vector<10x128xf32> to vector<1x1x10x128xf32>
    tpu.vector_store %arg5[%c0_265, %c8_266, %c0_267, %c0_268], %298 {strides = array<i32>} : memref<1x15x10x128xf32, #tpu.memory_space<vmem>>, vector<1x1x10x128xf32>,
    %c0_269 = arith.constant 0 : index
    %c8_270 = arith.constant 8 : index
    %c0_271 = arith.constant 0 : index
    %c0_272 = arith.constant 0 : index
    %299 = vector.load %arg6[%c0_269, %c8_270, %c0_271, %c0_272] : memref<1x15x10x128xf32, #tpu.memory_space<vmem>>, vector<1x1x10x128xf32>
    %300 = vector.shape_cast %299 : vector<1x1x10x128xf32> to vector<10x128xf32>
    %cst_273 = arith.constant 0.000000e+00 : f32
    %301 = vector.broadcast %cst_273 : f32 to vector<10x128xf32>
    %302 = arith.select %281, %39, %301 : vector<10x128xi1>, vector<10x128xf32>
    %303 = arith.addf %300, %302 : vector<10x128xf32>
    %c0_274 = arith.constant 0 : index
    %c8_275 = arith.constant 8 : index
    %c0_276 = arith.constant 0 : index
    %c0_277 = arith.constant 0 : index
    %304 = vector.load %arg6[%c0_274, %c8_275, %c0_276, %c0_277] : memref<1x15x10x128xf32, #tpu.memory_space<vmem>>, vector<1x1x10x128xf32>
    %305 = vector.shape_cast %304 : vector<1x1x10x128xf32> to vector<10x128xf32>
    %306 = vector.shape_cast %303 : vector<10x128xf32> to vector<1x1x10x128xf32>
    tpu.vector_store %arg6[%c0_274, %c8_275, %c0_276, %c0_277], %306 {strides = array<i32>} : memref<1x15x10x128xf32, #tpu.memory_space<vmem>>, vector<1x1x10x128xf32>,
    %cst_278 = arith.constant 9.000000e+00 : f32
    %307 = vector.broadcast %cst_278 : f32 to vector<10x128xf32>
    %308 = arith.cmpf oeq, %63, %307 : vector<10x128xf32>
    %c0_279 = arith.constant 0 : index
    %c9 = arith.constant 9 : index
    %c0_280 = arith.constant 0 : index
    %c0_281 = arith.constant 0 : index
    %309 = vector.load %arg4[%c0_279, %c9, %c0_280, %c0_281] : memref<1x15x10x128xf32, #tpu.memory_space<vmem>>, vector<1x1x10x128xf32>
    %310 = vector.shape_cast %309 : vector<1x1x10x128xf32> to vector<10x128xf32>
    %cst_282 = arith.constant 1.000000e+00 : f32
    %cst_283 = arith.constant 0.000000e+00 : f32
    %311 = vector.broadcast %cst_282 : f32 to vector<10x128xf32>
    %312 = vector.broadcast %cst_283 : f32 to vector<10x128xf32>
    %313 = arith.select %308, %311, %312 : vector<10x128xi1>, vector<10x128xf32>
    %314 = arith.addf %310, %313 : vector<10x128xf32>
    %c0_284 = arith.constant 0 : index
    %c9_285 = arith.constant 9 : index
    %c0_286 = arith.constant 0 : index
    %c0_287 = arith.constant 0 : index
    %315 = vector.load %arg4[%c0_284, %c9_285, %c0_286, %c0_287] : memref<1x15x10x128xf32, #tpu.memory_space<vmem>>, vector<1x1x10x128xf32>
    %316 = vector.shape_cast %315 : vector<1x1x10x128xf32> to vector<10x128xf32>
    %317 = vector.shape_cast %314 : vector<10x128xf32> to vector<1x1x10x128xf32>
    tpu.vector_store %arg4[%c0_284, %c9_285, %c0_286, %c0_287], %317 {strides = array<i32>} : memref<1x15x10x128xf32, #tpu.memory_space<vmem>>, vector<1x1x10x128xf32>,
    %c0_288 = arith.constant 0 : index
    %c9_289 = arith.constant 9 : index
    %c0_290 = arith.constant 0 : index
    %c0_291 = arith.constant 0 : index
    %318 = vector.load %arg5[%c0_288, %c9_289, %c0_290, %c0_291] : memref<1x15x10x128xf32, #tpu.memory_space<vmem>>, vector<1x1x10x128xf32>
    %319 = vector.shape_cast %318 : vector<1x1x10x128xf32> to vector<10x128xf32>
    %cst_292 = arith.constant 0.000000e+00 : f32
    %320 = vector.broadcast %cst_292 : f32 to vector<10x128xf32>
    %321 = arith.select %308, %25, %320 : vector<10x128xi1>, vector<10x128xf32>
    %322 = arith.addf %319, %321 : vector<10x128xf32>
    %c0_293 = arith.constant 0 : index
    %c9_294 = arith.constant 9 : index
    %c0_295 = arith.constant 0 : index
    %c0_296 = arith.constant 0 : index
    %323 = vector.load %arg5[%c0_293, %c9_294, %c0_295, %c0_296] : memref<1x15x10x128xf32, #tpu.memory_space<vmem>>, vector<1x1x10x128xf32>
    %324 = vector.shape_cast %323 : vector<1x1x10x128xf32> to vector<10x128xf32>
    %325 = vector.shape_cast %322 : vector<10x128xf32> to vector<1x1x10x128xf32>
    tpu.vector_store %arg5[%c0_293, %c9_294, %c0_295, %c0_296], %325 {strides = array<i32>} : memref<1x15x10x128xf32, #tpu.memory_space<vmem>>, vector<1x1x10x128xf32>,
    %c0_297 = arith.constant 0 : index
    %c9_298 = arith.constant 9 : index
    %c0_299 = arith.constant 0 : index
    %c0_300 = arith.constant 0 : index
    %326 = vector.load %arg6[%c0_297, %c9_298, %c0_299, %c0_300] : memref<1x15x10x128xf32, #tpu.memory_space<vmem>>, vector<1x1x10x128xf32>
    %327 = vector.shape_cast %326 : vector<1x1x10x128xf32> to vector<10x128xf32>
    %cst_301 = arith.constant 0.000000e+00 : f32
    %328 = vector.broadcast %cst_301 : f32 to vector<10x128xf32>
    %329 = arith.select %308, %39, %328 : vector<10x128xi1>, vector<10x128xf32>
    %330 = arith.addf %327, %329 : vector<10x128xf32>
    %c0_302 = arith.constant 0 : index
    %c9_303 = arith.constant 9 : index
    %c0_304 = arith.constant 0 : index
    %c0_305 = arith.constant 0 : index
    %331 = vector.load %arg6[%c0_302, %c9_303, %c0_304, %c0_305] : memref<1x15x10x128xf32, #tpu.memory_space<vmem>>, vector<1x1x10x128xf32>
    %332 = vector.shape_cast %331 : vector<1x1x10x128xf32> to vector<10x128xf32>
    %333 = vector.shape_cast %330 : vector<10x128xf32> to vector<1x1x10x128xf32>
    tpu.vector_store %arg6[%c0_302, %c9_303, %c0_304, %c0_305], %333 {strides = array<i32>} : memref<1x15x10x128xf32, #tpu.memory_space<vmem>>, vector<1x1x10x128xf32>,
    %cst_306 = arith.constant 1.000000e+01 : f32
    %334 = vector.broadcast %cst_306 : f32 to vector<10x128xf32>
    %335 = arith.cmpf oeq, %63, %334 : vector<10x128xf32>
    %c0_307 = arith.constant 0 : index
    %c10 = arith.constant 10 : index
    %c0_308 = arith.constant 0 : index
    %c0_309 = arith.constant 0 : index
    %336 = vector.load %arg4[%c0_307, %c10, %c0_308, %c0_309] : memref<1x15x10x128xf32, #tpu.memory_space<vmem>>, vector<1x1x10x128xf32>
    %337 = vector.shape_cast %336 : vector<1x1x10x128xf32> to vector<10x128xf32>
    %cst_310 = arith.constant 1.000000e+00 : f32
    %cst_311 = arith.constant 0.000000e+00 : f32
    %338 = vector.broadcast %cst_310 : f32 to vector<10x128xf32>
    %339 = vector.broadcast %cst_311 : f32 to vector<10x128xf32>
    %340 = arith.select %335, %338, %339 : vector<10x128xi1>, vector<10x128xf32>
    %341 = arith.addf %337, %340 : vector<10x128xf32>
    %c0_312 = arith.constant 0 : index
    %c10_313 = arith.constant 10 : index
    %c0_314 = arith.constant 0 : index
    %c0_315 = arith.constant 0 : index
    %342 = vector.load %arg4[%c0_312, %c10_313, %c0_314, %c0_315] : memref<1x15x10x128xf32, #tpu.memory_space<vmem>>, vector<1x1x10x128xf32>
    %343 = vector.shape_cast %342 : vector<1x1x10x128xf32> to vector<10x128xf32>
    %344 = vector.shape_cast %341 : vector<10x128xf32> to vector<1x1x10x128xf32>
    tpu.vector_store %arg4[%c0_312, %c10_313, %c0_314, %c0_315], %344 {strides = array<i32>} : memref<1x15x10x128xf32, #tpu.memory_space<vmem>>, vector<1x1x10x128xf32>,
    %c0_316 = arith.constant 0 : index
    %c10_317 = arith.constant 10 : index
    %c0_318 = arith.constant 0 : index
    %c0_319 = arith.constant 0 : index
    %345 = vector.load %arg5[%c0_316, %c10_317, %c0_318, %c0_319] : memref<1x15x10x128xf32, #tpu.memory_space<vmem>>, vector<1x1x10x128xf32>
    %346 = vector.shape_cast %345 : vector<1x1x10x128xf32> to vector<10x128xf32>
    %cst_320 = arith.constant 0.000000e+00 : f32
    %347 = vector.broadcast %cst_320 : f32 to vector<10x128xf32>
    %348 = arith.select %335, %25, %347 : vector<10x128xi1>, vector<10x128xf32>
    %349 = arith.addf %346, %348 : vector<10x128xf32>
    %c0_321 = arith.constant 0 : index
    %c10_322 = arith.constant 10 : index
    %c0_323 = arith.constant 0 : index
    %c0_324 = arith.constant 0 : index
    %350 = vector.load %arg5[%c0_321, %c10_322, %c0_323, %c0_324] : memref<1x15x10x128xf32, #tpu.memory_space<vmem>>, vector<1x1x10x128xf32>
    %351 = vector.shape_cast %350 : vector<1x1x10x128xf32> to vector<10x128xf32>
    %352 = vector.shape_cast %349 : vector<10x128xf32> to vector<1x1x10x128xf32>
    tpu.vector_store %arg5[%c0_321, %c10_322, %c0_323, %c0_324], %352 {strides = array<i32>} : memref<1x15x10x128xf32, #tpu.memory_space<vmem>>, vector<1x1x10x128xf32>,
    %c0_325 = arith.constant 0 : index
    %c10_326 = arith.constant 10 : index
    %c0_327 = arith.constant 0 : index
    %c0_328 = arith.constant 0 : index
    %353 = vector.load %arg6[%c0_325, %c10_326, %c0_327, %c0_328] : memref<1x15x10x128xf32, #tpu.memory_space<vmem>>, vector<1x1x10x128xf32>
    %354 = vector.shape_cast %353 : vector<1x1x10x128xf32> to vector<10x128xf32>
    %cst_329 = arith.constant 0.000000e+00 : f32
    %355 = vector.broadcast %cst_329 : f32 to vector<10x128xf32>
    %356 = arith.select %335, %39, %355 : vector<10x128xi1>, vector<10x128xf32>
    %357 = arith.addf %354, %356 : vector<10x128xf32>
    %c0_330 = arith.constant 0 : index
    %c10_331 = arith.constant 10 : index
    %c0_332 = arith.constant 0 : index
    %c0_333 = arith.constant 0 : index
    %358 = vector.load %arg6[%c0_330, %c10_331, %c0_332, %c0_333] : memref<1x15x10x128xf32, #tpu.memory_space<vmem>>, vector<1x1x10x128xf32>
    %359 = vector.shape_cast %358 : vector<1x1x10x128xf32> to vector<10x128xf32>
    %360 = vector.shape_cast %357 : vector<10x128xf32> to vector<1x1x10x128xf32>
    tpu.vector_store %arg6[%c0_330, %c10_331, %c0_332, %c0_333], %360 {strides = array<i32>} : memref<1x15x10x128xf32, #tpu.memory_space<vmem>>, vector<1x1x10x128xf32>,
    %cst_334 = arith.constant 1.100000e+01 : f32
    %361 = vector.broadcast %cst_334 : f32 to vector<10x128xf32>
    %362 = arith.cmpf oeq, %63, %361 : vector<10x128xf32>
    %c0_335 = arith.constant 0 : index
    %c11 = arith.constant 11 : index
    %c0_336 = arith.constant 0 : index
    %c0_337 = arith.constant 0 : index
    %363 = vector.load %arg4[%c0_335, %c11, %c0_336, %c0_337] : memref<1x15x10x128xf32, #tpu.memory_space<vmem>>, vector<1x1x10x128xf32>
    %364 = vector.shape_cast %363 : vector<1x1x10x128xf32> to vector<10x128xf32>
    %cst_338 = arith.constant 1.000000e+00 : f32
    %cst_339 = arith.constant 0.000000e+00 : f32
    %365 = vector.broadcast %cst_338 : f32 to vector<10x128xf32>
    %366 = vector.broadcast %cst_339 : f32 to vector<10x128xf32>
    %367 = arith.select %362, %365, %366 : vector<10x128xi1>, vector<10x128xf32>
    %368 = arith.addf %364, %367 : vector<10x128xf32>
    %c0_340 = arith.constant 0 : index
    %c11_341 = arith.constant 11 : index
    %c0_342 = arith.constant 0 : index
    %c0_343 = arith.constant 0 : index
    %369 = vector.load %arg4[%c0_340, %c11_341, %c0_342, %c0_343] : memref<1x15x10x128xf32, #tpu.memory_space<vmem>>, vector<1x1x10x128xf32>
    %370 = vector.shape_cast %369 : vector<1x1x10x128xf32> to vector<10x128xf32>
    %371 = vector.shape_cast %368 : vector<10x128xf32> to vector<1x1x10x128xf32>
    tpu.vector_store %arg4[%c0_340, %c11_341, %c0_342, %c0_343], %371 {strides = array<i32>} : memref<1x15x10x128xf32, #tpu.memory_space<vmem>>, vector<1x1x10x128xf32>,
    %c0_344 = arith.constant 0 : index
    %c11_345 = arith.constant 11 : index
    %c0_346 = arith.constant 0 : index
    %c0_347 = arith.constant 0 : index
    %372 = vector.load %arg5[%c0_344, %c11_345, %c0_346, %c0_347] : memref<1x15x10x128xf32, #tpu.memory_space<vmem>>, vector<1x1x10x128xf32>
    %373 = vector.shape_cast %372 : vector<1x1x10x128xf32> to vector<10x128xf32>
    %cst_348 = arith.constant 0.000000e+00 : f32
    %374 = vector.broadcast %cst_348 : f32 to vector<10x128xf32>
    %375 = arith.select %362, %25, %374 : vector<10x128xi1>, vector<10x128xf32>
    %376 = arith.addf %373, %375 : vector<10x128xf32>
    %c0_349 = arith.constant 0 : index
    %c11_350 = arith.constant 11 : index
    %c0_351 = arith.constant 0 : index
    %c0_352 = arith.constant 0 : index
    %377 = vector.load %arg5[%c0_349, %c11_350, %c0_351, %c0_352] : memref<1x15x10x128xf32, #tpu.memory_space<vmem>>, vector<1x1x10x128xf32>
    %378 = vector.shape_cast %377 : vector<1x1x10x128xf32> to vector<10x128xf32>
    %379 = vector.shape_cast %376 : vector<10x128xf32> to vector<1x1x10x128xf32>
    tpu.vector_store %arg5[%c0_349, %c11_350, %c0_351, %c0_352], %379 {strides = array<i32>} : memref<1x15x10x128xf32, #tpu.memory_space<vmem>>, vector<1x1x10x128xf32>,
    %c0_353 = arith.constant 0 : index
    %c11_354 = arith.constant 11 : index
    %c0_355 = arith.constant 0 : index
    %c0_356 = arith.constant 0 : index
    %380 = vector.load %arg6[%c0_353, %c11_354, %c0_355, %c0_356] : memref<1x15x10x128xf32, #tpu.memory_space<vmem>>, vector<1x1x10x128xf32>
    %381 = vector.shape_cast %380 : vector<1x1x10x128xf32> to vector<10x128xf32>
    %cst_357 = arith.constant 0.000000e+00 : f32
    %382 = vector.broadcast %cst_357 : f32 to vector<10x128xf32>
    %383 = arith.select %362, %39, %382 : vector<10x128xi1>, vector<10x128xf32>
    %384 = arith.addf %381, %383 : vector<10x128xf32>
    %c0_358 = arith.constant 0 : index
    %c11_359 = arith.constant 11 : index
    %c0_360 = arith.constant 0 : index
    %c0_361 = arith.constant 0 : index
    %385 = vector.load %arg6[%c0_358, %c11_359, %c0_360, %c0_361] : memref<1x15x10x128xf32, #tpu.memory_space<vmem>>, vector<1x1x10x128xf32>
    %386 = vector.shape_cast %385 : vector<1x1x10x128xf32> to vector<10x128xf32>
    %387 = vector.shape_cast %384 : vector<10x128xf32> to vector<1x1x10x128xf32>
    tpu.vector_store %arg6[%c0_358, %c11_359, %c0_360, %c0_361], %387 {strides = array<i32>} : memref<1x15x10x128xf32, #tpu.memory_space<vmem>>, vector<1x1x10x128xf32>,
    %cst_362 = arith.constant 1.200000e+01 : f32
    %388 = vector.broadcast %cst_362 : f32 to vector<10x128xf32>
    %389 = arith.cmpf oeq, %63, %388 : vector<10x128xf32>
    %c0_363 = arith.constant 0 : index
    %c12 = arith.constant 12 : index
    %c0_364 = arith.constant 0 : index
    %c0_365 = arith.constant 0 : index
    %390 = vector.load %arg4[%c0_363, %c12, %c0_364, %c0_365] : memref<1x15x10x128xf32, #tpu.memory_space<vmem>>, vector<1x1x10x128xf32>
    %391 = vector.shape_cast %390 : vector<1x1x10x128xf32> to vector<10x128xf32>
    %cst_366 = arith.constant 1.000000e+00 : f32
    %cst_367 = arith.constant 0.000000e+00 : f32
    %392 = vector.broadcast %cst_366 : f32 to vector<10x128xf32>
    %393 = vector.broadcast %cst_367 : f32 to vector<10x128xf32>
    %394 = arith.select %389, %392, %393 : vector<10x128xi1>, vector<10x128xf32>
    %395 = arith.addf %391, %394 : vector<10x128xf32>
    %c0_368 = arith.constant 0 : index
    %c12_369 = arith.constant 12 : index
    %c0_370 = arith.constant 0 : index
    %c0_371 = arith.constant 0 : index
    %396 = vector.load %arg4[%c0_368, %c12_369, %c0_370, %c0_371] : memref<1x15x10x128xf32, #tpu.memory_space<vmem>>, vector<1x1x10x128xf32>
    %397 = vector.shape_cast %396 : vector<1x1x10x128xf32> to vector<10x128xf32>
    %398 = vector.shape_cast %395 : vector<10x128xf32> to vector<1x1x10x128xf32>
    tpu.vector_store %arg4[%c0_368, %c12_369, %c0_370, %c0_371], %398 {strides = array<i32>} : memref<1x15x10x128xf32, #tpu.memory_space<vmem>>, vector<1x1x10x128xf32>,
    %c0_372 = arith.constant 0 : index
    %c12_373 = arith.constant 12 : index
    %c0_374 = arith.constant 0 : index
    %c0_375 = arith.constant 0 : index
    %399 = vector.load %arg5[%c0_372, %c12_373, %c0_374, %c0_375] : memref<1x15x10x128xf32, #tpu.memory_space<vmem>>, vector<1x1x10x128xf32>
    %400 = vector.shape_cast %399 : vector<1x1x10x128xf32> to vector<10x128xf32>
    %cst_376 = arith.constant 0.000000e+00 : f32
    %401 = vector.broadcast %cst_376 : f32 to vector<10x128xf32>
    %402 = arith.select %389, %25, %401 : vector<10x128xi1>, vector<10x128xf32>
    %403 = arith.addf %400, %402 : vector<10x128xf32>
    %c0_377 = arith.constant 0 : index
    %c12_378 = arith.constant 12 : index
    %c0_379 = arith.constant 0 : index
    %c0_380 = arith.constant 0 : index
    %404 = vector.load %arg5[%c0_377, %c12_378, %c0_379, %c0_380] : memref<1x15x10x128xf32, #tpu.memory_space<vmem>>, vector<1x1x10x128xf32>
    %405 = vector.shape_cast %404 : vector<1x1x10x128xf32> to vector<10x128xf32>
    %406 = vector.shape_cast %403 : vector<10x128xf32> to vector<1x1x10x128xf32>
    tpu.vector_store %arg5[%c0_377, %c12_378, %c0_379, %c0_380], %406 {strides = array<i32>} : memref<1x15x10x128xf32, #tpu.memory_space<vmem>>, vector<1x1x10x128xf32>,
    %c0_381 = arith.constant 0 : index
    %c12_382 = arith.constant 12 : index
    %c0_383 = arith.constant 0 : index
    %c0_384 = arith.constant 0 : index
    %407 = vector.load %arg6[%c0_381, %c12_382, %c0_383, %c0_384] : memref<1x15x10x128xf32, #tpu.memory_space<vmem>>, vector<1x1x10x128xf32>
    %408 = vector.shape_cast %407 : vector<1x1x10x128xf32> to vector<10x128xf32>
    %cst_385 = arith.constant 0.000000e+00 : f32
    %409 = vector.broadcast %cst_385 : f32 to vector<10x128xf32>
    %410 = arith.select %389, %39, %409 : vector<10x128xi1>, vector<10x128xf32>
    %411 = arith.addf %408, %410 : vector<10x128xf32>
    %c0_386 = arith.constant 0 : index
    %c12_387 = arith.constant 12 : index
    %c0_388 = arith.constant 0 : index
    %c0_389 = arith.constant 0 : index
    %412 = vector.load %arg6[%c0_386, %c12_387, %c0_388, %c0_389] : memref<1x15x10x128xf32, #tpu.memory_space<vmem>>, vector<1x1x10x128xf32>
    %413 = vector.shape_cast %412 : vector<1x1x10x128xf32> to vector<10x128xf32>
    %414 = vector.shape_cast %411 : vector<10x128xf32> to vector<1x1x10x128xf32>
    tpu.vector_store %arg6[%c0_386, %c12_387, %c0_388, %c0_389], %414 {strides = array<i32>} : memref<1x15x10x128xf32, #tpu.memory_space<vmem>>, vector<1x1x10x128xf32>,
    %cst_390 = arith.constant 1.300000e+01 : f32
    %415 = vector.broadcast %cst_390 : f32 to vector<10x128xf32>
    %416 = arith.cmpf oeq, %63, %415 : vector<10x128xf32>
    %c0_391 = arith.constant 0 : index
    %c13 = arith.constant 13 : index
    %c0_392 = arith.constant 0 : index
    %c0_393 = arith.constant 0 : index
    %417 = vector.load %arg4[%c0_391, %c13, %c0_392, %c0_393] : memref<1x15x10x128xf32, #tpu.memory_space<vmem>>, vector<1x1x10x128xf32>
    %418 = vector.shape_cast %417 : vector<1x1x10x128xf32> to vector<10x128xf32>
    %cst_394 = arith.constant 1.000000e+00 : f32
    %cst_395 = arith.constant 0.000000e+00 : f32
    %419 = vector.broadcast %cst_394 : f32 to vector<10x128xf32>
    %420 = vector.broadcast %cst_395 : f32 to vector<10x128xf32>
    %421 = arith.select %416, %419, %420 : vector<10x128xi1>, vector<10x128xf32>
    %422 = arith.addf %418, %421 : vector<10x128xf32>
    %c0_396 = arith.constant 0 : index
    %c13_397 = arith.constant 13 : index
    %c0_398 = arith.constant 0 : index
    %c0_399 = arith.constant 0 : index
    %423 = vector.load %arg4[%c0_396, %c13_397, %c0_398, %c0_399] : memref<1x15x10x128xf32, #tpu.memory_space<vmem>>, vector<1x1x10x128xf32>
    %424 = vector.shape_cast %423 : vector<1x1x10x128xf32> to vector<10x128xf32>
    %425 = vector.shape_cast %422 : vector<10x128xf32> to vector<1x1x10x128xf32>
    tpu.vector_store %arg4[%c0_396, %c13_397, %c0_398, %c0_399], %425 {strides = array<i32>} : memref<1x15x10x128xf32, #tpu.memory_space<vmem>>, vector<1x1x10x128xf32>,
    %c0_400 = arith.constant 0 : index
    %c13_401 = arith.constant 13 : index
    %c0_402 = arith.constant 0 : index
    %c0_403 = arith.constant 0 : index
    %426 = vector.load %arg5[%c0_400, %c13_401, %c0_402, %c0_403] : memref<1x15x10x128xf32, #tpu.memory_space<vmem>>, vector<1x1x10x128xf32>
    %427 = vector.shape_cast %426 : vector<1x1x10x128xf32> to vector<10x128xf32>
    %cst_404 = arith.constant 0.000000e+00 : f32
    %428 = vector.broadcast %cst_404 : f32 to vector<10x128xf32>
    %429 = arith.select %416, %25, %428 : vector<10x128xi1>, vector<10x128xf32>
    %430 = arith.addf %427, %429 : vector<10x128xf32>
    %c0_405 = arith.constant 0 : index
    %c13_406 = arith.constant 13 : index
    %c0_407 = arith.constant 0 : index
    %c0_408 = arith.constant 0 : index
    %431 = vector.load %arg5[%c0_405, %c13_406, %c0_407, %c0_408] : memref<1x15x10x128xf32, #tpu.memory_space<vmem>>, vector<1x1x10x128xf32>
    %432 = vector.shape_cast %431 : vector<1x1x10x128xf32> to vector<10x128xf32>
    %433 = vector.shape_cast %430 : vector<10x128xf32> to vector<1x1x10x128xf32>
    tpu.vector_store %arg5[%c0_405, %c13_406, %c0_407, %c0_408], %433 {strides = array<i32>} : memref<1x15x10x128xf32, #tpu.memory_space<vmem>>, vector<1x1x10x128xf32>,
    %c0_409 = arith.constant 0 : index
    %c13_410 = arith.constant 13 : index
    %c0_411 = arith.constant 0 : index
    %c0_412 = arith.constant 0 : index
    %434 = vector.load %arg6[%c0_409, %c13_410, %c0_411, %c0_412] : memref<1x15x10x128xf32, #tpu.memory_space<vmem>>, vector<1x1x10x128xf32>
    %435 = vector.shape_cast %434 : vector<1x1x10x128xf32> to vector<10x128xf32>
    %cst_413 = arith.constant 0.000000e+00 : f32
    %436 = vector.broadcast %cst_413 : f32 to vector<10x128xf32>
    %437 = arith.select %416, %39, %436 : vector<10x128xi1>, vector<10x128xf32>
    %438 = arith.addf %435, %437 : vector<10x128xf32>
    %c0_414 = arith.constant 0 : index
    %c13_415 = arith.constant 13 : index
    %c0_416 = arith.constant 0 : index
    %c0_417 = arith.constant 0 : index
    %439 = vector.load %arg6[%c0_414, %c13_415, %c0_416, %c0_417] : memref<1x15x10x128xf32, #tpu.memory_space<vmem>>, vector<1x1x10x128xf32>
    %440 = vector.shape_cast %439 : vector<1x1x10x128xf32> to vector<10x128xf32>
    %441 = vector.shape_cast %438 : vector<10x128xf32> to vector<1x1x10x128xf32>
    tpu.vector_store %arg6[%c0_414, %c13_415, %c0_416, %c0_417], %441 {strides = array<i32>} : memref<1x15x10x128xf32, #tpu.memory_space<vmem>>, vector<1x1x10x128xf32>,
    %cst_418 = arith.constant 1.400000e+01 : f32
    %442 = vector.broadcast %cst_418 : f32 to vector<10x128xf32>
    %443 = arith.cmpf oeq, %63, %442 : vector<10x128xf32>
    %c0_419 = arith.constant 0 : index
    %c14 = arith.constant 14 : index
    %c0_420 = arith.constant 0 : index
    %c0_421 = arith.constant 0 : index
    %444 = vector.load %arg4[%c0_419, %c14, %c0_420, %c0_421] : memref<1x15x10x128xf32, #tpu.memory_space<vmem>>, vector<1x1x10x128xf32>
    %445 = vector.shape_cast %444 : vector<1x1x10x128xf32> to vector<10x128xf32>
    %cst_422 = arith.constant 1.000000e+00 : f32
    %cst_423 = arith.constant 0.000000e+00 : f32
    %446 = vector.broadcast %cst_422 : f32 to vector<10x128xf32>
    %447 = vector.broadcast %cst_423 : f32 to vector<10x128xf32>
    %448 = arith.select %443, %446, %447 : vector<10x128xi1>, vector<10x128xf32>
    %449 = arith.addf %445, %448 : vector<10x128xf32>
    %c0_424 = arith.constant 0 : index
    %c14_425 = arith.constant 14 : index
    %c0_426 = arith.constant 0 : index
    %c0_427 = arith.constant 0 : index
    %450 = vector.load %arg4[%c0_424, %c14_425, %c0_426, %c0_427] : memref<1x15x10x128xf32, #tpu.memory_space<vmem>>, vector<1x1x10x128xf32>
    %451 = vector.shape_cast %450 : vector<1x1x10x128xf32> to vector<10x128xf32>
    %452 = vector.shape_cast %449 : vector<10x128xf32> to vector<1x1x10x128xf32>
    tpu.vector_store %arg4[%c0_424, %c14_425, %c0_426, %c0_427], %452 {strides = array<i32>} : memref<1x15x10x128xf32, #tpu.memory_space<vmem>>, vector<1x1x10x128xf32>,
    %c0_428 = arith.constant 0 : index
    %c14_429 = arith.constant 14 : index
    %c0_430 = arith.constant 0 : index
    %c0_431 = arith.constant 0 : index
    %453 = vector.load %arg5[%c0_428, %c14_429, %c0_430, %c0_431] : memref<1x15x10x128xf32, #tpu.memory_space<vmem>>, vector<1x1x10x128xf32>
    %454 = vector.shape_cast %453 : vector<1x1x10x128xf32> to vector<10x128xf32>
    %cst_432 = arith.constant 0.000000e+00 : f32
    %455 = vector.broadcast %cst_432 : f32 to vector<10x128xf32>
    %456 = arith.select %443, %25, %455 : vector<10x128xi1>, vector<10x128xf32>
    %457 = arith.addf %454, %456 : vector<10x128xf32>
    %c0_433 = arith.constant 0 : index
    %c14_434 = arith.constant 14 : index
    %c0_435 = arith.constant 0 : index
    %c0_436 = arith.constant 0 : index
    %458 = vector.load %arg5[%c0_433, %c14_434, %c0_435, %c0_436] : memref<1x15x10x128xf32, #tpu.memory_space<vmem>>, vector<1x1x10x128xf32>
    %459 = vector.shape_cast %458 : vector<1x1x10x128xf32> to vector<10x128xf32>
    %460 = vector.shape_cast %457 : vector<10x128xf32> to vector<1x1x10x128xf32>
    tpu.vector_store %arg5[%c0_433, %c14_434, %c0_435, %c0_436], %460 {strides = array<i32>} : memref<1x15x10x128xf32, #tpu.memory_space<vmem>>, vector<1x1x10x128xf32>,
    %c0_437 = arith.constant 0 : index
    %c14_438 = arith.constant 14 : index
    %c0_439 = arith.constant 0 : index
    %c0_440 = arith.constant 0 : index
    %461 = vector.load %arg6[%c0_437, %c14_438, %c0_439, %c0_440] : memref<1x15x10x128xf32, #tpu.memory_space<vmem>>, vector<1x1x10x128xf32>
    %462 = vector.shape_cast %461 : vector<1x1x10x128xf32> to vector<10x128xf32>
    %cst_441 = arith.constant 0.000000e+00 : f32
    %463 = vector.broadcast %cst_441 : f32 to vector<10x128xf32>
    %464 = arith.select %443, %39, %463 : vector<10x128xi1>, vector<10x128xf32>
    %465 = arith.addf %462, %464 : vector<10x128xf32>
    %c0_442 = arith.constant 0 : index
    %c14_443 = arith.constant 14 : index
    %c0_444 = arith.constant 0 : index
    %c0_445 = arith.constant 0 : index
    %466 = vector.load %arg6[%c0_442, %c14_443, %c0_444, %c0_445] : memref<1x15x10x128xf32, #tpu.memory_space<vmem>>, vector<1x1x10x128xf32>
    %467 = vector.shape_cast %466 : vector<1x1x10x128xf32> to vector<10x128xf32>
    %468 = vector.shape_cast %465 : vector<10x128xf32> to vector<1x1x10x128xf32>
    tpu.vector_store %arg6[%c0_442, %c14_443, %c0_444, %c0_445], %468 {strides = array<i32>} : memref<1x15x10x128xf32, #tpu.memory_space<vmem>>, vector<1x1x10x128xf32>,
    %c0_446 = arith.constant 0 : index
    %c128 = arith.constant 128 : index
    %469 = vector.load %arg2[%c0_446, %c128] : memref<10x256xf32, #tpu.memory_space<vmem>>, vector<10x128xf32>
    %c0_447 = arith.constant 0 : index
    %c128_448 = arith.constant 128 : index
    %470 = vector.load %arg3[%c0_447, %c128_448] : memref<1x256xi32, #tpu.memory_space<vmem>>, vector<1x128xi32>
    %c128_i32 = arith.constant 128 : i32
    %471 = arith.addi %5, %c128_i32 : i32
    %472 = tpu.iota {dimensions = array<i32: 1>} : vector<1x128xi32>
    %473 = vector.broadcast %471 : i32 to vector<1x128xi32>
    %474 = arith.addi %473, %472 : vector<1x128xi32>
    %c256_i32_449 = arith.constant 256 : i32
    %475 = vector.broadcast %c256_i32_449 : i32 to vector<1x128xi32>
    %476 = arith.cmpi slt, %474, %475 : vector<1x128xi32>
    %cst_450 = arith.constant dense<0xFF800000> : vector<128xf32>
    %477 = vector.multi_reduction <maximumf>, %469, %cst_450 [0] : vector<10x128xf32> to vector<128xf32>
    %478 = vector.shape_cast %477 : vector<128xf32> to vector<1x128xf32>
    %479 = vector.broadcast %478 : vector<1x128xf32> to vector<10x128xf32>
    %480 = arith.subf %469, %479 : vector<10x128xf32>
    %481 = math.exp %480 : vector<10x128xf32>
    %cst_451 = arith.constant dense<0.000000e+00> : vector<128xf32>
    %482 = vector.multi_reduction <add>, %481, %cst_451 [0] : vector<10x128xf32> to vector<128xf32>
    %483 = vector.shape_cast %482 : vector<128xf32> to vector<1x128xf32>
    %484 = tpu.reciprocal %483 : vector<1x128xf32> -> vector<1x128xf32>
    %485 = vector.broadcast %484 : vector<1x128xf32> to vector<10x128xf32>
    %486 = arith.mulf %481, %485 : vector<10x128xf32>
    %487 = vector.broadcast %478 : vector<1x128xf32> to vector<10x128xf32>
    %488 = arith.cmpf oeq, %469, %487 : vector<10x128xf32>
    %cst_452 = arith.constant 1.000000e+01 : f32
    %489 = vector.broadcast %cst_452 : f32 to vector<10x128xf32>
    %490 = arith.select %488, %7, %489 : vector<10x128xi1>, vector<10x128xf32>
    %cst_453 = arith.constant dense<0x7F800000> : vector<128xf32>
    %491 = vector.multi_reduction <minimumf>, %490, %cst_453 [0] : vector<10x128xf32> to vector<128xf32>
    %492 = vector.shape_cast %491 : vector<128xf32> to vector<1x128xf32>
    %493 = vector.broadcast %492 : vector<1x128xf32> to vector<10x128xf32>
    %494 = arith.cmpf oeq, %7, %493 : vector<10x128xf32>
    %495 = arith.extui %494 : vector<10x128xi1> to vector<10x128xi32>
    %496 = arith.sitofp %495 : vector<10x128xi32> to vector<10x128xf32>
    %497 = vector.broadcast %470 : vector<1x128xi32> to vector<10x128xi32>
    %498 = arith.cmpi eq, %6, %497 : vector<10x128xi32>
    %499 = arith.extui %498 : vector<10x128xi1> to vector<10x128xi32>
    %500 = arith.sitofp %499 : vector<10x128xi32> to vector<10x128xf32>
    %c0_454 = arith.constant 0 : index
    %c0_455 = arith.constant 0 : index
    %c0_456 = arith.constant 0 : index
    %501 = vector.load %arg7[%c0_454, %c0_455, %c0_456] : memref<1x10x128xf32, #tpu.memory_space<vmem>>, vector<1x10x128xf32>
    %502 = vector.shape_cast %501 : vector<1x10x128xf32> to vector<10x128xf32>
    %503 = arith.addf %502, %500 : vector<10x128xf32>
    %c0_457 = arith.constant 0 : index
    %c0_458 = arith.constant 0 : index
    %c0_459 = arith.constant 0 : index
    %504 = vector.load %arg7[%c0_457, %c0_458, %c0_459] : memref<1x10x128xf32, #tpu.memory_space<vmem>>, vector<1x10x128xf32>
    %505 = vector.shape_cast %504 : vector<1x10x128xf32> to vector<10x128xf32>
    %506 = vector.shape_cast %503 : vector<10x128xf32> to vector<1x10x128xf32>
    tpu.vector_store %arg7[%c0_457, %c0_458, %c0_459], %506 {strides = array<i32>} : memref<1x10x128xf32, #tpu.memory_space<vmem>>, vector<1x10x128xf32>,
    %c0_460 = arith.constant 0 : index
    %c0_461 = arith.constant 0 : index
    %c0_462 = arith.constant 0 : index
    %507 = vector.load %arg8[%c0_460, %c0_461, %c0_462] : memref<1x10x128xf32, #tpu.memory_space<vmem>>, vector<1x10x128xf32>
    %508 = vector.shape_cast %507 : vector<1x10x128xf32> to vector<10x128xf32>
    %509 = arith.mulf %500, %496 : vector<10x128xf32>
    %510 = arith.addf %508, %509 : vector<10x128xf32>
    %c0_463 = arith.constant 0 : index
    %c0_464 = arith.constant 0 : index
    %c0_465 = arith.constant 0 : index
    %511 = vector.load %arg8[%c0_463, %c0_464, %c0_465] : memref<1x10x128xf32, #tpu.memory_space<vmem>>, vector<1x10x128xf32>
    %512 = vector.shape_cast %511 : vector<1x10x128xf32> to vector<10x128xf32>
    %513 = vector.shape_cast %510 : vector<10x128xf32> to vector<1x10x128xf32>
    tpu.vector_store %arg8[%c0_463, %c0_464, %c0_465], %513 {strides = array<i32>} : memref<1x10x128xf32, #tpu.memory_space<vmem>>, vector<1x10x128xf32>,
    %cst_466 = arith.constant 1.500000e+01 : f32
    %514 = vector.broadcast %cst_466 : f32 to vector<10x128xf32>
    %515 = arith.mulf %486, %514 : vector<10x128xf32>
    %516 = math.ceil %515 : vector<10x128xf32>
    %cst_467 = arith.constant 1.000000e+00 : f32
    %517 = vector.broadcast %cst_467 : f32 to vector<10x128xf32>
    %518 = arith.subf %516, %517 : vector<10x128xf32>
    %cst_468 = arith.constant 1.400000e+01 : f32
    %519 = vector.broadcast %cst_468 : f32 to vector<10x128xf32>
    %520 = arith.minimumf %518, %519 : vector<10x128xf32>
    %cst_469 = arith.constant -1.000000e+00 : f32
    %521 = vector.shape_cast %476 : vector<1x128xi1> to vector<1x128xi1>
    %522 = vector.broadcast %521 : vector<1x128xi1> to vector<10x128xi1>
    %523 = vector.broadcast %cst_469 : f32 to vector<10x128xf32>
    %524 = arith.select %522, %520, %523 : vector<10x128xi1>, vector<10x128xf32>
    %cst_470 = arith.constant 0.000000e+00 : f32
    %525 = vector.broadcast %cst_470 : f32 to vector<10x128xf32>
    %526 = arith.cmpf oeq, %524, %525 : vector<10x128xf32>
    %c0_471 = arith.constant 0 : index
    %c0_472 = arith.constant 0 : index
    %c0_473 = arith.constant 0 : index
    %c0_474 = arith.constant 0 : index
    %527 = vector.load %arg4[%c0_471, %c0_472, %c0_473, %c0_474] : memref<1x15x10x128xf32, #tpu.memory_space<vmem>>, vector<1x1x10x128xf32>
    %528 = vector.shape_cast %527 : vector<1x1x10x128xf32> to vector<10x128xf32>
    %cst_475 = arith.constant 1.000000e+00 : f32
    %cst_476 = arith.constant 0.000000e+00 : f32
    %529 = vector.broadcast %cst_475 : f32 to vector<10x128xf32>
    %530 = vector.broadcast %cst_476 : f32 to vector<10x128xf32>
    %531 = arith.select %526, %529, %530 : vector<10x128xi1>, vector<10x128xf32>
    %532 = arith.addf %528, %531 : vector<10x128xf32>
    %c0_477 = arith.constant 0 : index
    %c0_478 = arith.constant 0 : index
    %c0_479 = arith.constant 0 : index
    %c0_480 = arith.constant 0 : index
    %533 = vector.load %arg4[%c0_477, %c0_478, %c0_479, %c0_480] : memref<1x15x10x128xf32, #tpu.memory_space<vmem>>, vector<1x1x10x128xf32>
    %534 = vector.shape_cast %533 : vector<1x1x10x128xf32> to vector<10x128xf32>
    %535 = vector.shape_cast %532 : vector<10x128xf32> to vector<1x1x10x128xf32>
    tpu.vector_store %arg4[%c0_477, %c0_478, %c0_479, %c0_480], %535 {strides = array<i32>} : memref<1x15x10x128xf32, #tpu.memory_space<vmem>>, vector<1x1x10x128xf32>,
    %c0_481 = arith.constant 0 : index
    %c0_482 = arith.constant 0 : index
    %c0_483 = arith.constant 0 : index
    %c0_484 = arith.constant 0 : index
    %536 = vector.load %arg5[%c0_481, %c0_482, %c0_483, %c0_484] : memref<1x15x10x128xf32, #tpu.memory_space<vmem>>, vector<1x1x10x128xf32>
    %537 = vector.shape_cast %536 : vector<1x1x10x128xf32> to vector<10x128xf32>
    %cst_485 = arith.constant 0.000000e+00 : f32
    %538 = vector.broadcast %cst_485 : f32 to vector<10x128xf32>
    %539 = arith.select %526, %486, %538 : vector<10x128xi1>, vector<10x128xf32>
    %540 = arith.addf %537, %539 : vector<10x128xf32>
    %c0_486 = arith.constant 0 : index
    %c0_487 = arith.constant 0 : index
    %c0_488 = arith.constant 0 : index
    %c0_489 = arith.constant 0 : index
    %541 = vector.load %arg5[%c0_486, %c0_487, %c0_488, %c0_489] : memref<1x15x10x128xf32, #tpu.memory_space<vmem>>, vector<1x1x10x128xf32>
    %542 = vector.shape_cast %541 : vector<1x1x10x128xf32> to vector<10x128xf32>
    %543 = vector.shape_cast %540 : vector<10x128xf32> to vector<1x1x10x128xf32>
    tpu.vector_store %arg5[%c0_486, %c0_487, %c0_488, %c0_489], %543 {strides = array<i32>} : memref<1x15x10x128xf32, #tpu.memory_space<vmem>>, vector<1x1x10x128xf32>,
    %c0_490 = arith.constant 0 : index
    %c0_491 = arith.constant 0 : index
    %c0_492 = arith.constant 0 : index
    %c0_493 = arith.constant 0 : index
    %544 = vector.load %arg6[%c0_490, %c0_491, %c0_492, %c0_493] : memref<1x15x10x128xf32, #tpu.memory_space<vmem>>, vector<1x1x10x128xf32>
    %545 = vector.shape_cast %544 : vector<1x1x10x128xf32> to vector<10x128xf32>
    %cst_494 = arith.constant 0.000000e+00 : f32
    %546 = vector.broadcast %cst_494 : f32 to vector<10x128xf32>
    %547 = arith.select %526, %500, %546 : vector<10x128xi1>, vector<10x128xf32>
    %548 = arith.addf %545, %547 : vector<10x128xf32>
    %c0_495 = arith.constant 0 : index
    %c0_496 = arith.constant 0 : index
    %c0_497 = arith.constant 0 : index
    %c0_498 = arith.constant 0 : index
    %549 = vector.load %arg6[%c0_495, %c0_496, %c0_497, %c0_498] : memref<1x15x10x128xf32, #tpu.memory_space<vmem>>, vector<1x1x10x128xf32>
    %550 = vector.shape_cast %549 : vector<1x1x10x128xf32> to vector<10x128xf32>
    %551 = vector.shape_cast %548 : vector<10x128xf32> to vector<1x1x10x128xf32>
    tpu.vector_store %arg6[%c0_495, %c0_496, %c0_497, %c0_498], %551 {strides = array<i32>} : memref<1x15x10x128xf32, #tpu.memory_space<vmem>>, vector<1x1x10x128xf32>,
    %cst_499 = arith.constant 1.000000e+00 : f32
    %552 = vector.broadcast %cst_499 : f32 to vector<10x128xf32>
    %553 = arith.cmpf oeq, %524, %552 : vector<10x128xf32>
    %c0_500 = arith.constant 0 : index
    %c1_501 = arith.constant 1 : index
    %c0_502 = arith.constant 0 : index
    %c0_503 = arith.constant 0 : index
    %554 = vector.load %arg4[%c0_500, %c1_501, %c0_502, %c0_503] : memref<1x15x10x128xf32, #tpu.memory_space<vmem>>, vector<1x1x10x128xf32>
    %555 = vector.shape_cast %554 : vector<1x1x10x128xf32> to vector<10x128xf32>
    %cst_504 = arith.constant 1.000000e+00 : f32
    %cst_505 = arith.constant 0.000000e+00 : f32
    %556 = vector.broadcast %cst_504 : f32 to vector<10x128xf32>
    %557 = vector.broadcast %cst_505 : f32 to vector<10x128xf32>
    %558 = arith.select %553, %556, %557 : vector<10x128xi1>, vector<10x128xf32>
    %559 = arith.addf %555, %558 : vector<10x128xf32>
    %c0_506 = arith.constant 0 : index
    %c1_507 = arith.constant 1 : index
    %c0_508 = arith.constant 0 : index
    %c0_509 = arith.constant 0 : index
    %560 = vector.load %arg4[%c0_506, %c1_507, %c0_508, %c0_509] : memref<1x15x10x128xf32, #tpu.memory_space<vmem>>, vector<1x1x10x128xf32>
    %561 = vector.shape_cast %560 : vector<1x1x10x128xf32> to vector<10x128xf32>
    %562 = vector.shape_cast %559 : vector<10x128xf32> to vector<1x1x10x128xf32>
    tpu.vector_store %arg4[%c0_506, %c1_507, %c0_508, %c0_509], %562 {strides = array<i32>} : memref<1x15x10x128xf32, #tpu.memory_space<vmem>>, vector<1x1x10x128xf32>,
    %c0_510 = arith.constant 0 : index
    %c1_511 = arith.constant 1 : index
    %c0_512 = arith.constant 0 : index
    %c0_513 = arith.constant 0 : index
    %563 = vector.load %arg5[%c0_510, %c1_511, %c0_512, %c0_513] : memref<1x15x10x128xf32, #tpu.memory_space<vmem>>, vector<1x1x10x128xf32>
    %564 = vector.shape_cast %563 : vector<1x1x10x128xf32> to vector<10x128xf32>
    %cst_514 = arith.constant 0.000000e+00 : f32
    %565 = vector.broadcast %cst_514 : f32 to vector<10x128xf32>
    %566 = arith.select %553, %486, %565 : vector<10x128xi1>, vector<10x128xf32>
    %567 = arith.addf %564, %566 : vector<10x128xf32>
    %c0_515 = arith.constant 0 : index
    %c1_516 = arith.constant 1 : index
    %c0_517 = arith.constant 0 : index
    %c0_518 = arith.constant 0 : index
    %568 = vector.load %arg5[%c0_515, %c1_516, %c0_517, %c0_518] : memref<1x15x10x128xf32, #tpu.memory_space<vmem>>, vector<1x1x10x128xf32>
    %569 = vector.shape_cast %568 : vector<1x1x10x128xf32> to vector<10x128xf32>
    %570 = vector.shape_cast %567 : vector<10x128xf32> to vector<1x1x10x128xf32>
    tpu.vector_store %arg5[%c0_515, %c1_516, %c0_517, %c0_518], %570 {strides = array<i32>} : memref<1x15x10x128xf32, #tpu.memory_space<vmem>>, vector<1x1x10x128xf32>,
    %c0_519 = arith.constant 0 : index
    %c1_520 = arith.constant 1 : index
    %c0_521 = arith.constant 0 : index
    %c0_522 = arith.constant 0 : index
    %571 = vector.load %arg6[%c0_519, %c1_520, %c0_521, %c0_522] : memref<1x15x10x128xf32, #tpu.memory_space<vmem>>, vector<1x1x10x128xf32>
    %572 = vector.shape_cast %571 : vector<1x1x10x128xf32> to vector<10x128xf32>
    %cst_523 = arith.constant 0.000000e+00 : f32
    %573 = vector.broadcast %cst_523 : f32 to vector<10x128xf32>
    %574 = arith.select %553, %500, %573 : vector<10x128xi1>, vector<10x128xf32>
    %575 = arith.addf %572, %574 : vector<10x128xf32>
    %c0_524 = arith.constant 0 : index
    %c1_525 = arith.constant 1 : index
    %c0_526 = arith.constant 0 : index
    %c0_527 = arith.constant 0 : index
    %576 = vector.load %arg6[%c0_524, %c1_525, %c0_526, %c0_527] : memref<1x15x10x128xf32, #tpu.memory_space<vmem>>, vector<1x1x10x128xf32>
    %577 = vector.shape_cast %576 : vector<1x1x10x128xf32> to vector<10x128xf32>
    %578 = vector.shape_cast %575 : vector<10x128xf32> to vector<1x1x10x128xf32>
    tpu.vector_store %arg6[%c0_524, %c1_525, %c0_526, %c0_527], %578 {strides = array<i32>} : memref<1x15x10x128xf32, #tpu.memory_space<vmem>>, vector<1x1x10x128xf32>,
    %cst_528 = arith.constant 2.000000e+00 : f32
    %579 = vector.broadcast %cst_528 : f32 to vector<10x128xf32>
    %580 = arith.cmpf oeq, %524, %579 : vector<10x128xf32>
    %c0_529 = arith.constant 0 : index
    %c2_530 = arith.constant 2 : index
    %c0_531 = arith.constant 0 : index
    %c0_532 = arith.constant 0 : index
    %581 = vector.load %arg4[%c0_529, %c2_530, %c0_531, %c0_532] : memref<1x15x10x128xf32, #tpu.memory_space<vmem>>, vector<1x1x10x128xf32>
    %582 = vector.shape_cast %581 : vector<1x1x10x128xf32> to vector<10x128xf32>
    %cst_533 = arith.constant 1.000000e+00 : f32
    %cst_534 = arith.constant 0.000000e+00 : f32
    %583 = vector.broadcast %cst_533 : f32 to vector<10x128xf32>
    %584 = vector.broadcast %cst_534 : f32 to vector<10x128xf32>
    %585 = arith.select %580, %583, %584 : vector<10x128xi1>, vector<10x128xf32>
    %586 = arith.addf %582, %585 : vector<10x128xf32>
    %c0_535 = arith.constant 0 : index
    %c2_536 = arith.constant 2 : index
    %c0_537 = arith.constant 0 : index
    %c0_538 = arith.constant 0 : index
    %587 = vector.load %arg4[%c0_535, %c2_536, %c0_537, %c0_538] : memref<1x15x10x128xf32, #tpu.memory_space<vmem>>, vector<1x1x10x128xf32>
    %588 = vector.shape_cast %587 : vector<1x1x10x128xf32> to vector<10x128xf32>
    %589 = vector.shape_cast %586 : vector<10x128xf32> to vector<1x1x10x128xf32>
    tpu.vector_store %arg4[%c0_535, %c2_536, %c0_537, %c0_538], %589 {strides = array<i32>} : memref<1x15x10x128xf32, #tpu.memory_space<vmem>>, vector<1x1x10x128xf32>,
    %c0_539 = arith.constant 0 : index
    %c2_540 = arith.constant 2 : index
    %c0_541 = arith.constant 0 : index
    %c0_542 = arith.constant 0 : index
    %590 = vector.load %arg5[%c0_539, %c2_540, %c0_541, %c0_542] : memref<1x15x10x128xf32, #tpu.memory_space<vmem>>, vector<1x1x10x128xf32>
    %591 = vector.shape_cast %590 : vector<1x1x10x128xf32> to vector<10x128xf32>
    %cst_543 = arith.constant 0.000000e+00 : f32
    %592 = vector.broadcast %cst_543 : f32 to vector<10x128xf32>
    %593 = arith.select %580, %486, %592 : vector<10x128xi1>, vector<10x128xf32>
    %594 = arith.addf %591, %593 : vector<10x128xf32>
    %c0_544 = arith.constant 0 : index
    %c2_545 = arith.constant 2 : index
    %c0_546 = arith.constant 0 : index
    %c0_547 = arith.constant 0 : index
    %595 = vector.load %arg5[%c0_544, %c2_545, %c0_546, %c0_547] : memref<1x15x10x128xf32, #tpu.memory_space<vmem>>, vector<1x1x10x128xf32>
    %596 = vector.shape_cast %595 : vector<1x1x10x128xf32> to vector<10x128xf32>
    %597 = vector.shape_cast %594 : vector<10x128xf32> to vector<1x1x10x128xf32>
    tpu.vector_store %arg5[%c0_544, %c2_545, %c0_546, %c0_547], %597 {strides = array<i32>} : memref<1x15x10x128xf32, #tpu.memory_space<vmem>>, vector<1x1x10x128xf32>,
    %c0_548 = arith.constant 0 : index
    %c2_549 = arith.constant 2 : index
    %c0_550 = arith.constant 0 : index
    %c0_551 = arith.constant 0 : index
    %598 = vector.load %arg6[%c0_548, %c2_549, %c0_550, %c0_551] : memref<1x15x10x128xf32, #tpu.memory_space<vmem>>, vector<1x1x10x128xf32>
    %599 = vector.shape_cast %598 : vector<1x1x10x128xf32> to vector<10x128xf32>
    %cst_552 = arith.constant 0.000000e+00 : f32
    %600 = vector.broadcast %cst_552 : f32 to vector<10x128xf32>
    %601 = arith.select %580, %500, %600 : vector<10x128xi1>, vector<10x128xf32>
    %602 = arith.addf %599, %601 : vector<10x128xf32>
    %c0_553 = arith.constant 0 : index
    %c2_554 = arith.constant 2 : index
    %c0_555 = arith.constant 0 : index
    %c0_556 = arith.constant 0 : index
    %603 = vector.load %arg6[%c0_553, %c2_554, %c0_555, %c0_556] : memref<1x15x10x128xf32, #tpu.memory_space<vmem>>, vector<1x1x10x128xf32>
    %604 = vector.shape_cast %603 : vector<1x1x10x128xf32> to vector<10x128xf32>
    %605 = vector.shape_cast %602 : vector<10x128xf32> to vector<1x1x10x128xf32>
    tpu.vector_store %arg6[%c0_553, %c2_554, %c0_555, %c0_556], %605 {strides = array<i32>} : memref<1x15x10x128xf32, #tpu.memory_space<vmem>>, vector<1x1x10x128xf32>,
    %cst_557 = arith.constant 3.000000e+00 : f32
    %606 = vector.broadcast %cst_557 : f32 to vector<10x128xf32>
    %607 = arith.cmpf oeq, %524, %606 : vector<10x128xf32>
    %c0_558 = arith.constant 0 : index
    %c3_559 = arith.constant 3 : index
    %c0_560 = arith.constant 0 : index
    %c0_561 = arith.constant 0 : index
    %608 = vector.load %arg4[%c0_558, %c3_559, %c0_560, %c0_561] : memref<1x15x10x128xf32, #tpu.memory_space<vmem>>, vector<1x1x10x128xf32>
    %609 = vector.shape_cast %608 : vector<1x1x10x128xf32> to vector<10x128xf32>
    %cst_562 = arith.constant 1.000000e+00 : f32
    %cst_563 = arith.constant 0.000000e+00 : f32
    %610 = vector.broadcast %cst_562 : f32 to vector<10x128xf32>
    %611 = vector.broadcast %cst_563 : f32 to vector<10x128xf32>
    %612 = arith.select %607, %610, %611 : vector<10x128xi1>, vector<10x128xf32>
    %613 = arith.addf %609, %612 : vector<10x128xf32>
    %c0_564 = arith.constant 0 : index
    %c3_565 = arith.constant 3 : index
    %c0_566 = arith.constant 0 : index
    %c0_567 = arith.constant 0 : index
    %614 = vector.load %arg4[%c0_564, %c3_565, %c0_566, %c0_567] : memref<1x15x10x128xf32, #tpu.memory_space<vmem>>, vector<1x1x10x128xf32>
    %615 = vector.shape_cast %614 : vector<1x1x10x128xf32> to vector<10x128xf32>
    %616 = vector.shape_cast %613 : vector<10x128xf32> to vector<1x1x10x128xf32>
    tpu.vector_store %arg4[%c0_564, %c3_565, %c0_566, %c0_567], %616 {strides = array<i32>} : memref<1x15x10x128xf32, #tpu.memory_space<vmem>>, vector<1x1x10x128xf32>,
    %c0_568 = arith.constant 0 : index
    %c3_569 = arith.constant 3 : index
    %c0_570 = arith.constant 0 : index
    %c0_571 = arith.constant 0 : index
    %617 = vector.load %arg5[%c0_568, %c3_569, %c0_570, %c0_571] : memref<1x15x10x128xf32, #tpu.memory_space<vmem>>, vector<1x1x10x128xf32>
    %618 = vector.shape_cast %617 : vector<1x1x10x128xf32> to vector<10x128xf32>
    %cst_572 = arith.constant 0.000000e+00 : f32
    %619 = vector.broadcast %cst_572 : f32 to vector<10x128xf32>
    %620 = arith.select %607, %486, %619 : vector<10x128xi1>, vector<10x128xf32>
    %621 = arith.addf %618, %620 : vector<10x128xf32>
    %c0_573 = arith.constant 0 : index
    %c3_574 = arith.constant 3 : index
    %c0_575 = arith.constant 0 : index
    %c0_576 = arith.constant 0 : index
    %622 = vector.load %arg5[%c0_573, %c3_574, %c0_575, %c0_576] : memref<1x15x10x128xf32, #tpu.memory_space<vmem>>, vector<1x1x10x128xf32>
    %623 = vector.shape_cast %622 : vector<1x1x10x128xf32> to vector<10x128xf32>
    %624 = vector.shape_cast %621 : vector<10x128xf32> to vector<1x1x10x128xf32>
    tpu.vector_store %arg5[%c0_573, %c3_574, %c0_575, %c0_576], %624 {strides = array<i32>} : memref<1x15x10x128xf32, #tpu.memory_space<vmem>>, vector<1x1x10x128xf32>,
    %c0_577 = arith.constant 0 : index
    %c3_578 = arith.constant 3 : index
    %c0_579 = arith.constant 0 : index
    %c0_580 = arith.constant 0 : index
    %625 = vector.load %arg6[%c0_577, %c3_578, %c0_579, %c0_580] : memref<1x15x10x128xf32, #tpu.memory_space<vmem>>, vector<1x1x10x128xf32>
    %626 = vector.shape_cast %625 : vector<1x1x10x128xf32> to vector<10x128xf32>
    %cst_581 = arith.constant 0.000000e+00 : f32
    %627 = vector.broadcast %cst_581 : f32 to vector<10x128xf32>
    %628 = arith.select %607, %500, %627 : vector<10x128xi1>, vector<10x128xf32>
    %629 = arith.addf %626, %628 : vector<10x128xf32>
    %c0_582 = arith.constant 0 : index
    %c3_583 = arith.constant 3 : index
    %c0_584 = arith.constant 0 : index
    %c0_585 = arith.constant 0 : index
    %630 = vector.load %arg6[%c0_582, %c3_583, %c0_584, %c0_585] : memref<1x15x10x128xf32, #tpu.memory_space<vmem>>, vector<1x1x10x128xf32>
    %631 = vector.shape_cast %630 : vector<1x1x10x128xf32> to vector<10x128xf32>
    %632 = vector.shape_cast %629 : vector<10x128xf32> to vector<1x1x10x128xf32>
    tpu.vector_store %arg6[%c0_582, %c3_583, %c0_584, %c0_585], %632 {strides = array<i32>} : memref<1x15x10x128xf32, #tpu.memory_space<vmem>>, vector<1x1x10x128xf32>,
    %cst_586 = arith.constant 4.000000e+00 : f32
    %633 = vector.broadcast %cst_586 : f32 to vector<10x128xf32>
    %634 = arith.cmpf oeq, %524, %633 : vector<10x128xf32>
    %c0_587 = arith.constant 0 : index
    %c4_588 = arith.constant 4 : index
    %c0_589 = arith.constant 0 : index
    %c0_590 = arith.constant 0 : index
    %635 = vector.load %arg4[%c0_587, %c4_588, %c0_589, %c0_590] : memref<1x15x10x128xf32, #tpu.memory_space<vmem>>, vector<1x1x10x128xf32>
    %636 = vector.shape_cast %635 : vector<1x1x10x128xf32> to vector<10x128xf32>
    %cst_591 = arith.constant 1.000000e+00 : f32
    %cst_592 = arith.constant 0.000000e+00 : f32
    %637 = vector.broadcast %cst_591 : f32 to vector<10x128xf32>
    %638 = vector.broadcast %cst_592 : f32 to vector<10x128xf32>
    %639 = arith.select %634, %637, %638 : vector<10x128xi1>, vector<10x128xf32>
    %640 = arith.addf %636, %639 : vector<10x128xf32>
    %c0_593 = arith.constant 0 : index
    %c4_594 = arith.constant 4 : index
    %c0_595 = arith.constant 0 : index
    %c0_596 = arith.constant 0 : index
    %641 = vector.load %arg4[%c0_593, %c4_594, %c0_595, %c0_596] : memref<1x15x10x128xf32, #tpu.memory_space<vmem>>, vector<1x1x10x128xf32>
    %642 = vector.shape_cast %641 : vector<1x1x10x128xf32> to vector<10x128xf32>
    %643 = vector.shape_cast %640 : vector<10x128xf32> to vector<1x1x10x128xf32>
    tpu.vector_store %arg4[%c0_593, %c4_594, %c0_595, %c0_596], %643 {strides = array<i32>} : memref<1x15x10x128xf32, #tpu.memory_space<vmem>>, vector<1x1x10x128xf32>,
    %c0_597 = arith.constant 0 : index
    %c4_598 = arith.constant 4 : index
    %c0_599 = arith.constant 0 : index
    %c0_600 = arith.constant 0 : index
    %644 = vector.load %arg5[%c0_597, %c4_598, %c0_599, %c0_600] : memref<1x15x10x128xf32, #tpu.memory_space<vmem>>, vector<1x1x10x128xf32>
    %645 = vector.shape_cast %644 : vector<1x1x10x128xf32> to vector<10x128xf32>
    %cst_601 = arith.constant 0.000000e+00 : f32
    %646 = vector.broadcast %cst_601 : f32 to vector<10x128xf32>
    %647 = arith.select %634, %486, %646 : vector<10x128xi1>, vector<10x128xf32>
    %648 = arith.addf %645, %647 : vector<10x128xf32>
    %c0_602 = arith.constant 0 : index
    %c4_603 = arith.constant 4 : index
    %c0_604 = arith.constant 0 : index
    %c0_605 = arith.constant 0 : index
    %649 = vector.load %arg5[%c0_602, %c4_603, %c0_604, %c0_605] : memref<1x15x10x128xf32, #tpu.memory_space<vmem>>, vector<1x1x10x128xf32>
    %650 = vector.shape_cast %649 : vector<1x1x10x128xf32> to vector<10x128xf32>
    %651 = vector.shape_cast %648 : vector<10x128xf32> to vector<1x1x10x128xf32>
    tpu.vector_store %arg5[%c0_602, %c4_603, %c0_604, %c0_605], %651 {strides = array<i32>} : memref<1x15x10x128xf32, #tpu.memory_space<vmem>>, vector<1x1x10x128xf32>,
    %c0_606 = arith.constant 0 : index
    %c4_607 = arith.constant 4 : index
    %c0_608 = arith.constant 0 : index
    %c0_609 = arith.constant 0 : index
    %652 = vector.load %arg6[%c0_606, %c4_607, %c0_608, %c0_609] : memref<1x15x10x128xf32, #tpu.memory_space<vmem>>, vector<1x1x10x128xf32>
    %653 = vector.shape_cast %652 : vector<1x1x10x128xf32> to vector<10x128xf32>
    %cst_610 = arith.constant 0.000000e+00 : f32
    %654 = vector.broadcast %cst_610 : f32 to vector<10x128xf32>
    %655 = arith.select %634, %500, %654 : vector<10x128xi1>, vector<10x128xf32>
    %656 = arith.addf %653, %655 : vector<10x128xf32>
    %c0_611 = arith.constant 0 : index
    %c4_612 = arith.constant 4 : index
    %c0_613 = arith.constant 0 : index
    %c0_614 = arith.constant 0 : index
    %657 = vector.load %arg6[%c0_611, %c4_612, %c0_613, %c0_614] : memref<1x15x10x128xf32, #tpu.memory_space<vmem>>, vector<1x1x10x128xf32>
    %658 = vector.shape_cast %657 : vector<1x1x10x128xf32> to vector<10x128xf32>
    %659 = vector.shape_cast %656 : vector<10x128xf32> to vector<1x1x10x128xf32>
    tpu.vector_store %arg6[%c0_611, %c4_612, %c0_613, %c0_614], %659 {strides = array<i32>} : memref<1x15x10x128xf32, #tpu.memory_space<vmem>>, vector<1x1x10x128xf32>,
    %cst_615 = arith.constant 5.000000e+00 : f32
    %660 = vector.broadcast %cst_615 : f32 to vector<10x128xf32>
    %661 = arith.cmpf oeq, %524, %660 : vector<10x128xf32>
    %c0_616 = arith.constant 0 : index
    %c5_617 = arith.constant 5 : index
    %c0_618 = arith.constant 0 : index
    %c0_619 = arith.constant 0 : index
    %662 = vector.load %arg4[%c0_616, %c5_617, %c0_618, %c0_619] : memref<1x15x10x128xf32, #tpu.memory_space<vmem>>, vector<1x1x10x128xf32>
    %663 = vector.shape_cast %662 : vector<1x1x10x128xf32> to vector<10x128xf32>
    %cst_620 = arith.constant 1.000000e+00 : f32
    %cst_621 = arith.constant 0.000000e+00 : f32
    %664 = vector.broadcast %cst_620 : f32 to vector<10x128xf32>
    %665 = vector.broadcast %cst_621 : f32 to vector<10x128xf32>
    %666 = arith.select %661, %664, %665 : vector<10x128xi1>, vector<10x128xf32>
    %667 = arith.addf %663, %666 : vector<10x128xf32>
    %c0_622 = arith.constant 0 : index
    %c5_623 = arith.constant 5 : index
    %c0_624 = arith.constant 0 : index
    %c0_625 = arith.constant 0 : index
    %668 = vector.load %arg4[%c0_622, %c5_623, %c0_624, %c0_625] : memref<1x15x10x128xf32, #tpu.memory_space<vmem>>, vector<1x1x10x128xf32>
    %669 = vector.shape_cast %668 : vector<1x1x10x128xf32> to vector<10x128xf32>
    %670 = vector.shape_cast %667 : vector<10x128xf32> to vector<1x1x10x128xf32>
    tpu.vector_store %arg4[%c0_622, %c5_623, %c0_624, %c0_625], %670 {strides = array<i32>} : memref<1x15x10x128xf32, #tpu.memory_space<vmem>>, vector<1x1x10x128xf32>,
    %c0_626 = arith.constant 0 : index
    %c5_627 = arith.constant 5 : index
    %c0_628 = arith.constant 0 : index
    %c0_629 = arith.constant 0 : index
    %671 = vector.load %arg5[%c0_626, %c5_627, %c0_628, %c0_629] : memref<1x15x10x128xf32, #tpu.memory_space<vmem>>, vector<1x1x10x128xf32>
    %672 = vector.shape_cast %671 : vector<1x1x10x128xf32> to vector<10x128xf32>
    %cst_630 = arith.constant 0.000000e+00 : f32
    %673 = vector.broadcast %cst_630 : f32 to vector<10x128xf32>
    %674 = arith.select %661, %486, %673 : vector<10x128xi1>, vector<10x128xf32>
    %675 = arith.addf %672, %674 : vector<10x128xf32>
    %c0_631 = arith.constant 0 : index
    %c5_632 = arith.constant 5 : index
    %c0_633 = arith.constant 0 : index
    %c0_634 = arith.constant 0 : index
    %676 = vector.load %arg5[%c0_631, %c5_632, %c0_633, %c0_634] : memref<1x15x10x128xf32, #tpu.memory_space<vmem>>, vector<1x1x10x128xf32>
    %677 = vector.shape_cast %676 : vector<1x1x10x128xf32> to vector<10x128xf32>
    %678 = vector.shape_cast %675 : vector<10x128xf32> to vector<1x1x10x128xf32>
    tpu.vector_store %arg5[%c0_631, %c5_632, %c0_633, %c0_634], %678 {strides = array<i32>} : memref<1x15x10x128xf32, #tpu.memory_space<vmem>>, vector<1x1x10x128xf32>,
    %c0_635 = arith.constant 0 : index
    %c5_636 = arith.constant 5 : index
    %c0_637 = arith.constant 0 : index
    %c0_638 = arith.constant 0 : index
    %679 = vector.load %arg6[%c0_635, %c5_636, %c0_637, %c0_638] : memref<1x15x10x128xf32, #tpu.memory_space<vmem>>, vector<1x1x10x128xf32>
    %680 = vector.shape_cast %679 : vector<1x1x10x128xf32> to vector<10x128xf32>
    %cst_639 = arith.constant 0.000000e+00 : f32
    %681 = vector.broadcast %cst_639 : f32 to vector<10x128xf32>
    %682 = arith.select %661, %500, %681 : vector<10x128xi1>, vector<10x128xf32>
    %683 = arith.addf %680, %682 : vector<10x128xf32>
    %c0_640 = arith.constant 0 : index
    %c5_641 = arith.constant 5 : index
    %c0_642 = arith.constant 0 : index
    %c0_643 = arith.constant 0 : index
    %684 = vector.load %arg6[%c0_640, %c5_641, %c0_642, %c0_643] : memref<1x15x10x128xf32, #tpu.memory_space<vmem>>, vector<1x1x10x128xf32>
    %685 = vector.shape_cast %684 : vector<1x1x10x128xf32> to vector<10x128xf32>
    %686 = vector.shape_cast %683 : vector<10x128xf32> to vector<1x1x10x128xf32>
    tpu.vector_store %arg6[%c0_640, %c5_641, %c0_642, %c0_643], %686 {strides = array<i32>} : memref<1x15x10x128xf32, #tpu.memory_space<vmem>>, vector<1x1x10x128xf32>,
    %cst_644 = arith.constant 6.000000e+00 : f32
    %687 = vector.broadcast %cst_644 : f32 to vector<10x128xf32>
    %688 = arith.cmpf oeq, %524, %687 : vector<10x128xf32>
    %c0_645 = arith.constant 0 : index
    %c6_646 = arith.constant 6 : index
    %c0_647 = arith.constant 0 : index
    %c0_648 = arith.constant 0 : index
    %689 = vector.load %arg4[%c0_645, %c6_646, %c0_647, %c0_648] : memref<1x15x10x128xf32, #tpu.memory_space<vmem>>, vector<1x1x10x128xf32>
    %690 = vector.shape_cast %689 : vector<1x1x10x128xf32> to vector<10x128xf32>
    %cst_649 = arith.constant 1.000000e+00 : f32
    %cst_650 = arith.constant 0.000000e+00 : f32
    %691 = vector.broadcast %cst_649 : f32 to vector<10x128xf32>
    %692 = vector.broadcast %cst_650 : f32 to vector<10x128xf32>
    %693 = arith.select %688, %691, %692 : vector<10x128xi1>, vector<10x128xf32>
    %694 = arith.addf %690, %693 : vector<10x128xf32>
    %c0_651 = arith.constant 0 : index
    %c6_652 = arith.constant 6 : index
    %c0_653 = arith.constant 0 : index
    %c0_654 = arith.constant 0 : index
    %695 = vector.load %arg4[%c0_651, %c6_652, %c0_653, %c0_654] : memref<1x15x10x128xf32, #tpu.memory_space<vmem>>, vector<1x1x10x128xf32>
    %696 = vector.shape_cast %695 : vector<1x1x10x128xf32> to vector<10x128xf32>
    %697 = vector.shape_cast %694 : vector<10x128xf32> to vector<1x1x10x128xf32>
    tpu.vector_store %arg4[%c0_651, %c6_652, %c0_653, %c0_654], %697 {strides = array<i32>} : memref<1x15x10x128xf32, #tpu.memory_space<vmem>>, vector<1x1x10x128xf32>,
    %c0_655 = arith.constant 0 : index
    %c6_656 = arith.constant 6 : index
    %c0_657 = arith.constant 0 : index
    %c0_658 = arith.constant 0 : index
    %698 = vector.load %arg5[%c0_655, %c6_656, %c0_657, %c0_658] : memref<1x15x10x128xf32, #tpu.memory_space<vmem>>, vector<1x1x10x128xf32>
    %699 = vector.shape_cast %698 : vector<1x1x10x128xf32> to vector<10x128xf32>
    %cst_659 = arith.constant 0.000000e+00 : f32
    %700 = vector.broadcast %cst_659 : f32 to vector<10x128xf32>
    %701 = arith.select %688, %486, %700 : vector<10x128xi1>, vector<10x128xf32>
    %702 = arith.addf %699, %701 : vector<10x128xf32>
    %c0_660 = arith.constant 0 : index
    %c6_661 = arith.constant 6 : index
    %c0_662 = arith.constant 0 : index
    %c0_663 = arith.constant 0 : index
    %703 = vector.load %arg5[%c0_660, %c6_661, %c0_662, %c0_663] : memref<1x15x10x128xf32, #tpu.memory_space<vmem>>, vector<1x1x10x128xf32>
    %704 = vector.shape_cast %703 : vector<1x1x10x128xf32> to vector<10x128xf32>
    %705 = vector.shape_cast %702 : vector<10x128xf32> to vector<1x1x10x128xf32>
    tpu.vector_store %arg5[%c0_660, %c6_661, %c0_662, %c0_663], %705 {strides = array<i32>} : memref<1x15x10x128xf32, #tpu.memory_space<vmem>>, vector<1x1x10x128xf32>,
    %c0_664 = arith.constant 0 : index
    %c6_665 = arith.constant 6 : index
    %c0_666 = arith.constant 0 : index
    %c0_667 = arith.constant 0 : index
    %706 = vector.load %arg6[%c0_664, %c6_665, %c0_666, %c0_667] : memref<1x15x10x128xf32, #tpu.memory_space<vmem>>, vector<1x1x10x128xf32>
    %707 = vector.shape_cast %706 : vector<1x1x10x128xf32> to vector<10x128xf32>
    %cst_668 = arith.constant 0.000000e+00 : f32
    %708 = vector.broadcast %cst_668 : f32 to vector<10x128xf32>
    %709 = arith.select %688, %500, %708 : vector<10x128xi1>, vector<10x128xf32>
    %710 = arith.addf %707, %709 : vector<10x128xf32>
    %c0_669 = arith.constant 0 : index
    %c6_670 = arith.constant 6 : index
    %c0_671 = arith.constant 0 : index
    %c0_672 = arith.constant 0 : index
    %711 = vector.load %arg6[%c0_669, %c6_670, %c0_671, %c0_672] : memref<1x15x10x128xf32, #tpu.memory_space<vmem>>, vector<1x1x10x128xf32>
    %712 = vector.shape_cast %711 : vector<1x1x10x128xf32> to vector<10x128xf32>
    %713 = vector.shape_cast %710 : vector<10x128xf32> to vector<1x1x10x128xf32>
    tpu.vector_store %arg6[%c0_669, %c6_670, %c0_671, %c0_672], %713 {strides = array<i32>} : memref<1x15x10x128xf32, #tpu.memory_space<vmem>>, vector<1x1x10x128xf32>,
    %cst_673 = arith.constant 7.000000e+00 : f32
    %714 = vector.broadcast %cst_673 : f32 to vector<10x128xf32>
    %715 = arith.cmpf oeq, %524, %714 : vector<10x128xf32>
    %c0_674 = arith.constant 0 : index
    %c7_675 = arith.constant 7 : index
    %c0_676 = arith.constant 0 : index
    %c0_677 = arith.constant 0 : index
    %716 = vector.load %arg4[%c0_674, %c7_675, %c0_676, %c0_677] : memref<1x15x10x128xf32, #tpu.memory_space<vmem>>, vector<1x1x10x128xf32>
    %717 = vector.shape_cast %716 : vector<1x1x10x128xf32> to vector<10x128xf32>
    %cst_678 = arith.constant 1.000000e+00 : f32
    %cst_679 = arith.constant 0.000000e+00 : f32
    %718 = vector.broadcast %cst_678 : f32 to vector<10x128xf32>
    %719 = vector.broadcast %cst_679 : f32 to vector<10x128xf32>
    %720 = arith.select %715, %718, %719 : vector<10x128xi1>, vector<10x128xf32>
    %721 = arith.addf %717, %720 : vector<10x128xf32>
    %c0_680 = arith.constant 0 : index
    %c7_681 = arith.constant 7 : index
    %c0_682 = arith.constant 0 : index
    %c0_683 = arith.constant 0 : index
    %722 = vector.load %arg4[%c0_680, %c7_681, %c0_682, %c0_683] : memref<1x15x10x128xf32, #tpu.memory_space<vmem>>, vector<1x1x10x128xf32>
    %723 = vector.shape_cast %722 : vector<1x1x10x128xf32> to vector<10x128xf32>
    %724 = vector.shape_cast %721 : vector<10x128xf32> to vector<1x1x10x128xf32>
    tpu.vector_store %arg4[%c0_680, %c7_681, %c0_682, %c0_683], %724 {strides = array<i32>} : memref<1x15x10x128xf32, #tpu.memory_space<vmem>>, vector<1x1x10x128xf32>,
    %c0_684 = arith.constant 0 : index
    %c7_685 = arith.constant 7 : index
    %c0_686 = arith.constant 0 : index
    %c0_687 = arith.constant 0 : index
    %725 = vector.load %arg5[%c0_684, %c7_685, %c0_686, %c0_687] : memref<1x15x10x128xf32, #tpu.memory_space<vmem>>, vector<1x1x10x128xf32>
    %726 = vector.shape_cast %725 : vector<1x1x10x128xf32> to vector<10x128xf32>
    %cst_688 = arith.constant 0.000000e+00 : f32
    %727 = vector.broadcast %cst_688 : f32 to vector<10x128xf32>
    %728 = arith.select %715, %486, %727 : vector<10x128xi1>, vector<10x128xf32>
    %729 = arith.addf %726, %728 : vector<10x128xf32>
    %c0_689 = arith.constant 0 : index
    %c7_690 = arith.constant 7 : index
    %c0_691 = arith.constant 0 : index
    %c0_692 = arith.constant 0 : index
    %730 = vector.load %arg5[%c0_689, %c7_690, %c0_691, %c0_692] : memref<1x15x10x128xf32, #tpu.memory_space<vmem>>, vector<1x1x10x128xf32>
    %731 = vector.shape_cast %730 : vector<1x1x10x128xf32> to vector<10x128xf32>
    %732 = vector.shape_cast %729 : vector<10x128xf32> to vector<1x1x10x128xf32>
    tpu.vector_store %arg5[%c0_689, %c7_690, %c0_691, %c0_692], %732 {strides = array<i32>} : memref<1x15x10x128xf32, #tpu.memory_space<vmem>>, vector<1x1x10x128xf32>,
    %c0_693 = arith.constant 0 : index
    %c7_694 = arith.constant 7 : index
    %c0_695 = arith.constant 0 : index
    %c0_696 = arith.constant 0 : index
    %733 = vector.load %arg6[%c0_693, %c7_694, %c0_695, %c0_696] : memref<1x15x10x128xf32, #tpu.memory_space<vmem>>, vector<1x1x10x128xf32>
    %734 = vector.shape_cast %733 : vector<1x1x10x128xf32> to vector<10x128xf32>
    %cst_697 = arith.constant 0.000000e+00 : f32
    %735 = vector.broadcast %cst_697 : f32 to vector<10x128xf32>
    %736 = arith.select %715, %500, %735 : vector<10x128xi1>, vector<10x128xf32>
    %737 = arith.addf %734, %736 : vector<10x128xf32>
    %c0_698 = arith.constant 0 : index
    %c7_699 = arith.constant 7 : index
    %c0_700 = arith.constant 0 : index
    %c0_701 = arith.constant 0 : index
    %738 = vector.load %arg6[%c0_698, %c7_699, %c0_700, %c0_701] : memref<1x15x10x128xf32, #tpu.memory_space<vmem>>, vector<1x1x10x128xf32>
    %739 = vector.shape_cast %738 : vector<1x1x10x128xf32> to vector<10x128xf32>
    %740 = vector.shape_cast %737 : vector<10x128xf32> to vector<1x1x10x128xf32>
    tpu.vector_store %arg6[%c0_698, %c7_699, %c0_700, %c0_701], %740 {strides = array<i32>} : memref<1x15x10x128xf32, #tpu.memory_space<vmem>>, vector<1x1x10x128xf32>,
    %cst_702 = arith.constant 8.000000e+00 : f32
    %741 = vector.broadcast %cst_702 : f32 to vector<10x128xf32>
    %742 = arith.cmpf oeq, %524, %741 : vector<10x128xf32>
    %c0_703 = arith.constant 0 : index
    %c8_704 = arith.constant 8 : index
    %c0_705 = arith.constant 0 : index
    %c0_706 = arith.constant 0 : index
    %743 = vector.load %arg4[%c0_703, %c8_704, %c0_705, %c0_706] : memref<1x15x10x128xf32, #tpu.memory_space<vmem>>, vector<1x1x10x128xf32>
    %744 = vector.shape_cast %743 : vector<1x1x10x128xf32> to vector<10x128xf32>
    %cst_707 = arith.constant 1.000000e+00 : f32
    %cst_708 = arith.constant 0.000000e+00 : f32
    %745 = vector.broadcast %cst_707 : f32 to vector<10x128xf32>
    %746 = vector.broadcast %cst_708 : f32 to vector<10x128xf32>
    %747 = arith.select %742, %745, %746 : vector<10x128xi1>, vector<10x128xf32>
    %748 = arith.addf %744, %747 : vector<10x128xf32>
    %c0_709 = arith.constant 0 : index
    %c8_710 = arith.constant 8 : index
    %c0_711 = arith.constant 0 : index
    %c0_712 = arith.constant 0 : index
    %749 = vector.load %arg4[%c0_709, %c8_710, %c0_711, %c0_712] : memref<1x15x10x128xf32, #tpu.memory_space<vmem>>, vector<1x1x10x128xf32>
    %750 = vector.shape_cast %749 : vector<1x1x10x128xf32> to vector<10x128xf32>
    %751 = vector.shape_cast %748 : vector<10x128xf32> to vector<1x1x10x128xf32>
    tpu.vector_store %arg4[%c0_709, %c8_710, %c0_711, %c0_712], %751 {strides = array<i32>} : memref<1x15x10x128xf32, #tpu.memory_space<vmem>>, vector<1x1x10x128xf32>,
    %c0_713 = arith.constant 0 : index
    %c8_714 = arith.constant 8 : index
    %c0_715 = arith.constant 0 : index
    %c0_716 = arith.constant 0 : index
    %752 = vector.load %arg5[%c0_713, %c8_714, %c0_715, %c0_716] : memref<1x15x10x128xf32, #tpu.memory_space<vmem>>, vector<1x1x10x128xf32>
    %753 = vector.shape_cast %752 : vector<1x1x10x128xf32> to vector<10x128xf32>
    %cst_717 = arith.constant 0.000000e+00 : f32
    %754 = vector.broadcast %cst_717 : f32 to vector<10x128xf32>
    %755 = arith.select %742, %486, %754 : vector<10x128xi1>, vector<10x128xf32>
    %756 = arith.addf %753, %755 : vector<10x128xf32>
    %c0_718 = arith.constant 0 : index
    %c8_719 = arith.constant 8 : index
    %c0_720 = arith.constant 0 : index
    %c0_721 = arith.constant 0 : index
    %757 = vector.load %arg5[%c0_718, %c8_719, %c0_720, %c0_721] : memref<1x15x10x128xf32, #tpu.memory_space<vmem>>, vector<1x1x10x128xf32>
    %758 = vector.shape_cast %757 : vector<1x1x10x128xf32> to vector<10x128xf32>
    %759 = vector.shape_cast %756 : vector<10x128xf32> to vector<1x1x10x128xf32>
    tpu.vector_store %arg5[%c0_718, %c8_719, %c0_720, %c0_721], %759 {strides = array<i32>} : memref<1x15x10x128xf32, #tpu.memory_space<vmem>>, vector<1x1x10x128xf32>,
    %c0_722 = arith.constant 0 : index
    %c8_723 = arith.constant 8 : index
    %c0_724 = arith.constant 0 : index
    %c0_725 = arith.constant 0 : index
    %760 = vector.load %arg6[%c0_722, %c8_723, %c0_724, %c0_725] : memref<1x15x10x128xf32, #tpu.memory_space<vmem>>, vector<1x1x10x128xf32>
    %761 = vector.shape_cast %760 : vector<1x1x10x128xf32> to vector<10x128xf32>
    %cst_726 = arith.constant 0.000000e+00 : f32
    %762 = vector.broadcast %cst_726 : f32 to vector<10x128xf32>
    %763 = arith.select %742, %500, %762 : vector<10x128xi1>, vector<10x128xf32>
    %764 = arith.addf %761, %763 : vector<10x128xf32>
    %c0_727 = arith.constant 0 : index
    %c8_728 = arith.constant 8 : index
    %c0_729 = arith.constant 0 : index
    %c0_730 = arith.constant 0 : index
    %765 = vector.load %arg6[%c0_727, %c8_728, %c0_729, %c0_730] : memref<1x15x10x128xf32, #tpu.memory_space<vmem>>, vector<1x1x10x128xf32>
    %766 = vector.shape_cast %765 : vector<1x1x10x128xf32> to vector<10x128xf32>
    %767 = vector.shape_cast %764 : vector<10x128xf32> to vector<1x1x10x128xf32>
    tpu.vector_store %arg6[%c0_727, %c8_728, %c0_729, %c0_730], %767 {strides = array<i32>} : memref<1x15x10x128xf32, #tpu.memory_space<vmem>>, vector<1x1x10x128xf32>,
    %cst_731 = arith.constant 9.000000e+00 : f32
    %768 = vector.broadcast %cst_731 : f32 to vector<10x128xf32>
    %769 = arith.cmpf oeq, %524, %768 : vector<10x128xf32>
    %c0_732 = arith.constant 0 : index
    %c9_733 = arith.constant 9 : index
    %c0_734 = arith.constant 0 : index
    %c0_735 = arith.constant 0 : index
    %770 = vector.load %arg4[%c0_732, %c9_733, %c0_734, %c0_735] : memref<1x15x10x128xf32, #tpu.memory_space<vmem>>, vector<1x1x10x128xf32>
    %771 = vector.shape_cast %770 : vector<1x1x10x128xf32> to vector<10x128xf32>
    %cst_736 = arith.constant 1.000000e+00 : f32
    %cst_737 = arith.constant 0.000000e+00 : f32
    %772 = vector.broadcast %cst_736 : f32 to vector<10x128xf32>
    %773 = vector.broadcast %cst_737 : f32 to vector<10x128xf32>
    %774 = arith.select %769, %772, %773 : vector<10x128xi1>, vector<10x128xf32>
    %775 = arith.addf %771, %774 : vector<10x128xf32>
    %c0_738 = arith.constant 0 : index
    %c9_739 = arith.constant 9 : index
    %c0_740 = arith.constant 0 : index
    %c0_741 = arith.constant 0 : index
    %776 = vector.load %arg4[%c0_738, %c9_739, %c0_740, %c0_741] : memref<1x15x10x128xf32, #tpu.memory_space<vmem>>, vector<1x1x10x128xf32>
    %777 = vector.shape_cast %776 : vector<1x1x10x128xf32> to vector<10x128xf32>
    %778 = vector.shape_cast %775 : vector<10x128xf32> to vector<1x1x10x128xf32>
    tpu.vector_store %arg4[%c0_738, %c9_739, %c0_740, %c0_741], %778 {strides = array<i32>} : memref<1x15x10x128xf32, #tpu.memory_space<vmem>>, vector<1x1x10x128xf32>,
    %c0_742 = arith.constant 0 : index
    %c9_743 = arith.constant 9 : index
    %c0_744 = arith.constant 0 : index
    %c0_745 = arith.constant 0 : index
    %779 = vector.load %arg5[%c0_742, %c9_743, %c0_744, %c0_745] : memref<1x15x10x128xf32, #tpu.memory_space<vmem>>, vector<1x1x10x128xf32>
    %780 = vector.shape_cast %779 : vector<1x1x10x128xf32> to vector<10x128xf32>
    %cst_746 = arith.constant 0.000000e+00 : f32
    %781 = vector.broadcast %cst_746 : f32 to vector<10x128xf32>
    %782 = arith.select %769, %486, %781 : vector<10x128xi1>, vector<10x128xf32>
    %783 = arith.addf %780, %782 : vector<10x128xf32>
    %c0_747 = arith.constant 0 : index
    %c9_748 = arith.constant 9 : index
    %c0_749 = arith.constant 0 : index
    %c0_750 = arith.constant 0 : index
    %784 = vector.load %arg5[%c0_747, %c9_748, %c0_749, %c0_750] : memref<1x15x10x128xf32, #tpu.memory_space<vmem>>, vector<1x1x10x128xf32>
    %785 = vector.shape_cast %784 : vector<1x1x10x128xf32> to vector<10x128xf32>
    %786 = vector.shape_cast %783 : vector<10x128xf32> to vector<1x1x10x128xf32>
    tpu.vector_store %arg5[%c0_747, %c9_748, %c0_749, %c0_750], %786 {strides = array<i32>} : memref<1x15x10x128xf32, #tpu.memory_space<vmem>>, vector<1x1x10x128xf32>,
    %c0_751 = arith.constant 0 : index
    %c9_752 = arith.constant 9 : index
    %c0_753 = arith.constant 0 : index
    %c0_754 = arith.constant 0 : index
    %787 = vector.load %arg6[%c0_751, %c9_752, %c0_753, %c0_754] : memref<1x15x10x128xf32, #tpu.memory_space<vmem>>, vector<1x1x10x128xf32>
    %788 = vector.shape_cast %787 : vector<1x1x10x128xf32> to vector<10x128xf32>
    %cst_755 = arith.constant 0.000000e+00 : f32
    %789 = vector.broadcast %cst_755 : f32 to vector<10x128xf32>
    %790 = arith.select %769, %500, %789 : vector<10x128xi1>, vector<10x128xf32>
    %791 = arith.addf %788, %790 : vector<10x128xf32>
    %c0_756 = arith.constant 0 : index
    %c9_757 = arith.constant 9 : index
    %c0_758 = arith.constant 0 : index
    %c0_759 = arith.constant 0 : index
    %792 = vector.load %arg6[%c0_756, %c9_757, %c0_758, %c0_759] : memref<1x15x10x128xf32, #tpu.memory_space<vmem>>, vector<1x1x10x128xf32>
    %793 = vector.shape_cast %792 : vector<1x1x10x128xf32> to vector<10x128xf32>
    %794 = vector.shape_cast %791 : vector<10x128xf32> to vector<1x1x10x128xf32>
    tpu.vector_store %arg6[%c0_756, %c9_757, %c0_758, %c0_759], %794 {strides = array<i32>} : memref<1x15x10x128xf32, #tpu.memory_space<vmem>>, vector<1x1x10x128xf32>,
    %cst_760 = arith.constant 1.000000e+01 : f32
    %795 = vector.broadcast %cst_760 : f32 to vector<10x128xf32>
    %796 = arith.cmpf oeq, %524, %795 : vector<10x128xf32>
    %c0_761 = arith.constant 0 : index
    %c10_762 = arith.constant 10 : index
    %c0_763 = arith.constant 0 : index
    %c0_764 = arith.constant 0 : index
    %797 = vector.load %arg4[%c0_761, %c10_762, %c0_763, %c0_764] : memref<1x15x10x128xf32, #tpu.memory_space<vmem>>, vector<1x1x10x128xf32>
    %798 = vector.shape_cast %797 : vector<1x1x10x128xf32> to vector<10x128xf32>
    %cst_765 = arith.constant 1.000000e+00 : f32
    %cst_766 = arith.constant 0.000000e+00 : f32
    %799 = vector.broadcast %cst_765 : f32 to vector<10x128xf32>
    %800 = vector.broadcast %cst_766 : f32 to vector<10x128xf32>
    %801 = arith.select %796, %799, %800 : vector<10x128xi1>, vector<10x128xf32>
    %802 = arith.addf %798, %801 : vector<10x128xf32>
    %c0_767 = arith.constant 0 : index
    %c10_768 = arith.constant 10 : index
    %c0_769 = arith.constant 0 : index
    %c0_770 = arith.constant 0 : index
    %803 = vector.load %arg4[%c0_767, %c10_768, %c0_769, %c0_770] : memref<1x15x10x128xf32, #tpu.memory_space<vmem>>, vector<1x1x10x128xf32>
    %804 = vector.shape_cast %803 : vector<1x1x10x128xf32> to vector<10x128xf32>
    %805 = vector.shape_cast %802 : vector<10x128xf32> to vector<1x1x10x128xf32>
    tpu.vector_store %arg4[%c0_767, %c10_768, %c0_769, %c0_770], %805 {strides = array<i32>} : memref<1x15x10x128xf32, #tpu.memory_space<vmem>>, vector<1x1x10x128xf32>,
    %c0_771 = arith.constant 0 : index
    %c10_772 = arith.constant 10 : index
    %c0_773 = arith.constant 0 : index
    %c0_774 = arith.constant 0 : index
    %806 = vector.load %arg5[%c0_771, %c10_772, %c0_773, %c0_774] : memref<1x15x10x128xf32, #tpu.memory_space<vmem>>, vector<1x1x10x128xf32>
    %807 = vector.shape_cast %806 : vector<1x1x10x128xf32> to vector<10x128xf32>
    %cst_775 = arith.constant 0.000000e+00 : f32
    %808 = vector.broadcast %cst_775 : f32 to vector<10x128xf32>
    %809 = arith.select %796, %486, %808 : vector<10x128xi1>, vector<10x128xf32>
    %810 = arith.addf %807, %809 : vector<10x128xf32>
    %c0_776 = arith.constant 0 : index
    %c10_777 = arith.constant 10 : index
    %c0_778 = arith.constant 0 : index
    %c0_779 = arith.constant 0 : index
    %811 = vector.load %arg5[%c0_776, %c10_777, %c0_778, %c0_779] : memref<1x15x10x128xf32, #tpu.memory_space<vmem>>, vector<1x1x10x128xf32>
    %812 = vector.shape_cast %811 : vector<1x1x10x128xf32> to vector<10x128xf32>
    %813 = vector.shape_cast %810 : vector<10x128xf32> to vector<1x1x10x128xf32>
    tpu.vector_store %arg5[%c0_776, %c10_777, %c0_778, %c0_779], %813 {strides = array<i32>} : memref<1x15x10x128xf32, #tpu.memory_space<vmem>>, vector<1x1x10x128xf32>,
    %c0_780 = arith.constant 0 : index
    %c10_781 = arith.constant 10 : index
    %c0_782 = arith.constant 0 : index
    %c0_783 = arith.constant 0 : index
    %814 = vector.load %arg6[%c0_780, %c10_781, %c0_782, %c0_783] : memref<1x15x10x128xf32, #tpu.memory_space<vmem>>, vector<1x1x10x128xf32>
    %815 = vector.shape_cast %814 : vector<1x1x10x128xf32> to vector<10x128xf32>
    %cst_784 = arith.constant 0.000000e+00 : f32
    %816 = vector.broadcast %cst_784 : f32 to vector<10x128xf32>
    %817 = arith.select %796, %500, %816 : vector<10x128xi1>, vector<10x128xf32>
    %818 = arith.addf %815, %817 : vector<10x128xf32>
    %c0_785 = arith.constant 0 : index
    %c10_786 = arith.constant 10 : index
    %c0_787 = arith.constant 0 : index
    %c0_788 = arith.constant 0 : index
    %819 = vector.load %arg6[%c0_785, %c10_786, %c0_787, %c0_788] : memref<1x15x10x128xf32, #tpu.memory_space<vmem>>, vector<1x1x10x128xf32>
    %820 = vector.shape_cast %819 : vector<1x1x10x128xf32> to vector<10x128xf32>
    %821 = vector.shape_cast %818 : vector<10x128xf32> to vector<1x1x10x128xf32>
    tpu.vector_store %arg6[%c0_785, %c10_786, %c0_787, %c0_788], %821 {strides = array<i32>} : memref<1x15x10x128xf32, #tpu.memory_space<vmem>>, vector<1x1x10x128xf32>,
    %cst_789 = arith.constant 1.100000e+01 : f32
    %822 = vector.broadcast %cst_789 : f32 to vector<10x128xf32>
    %823 = arith.cmpf oeq, %524, %822 : vector<10x128xf32>
    %c0_790 = arith.constant 0 : index
    %c11_791 = arith.constant 11 : index
    %c0_792 = arith.constant 0 : index
    %c0_793 = arith.constant 0 : index
    %824 = vector.load %arg4[%c0_790, %c11_791, %c0_792, %c0_793] : memref<1x15x10x128xf32, #tpu.memory_space<vmem>>, vector<1x1x10x128xf32>
    %825 = vector.shape_cast %824 : vector<1x1x10x128xf32> to vector<10x128xf32>
    %cst_794 = arith.constant 1.000000e+00 : f32
    %cst_795 = arith.constant 0.000000e+00 : f32
    %826 = vector.broadcast %cst_794 : f32 to vector<10x128xf32>
    %827 = vector.broadcast %cst_795 : f32 to vector<10x128xf32>
    %828 = arith.select %823, %826, %827 : vector<10x128xi1>, vector<10x128xf32>
    %829 = arith.addf %825, %828 : vector<10x128xf32>
    %c0_796 = arith.constant 0 : index
    %c11_797 = arith.constant 11 : index
    %c0_798 = arith.constant 0 : index
    %c0_799 = arith.constant 0 : index
    %830 = vector.load %arg4[%c0_796, %c11_797, %c0_798, %c0_799] : memref<1x15x10x128xf32, #tpu.memory_space<vmem>>, vector<1x1x10x128xf32>
    %831 = vector.shape_cast %830 : vector<1x1x10x128xf32> to vector<10x128xf32>
    %832 = vector.shape_cast %829 : vector<10x128xf32> to vector<1x1x10x128xf32>
    tpu.vector_store %arg4[%c0_796, %c11_797, %c0_798, %c0_799], %832 {strides = array<i32>} : memref<1x15x10x128xf32, #tpu.memory_space<vmem>>, vector<1x1x10x128xf32>,
    %c0_800 = arith.constant 0 : index
    %c11_801 = arith.constant 11 : index
    %c0_802 = arith.constant 0 : index
    %c0_803 = arith.constant 0 : index
    %833 = vector.load %arg5[%c0_800, %c11_801, %c0_802, %c0_803] : memref<1x15x10x128xf32, #tpu.memory_space<vmem>>, vector<1x1x10x128xf32>
    %834 = vector.shape_cast %833 : vector<1x1x10x128xf32> to vector<10x128xf32>
    %cst_804 = arith.constant 0.000000e+00 : f32
    %835 = vector.broadcast %cst_804 : f32 to vector<10x128xf32>
    %836 = arith.select %823, %486, %835 : vector<10x128xi1>, vector<10x128xf32>
    %837 = arith.addf %834, %836 : vector<10x128xf32>
    %c0_805 = arith.constant 0 : index
    %c11_806 = arith.constant 11 : index
    %c0_807 = arith.constant 0 : index
    %c0_808 = arith.constant 0 : index
    %838 = vector.load %arg5[%c0_805, %c11_806, %c0_807, %c0_808] : memref<1x15x10x128xf32, #tpu.memory_space<vmem>>, vector<1x1x10x128xf32>
    %839 = vector.shape_cast %838 : vector<1x1x10x128xf32> to vector<10x128xf32>
    %840 = vector.shape_cast %837 : vector<10x128xf32> to vector<1x1x10x128xf32>
    tpu.vector_store %arg5[%c0_805, %c11_806, %c0_807, %c0_808], %840 {strides = array<i32>} : memref<1x15x10x128xf32, #tpu.memory_space<vmem>>, vector<1x1x10x128xf32>,
    %c0_809 = arith.constant 0 : index
    %c11_810 = arith.constant 11 : index
    %c0_811 = arith.constant 0 : index
    %c0_812 = arith.constant 0 : index
    %841 = vector.load %arg6[%c0_809, %c11_810, %c0_811, %c0_812] : memref<1x15x10x128xf32, #tpu.memory_space<vmem>>, vector<1x1x10x128xf32>
    %842 = vector.shape_cast %841 : vector<1x1x10x128xf32> to vector<10x128xf32>
    %cst_813 = arith.constant 0.000000e+00 : f32
    %843 = vector.broadcast %cst_813 : f32 to vector<10x128xf32>
    %844 = arith.select %823, %500, %843 : vector<10x128xi1>, vector<10x128xf32>
    %845 = arith.addf %842, %844 : vector<10x128xf32>
    %c0_814 = arith.constant 0 : index
    %c11_815 = arith.constant 11 : index
    %c0_816 = arith.constant 0 : index
    %c0_817 = arith.constant 0 : index
    %846 = vector.load %arg6[%c0_814, %c11_815, %c0_816, %c0_817] : memref<1x15x10x128xf32, #tpu.memory_space<vmem>>, vector<1x1x10x128xf32>
    %847 = vector.shape_cast %846 : vector<1x1x10x128xf32> to vector<10x128xf32>
    %848 = vector.shape_cast %845 : vector<10x128xf32> to vector<1x1x10x128xf32>
    tpu.vector_store %arg6[%c0_814, %c11_815, %c0_816, %c0_817], %848 {strides = array<i32>} : memref<1x15x10x128xf32, #tpu.memory_space<vmem>>, vector<1x1x10x128xf32>,
    %cst_818 = arith.constant 1.200000e+01 : f32
    %849 = vector.broadcast %cst_818 : f32 to vector<10x128xf32>
    %850 = arith.cmpf oeq, %524, %849 : vector<10x128xf32>
    %c0_819 = arith.constant 0 : index
    %c12_820 = arith.constant 12 : index
    %c0_821 = arith.constant 0 : index
    %c0_822 = arith.constant 0 : index
    %851 = vector.load %arg4[%c0_819, %c12_820, %c0_821, %c0_822] : memref<1x15x10x128xf32, #tpu.memory_space<vmem>>, vector<1x1x10x128xf32>
    %852 = vector.shape_cast %851 : vector<1x1x10x128xf32> to vector<10x128xf32>
    %cst_823 = arith.constant 1.000000e+00 : f32
    %cst_824 = arith.constant 0.000000e+00 : f32
    %853 = vector.broadcast %cst_823 : f32 to vector<10x128xf32>
    %854 = vector.broadcast %cst_824 : f32 to vector<10x128xf32>
    %855 = arith.select %850, %853, %854 : vector<10x128xi1>, vector<10x128xf32>
    %856 = arith.addf %852, %855 : vector<10x128xf32>
    %c0_825 = arith.constant 0 : index
    %c12_826 = arith.constant 12 : index
    %c0_827 = arith.constant 0 : index
    %c0_828 = arith.constant 0 : index
    %857 = vector.load %arg4[%c0_825, %c12_826, %c0_827, %c0_828] : memref<1x15x10x128xf32, #tpu.memory_space<vmem>>, vector<1x1x10x128xf32>
    %858 = vector.shape_cast %857 : vector<1x1x10x128xf32> to vector<10x128xf32>
    %859 = vector.shape_cast %856 : vector<10x128xf32> to vector<1x1x10x128xf32>
    tpu.vector_store %arg4[%c0_825, %c12_826, %c0_827, %c0_828], %859 {strides = array<i32>} : memref<1x15x10x128xf32, #tpu.memory_space<vmem>>, vector<1x1x10x128xf32>,
    %c0_829 = arith.constant 0 : index
    %c12_830 = arith.constant 12 : index
    %c0_831 = arith.constant 0 : index
    %c0_832 = arith.constant 0 : index
    %860 = vector.load %arg5[%c0_829, %c12_830, %c0_831, %c0_832] : memref<1x15x10x128xf32, #tpu.memory_space<vmem>>, vector<1x1x10x128xf32>
    %861 = vector.shape_cast %860 : vector<1x1x10x128xf32> to vector<10x128xf32>
    %cst_833 = arith.constant 0.000000e+00 : f32
    %862 = vector.broadcast %cst_833 : f32 to vector<10x128xf32>
    %863 = arith.select %850, %486, %862 : vector<10x128xi1>, vector<10x128xf32>
    %864 = arith.addf %861, %863 : vector<10x128xf32>
    %c0_834 = arith.constant 0 : index
    %c12_835 = arith.constant 12 : index
    %c0_836 = arith.constant 0 : index
    %c0_837 = arith.constant 0 : index
    %865 = vector.load %arg5[%c0_834, %c12_835, %c0_836, %c0_837] : memref<1x15x10x128xf32, #tpu.memory_space<vmem>>, vector<1x1x10x128xf32>
    %866 = vector.shape_cast %865 : vector<1x1x10x128xf32> to vector<10x128xf32>
    %867 = vector.shape_cast %864 : vector<10x128xf32> to vector<1x1x10x128xf32>
    tpu.vector_store %arg5[%c0_834, %c12_835, %c0_836, %c0_837], %867 {strides = array<i32>} : memref<1x15x10x128xf32, #tpu.memory_space<vmem>>, vector<1x1x10x128xf32>,
    %c0_838 = arith.constant 0 : index
    %c12_839 = arith.constant 12 : index
    %c0_840 = arith.constant 0 : index
    %c0_841 = arith.constant 0 : index
    %868 = vector.load %arg6[%c0_838, %c12_839, %c0_840, %c0_841] : memref<1x15x10x128xf32, #tpu.memory_space<vmem>>, vector<1x1x10x128xf32>
    %869 = vector.shape_cast %868 : vector<1x1x10x128xf32> to vector<10x128xf32>
    %cst_842 = arith.constant 0.000000e+00 : f32
    %870 = vector.broadcast %cst_842 : f32 to vector<10x128xf32>
    %871 = arith.select %850, %500, %870 : vector<10x128xi1>, vector<10x128xf32>
    %872 = arith.addf %869, %871 : vector<10x128xf32>
    %c0_843 = arith.constant 0 : index
    %c12_844 = arith.constant 12 : index
    %c0_845 = arith.constant 0 : index
    %c0_846 = arith.constant 0 : index
    %873 = vector.load %arg6[%c0_843, %c12_844, %c0_845, %c0_846] : memref<1x15x10x128xf32, #tpu.memory_space<vmem>>, vector<1x1x10x128xf32>
    %874 = vector.shape_cast %873 : vector<1x1x10x128xf32> to vector<10x128xf32>
    %875 = vector.shape_cast %872 : vector<10x128xf32> to vector<1x1x10x128xf32>
    tpu.vector_store %arg6[%c0_843, %c12_844, %c0_845, %c0_846], %875 {strides = array<i32>} : memref<1x15x10x128xf32, #tpu.memory_space<vmem>>, vector<1x1x10x128xf32>,
    %cst_847 = arith.constant 1.300000e+01 : f32
    %876 = vector.broadcast %cst_847 : f32 to vector<10x128xf32>
    %877 = arith.cmpf oeq, %524, %876 : vector<10x128xf32>
    %c0_848 = arith.constant 0 : index
    %c13_849 = arith.constant 13 : index
    %c0_850 = arith.constant 0 : index
    %c0_851 = arith.constant 0 : index
    %878 = vector.load %arg4[%c0_848, %c13_849, %c0_850, %c0_851] : memref<1x15x10x128xf32, #tpu.memory_space<vmem>>, vector<1x1x10x128xf32>
    %879 = vector.shape_cast %878 : vector<1x1x10x128xf32> to vector<10x128xf32>
    %cst_852 = arith.constant 1.000000e+00 : f32
    %cst_853 = arith.constant 0.000000e+00 : f32
    %880 = vector.broadcast %cst_852 : f32 to vector<10x128xf32>
    %881 = vector.broadcast %cst_853 : f32 to vector<10x128xf32>
    %882 = arith.select %877, %880, %881 : vector<10x128xi1>, vector<10x128xf32>
    %883 = arith.addf %879, %882 : vector<10x128xf32>
    %c0_854 = arith.constant 0 : index
    %c13_855 = arith.constant 13 : index
    %c0_856 = arith.constant 0 : index
    %c0_857 = arith.constant 0 : index
    %884 = vector.load %arg4[%c0_854, %c13_855, %c0_856, %c0_857] : memref<1x15x10x128xf32, #tpu.memory_space<vmem>>, vector<1x1x10x128xf32>
    %885 = vector.shape_cast %884 : vector<1x1x10x128xf32> to vector<10x128xf32>
    %886 = vector.shape_cast %883 : vector<10x128xf32> to vector<1x1x10x128xf32>
    tpu.vector_store %arg4[%c0_854, %c13_855, %c0_856, %c0_857], %886 {strides = array<i32>} : memref<1x15x10x128xf32, #tpu.memory_space<vmem>>, vector<1x1x10x128xf32>,
    %c0_858 = arith.constant 0 : index
    %c13_859 = arith.constant 13 : index
    %c0_860 = arith.constant 0 : index
    %c0_861 = arith.constant 0 : index
    %887 = vector.load %arg5[%c0_858, %c13_859, %c0_860, %c0_861] : memref<1x15x10x128xf32, #tpu.memory_space<vmem>>, vector<1x1x10x128xf32>
    %888 = vector.shape_cast %887 : vector<1x1x10x128xf32> to vector<10x128xf32>
    %cst_862 = arith.constant 0.000000e+00 : f32
    %889 = vector.broadcast %cst_862 : f32 to vector<10x128xf32>
    %890 = arith.select %877, %486, %889 : vector<10x128xi1>, vector<10x128xf32>
    %891 = arith.addf %888, %890 : vector<10x128xf32>
    %c0_863 = arith.constant 0 : index
    %c13_864 = arith.constant 13 : index
    %c0_865 = arith.constant 0 : index
    %c0_866 = arith.constant 0 : index
    %892 = vector.load %arg5[%c0_863, %c13_864, %c0_865, %c0_866] : memref<1x15x10x128xf32, #tpu.memory_space<vmem>>, vector<1x1x10x128xf32>
    %893 = vector.shape_cast %892 : vector<1x1x10x128xf32> to vector<10x128xf32>
    %894 = vector.shape_cast %891 : vector<10x128xf32> to vector<1x1x10x128xf32>
    tpu.vector_store %arg5[%c0_863, %c13_864, %c0_865, %c0_866], %894 {strides = array<i32>} : memref<1x15x10x128xf32, #tpu.memory_space<vmem>>, vector<1x1x10x128xf32>,
    %c0_867 = arith.constant 0 : index
    %c13_868 = arith.constant 13 : index
    %c0_869 = arith.constant 0 : index
    %c0_870 = arith.constant 0 : index
    %895 = vector.load %arg6[%c0_867, %c13_868, %c0_869, %c0_870] : memref<1x15x10x128xf32, #tpu.memory_space<vmem>>, vector<1x1x10x128xf32>
    %896 = vector.shape_cast %895 : vector<1x1x10x128xf32> to vector<10x128xf32>
    %cst_871 = arith.constant 0.000000e+00 : f32
    %897 = vector.broadcast %cst_871 : f32 to vector<10x128xf32>
    %898 = arith.select %877, %500, %897 : vector<10x128xi1>, vector<10x128xf32>
    %899 = arith.addf %896, %898 : vector<10x128xf32>
    %c0_872 = arith.constant 0 : index
    %c13_873 = arith.constant 13 : index
    %c0_874 = arith.constant 0 : index
    %c0_875 = arith.constant 0 : index
    %900 = vector.load %arg6[%c0_872, %c13_873, %c0_874, %c0_875] : memref<1x15x10x128xf32, #tpu.memory_space<vmem>>, vector<1x1x10x128xf32>
    %901 = vector.shape_cast %900 : vector<1x1x10x128xf32> to vector<10x128xf32>
    %902 = vector.shape_cast %899 : vector<10x128xf32> to vector<1x1x10x128xf32>
    tpu.vector_store %arg6[%c0_872, %c13_873, %c0_874, %c0_875], %902 {strides = array<i32>} : memref<1x15x10x128xf32, #tpu.memory_space<vmem>>, vector<1x1x10x128xf32>,
    %cst_876 = arith.constant 1.400000e+01 : f32
    %903 = vector.broadcast %cst_876 : f32 to vector<10x128xf32>
    %904 = arith.cmpf oeq, %524, %903 : vector<10x128xf32>
    %c0_877 = arith.constant 0 : index
    %c14_878 = arith.constant 14 : index
    %c0_879 = arith.constant 0 : index
    %c0_880 = arith.constant 0 : index
    %905 = vector.load %arg4[%c0_877, %c14_878, %c0_879, %c0_880] : memref<1x15x10x128xf32, #tpu.memory_space<vmem>>, vector<1x1x10x128xf32>
    %906 = vector.shape_cast %905 : vector<1x1x10x128xf32> to vector<10x128xf32>
    %cst_881 = arith.constant 1.000000e+00 : f32
    %cst_882 = arith.constant 0.000000e+00 : f32
    %907 = vector.broadcast %cst_881 : f32 to vector<10x128xf32>
    %908 = vector.broadcast %cst_882 : f32 to vector<10x128xf32>
    %909 = arith.select %904, %907, %908 : vector<10x128xi1>, vector<10x128xf32>
    %910 = arith.addf %906, %909 : vector<10x128xf32>
    %c0_883 = arith.constant 0 : index
    %c14_884 = arith.constant 14 : index
    %c0_885 = arith.constant 0 : index
    %c0_886 = arith.constant 0 : index
    %911 = vector.load %arg4[%c0_883, %c14_884, %c0_885, %c0_886] : memref<1x15x10x128xf32, #tpu.memory_space<vmem>>, vector<1x1x10x128xf32>
    %912 = vector.shape_cast %911 : vector<1x1x10x128xf32> to vector<10x128xf32>
    %913 = vector.shape_cast %910 : vector<10x128xf32> to vector<1x1x10x128xf32>
    tpu.vector_store %arg4[%c0_883, %c14_884, %c0_885, %c0_886], %913 {strides = array<i32>} : memref<1x15x10x128xf32, #tpu.memory_space<vmem>>, vector<1x1x10x128xf32>,
    %c0_887 = arith.constant 0 : index
    %c14_888 = arith.constant 14 : index
    %c0_889 = arith.constant 0 : index
    %c0_890 = arith.constant 0 : index
    %914 = vector.load %arg5[%c0_887, %c14_888, %c0_889, %c0_890] : memref<1x15x10x128xf32, #tpu.memory_space<vmem>>, vector<1x1x10x128xf32>
    %915 = vector.shape_cast %914 : vector<1x1x10x128xf32> to vector<10x128xf32>
    %cst_891 = arith.constant 0.000000e+00 : f32
    %916 = vector.broadcast %cst_891 : f32 to vector<10x128xf32>
    %917 = arith.select %904, %486, %916 : vector<10x128xi1>, vector<10x128xf32>
    %918 = arith.addf %915, %917 : vector<10x128xf32>
    %c0_892 = arith.constant 0 : index
    %c14_893 = arith.constant 14 : index
    %c0_894 = arith.constant 0 : index
    %c0_895 = arith.constant 0 : index
    %919 = vector.load %arg5[%c0_892, %c14_893, %c0_894, %c0_895] : memref<1x15x10x128xf32, #tpu.memory_space<vmem>>, vector<1x1x10x128xf32>
    %920 = vector.shape_cast %919 : vector<1x1x10x128xf32> to vector<10x128xf32>
    %921 = vector.shape_cast %918 : vector<10x128xf32> to vector<1x1x10x128xf32>
    tpu.vector_store %arg5[%c0_892, %c14_893, %c0_894, %c0_895], %921 {strides = array<i32>} : memref<1x15x10x128xf32, #tpu.memory_space<vmem>>, vector<1x1x10x128xf32>,
    %c0_896 = arith.constant 0 : index
    %c14_897 = arith.constant 14 : index
    %c0_898 = arith.constant 0 : index
    %c0_899 = arith.constant 0 : index
    %922 = vector.load %arg6[%c0_896, %c14_897, %c0_898, %c0_899] : memref<1x15x10x128xf32, #tpu.memory_space<vmem>>, vector<1x1x10x128xf32>
    %923 = vector.shape_cast %922 : vector<1x1x10x128xf32> to vector<10x128xf32>
    %cst_900 = arith.constant 0.000000e+00 : f32
    %924 = vector.broadcast %cst_900 : f32 to vector<10x128xf32>
    %925 = arith.select %904, %500, %924 : vector<10x128xi1>, vector<10x128xf32>
    %926 = arith.addf %923, %925 : vector<10x128xf32>
    %c0_901 = arith.constant 0 : index
    %c14_902 = arith.constant 14 : index
    %c0_903 = arith.constant 0 : index
    %c0_904 = arith.constant 0 : index
    %927 = vector.load %arg6[%c0_901, %c14_902, %c0_903, %c0_904] : memref<1x15x10x128xf32, #tpu.memory_space<vmem>>, vector<1x1x10x128xf32>
    %928 = vector.shape_cast %927 : vector<1x1x10x128xf32> to vector<10x128xf32>
    %929 = vector.shape_cast %926 : vector<10x128xf32> to vector<1x1x10x128xf32>
    tpu.vector_store %arg6[%c0_901, %c14_902, %c0_903, %c0_904], %929 {strides = array<i32>} : memref<1x15x10x128xf32, #tpu.memory_space<vmem>>, vector<1x1x10x128xf32>,
    return
  }
  func.func @transform_0(%arg0: i32, %arg1: i32) -> (i32, i32) {
    %c1_i32 = arith.constant 1 : i32
    %0 = arith.muli %arg0, %c1_i32 : i32
    %1 = arith.addi %0, %arg1 : i32
    %c0_i32 = arith.constant 0 : i32
    %c0_i32_0 = arith.constant 0 : i32
    return %c0_i32, %1 : i32, i32
  }
  func.func @transform_1(%arg0: i32, %arg1: i32) -> (i32, i32) {
    %c1_i32 = arith.constant 1 : i32
    %0 = arith.muli %arg0, %c1_i32 : i32
    %1 = arith.addi %0, %arg1 : i32
    %c0_i32 = arith.constant 0 : i32
    %c0_i32_0 = arith.constant 0 : i32
    return %c0_i32, %1 : i32, i32
  }
  func.func @transform_2(%arg0: i32, %arg1: i32) -> (i32, i32, i32, i32) {
    %c0_i32 = arith.constant 0 : i32
    %c0_i32_0 = arith.constant 0 : i32
    %c0_i32_1 = arith.constant 0 : i32
    %c0_i32_2 = arith.constant 0 : i32
    return %arg0, %c0_i32, %c0_i32_0, %c0_i32_1 : i32, i32, i32, i32
  }
  func.func @transform_3(%arg0: i32, %arg1: i32) -> (i32, i32, i32, i32) {
    %c0_i32 = arith.constant 0 : i32
    %c0_i32_0 = arith.constant 0 : i32
    %c0_i32_1 = arith.constant 0 : i32
    %c0_i32_2 = arith.constant 0 : i32
    return %arg0, %c0_i32, %c0_i32_0, %c0_i32_1 : i32, i32, i32, i32
  }
  func.func @transform_4(%arg0: i32, %arg1: i32) -> (i32, i32, i32, i32) {
    %c0_i32 = arith.constant 0 : i32
    %c0_i32_0 = arith.constant 0 : i32
    %c0_i32_1 = arith.constant 0 : i32
    %c0_i32_2 = arith.constant 0 : i32
    return %arg0, %c0_i32, %c0_i32_0, %c0_i32_1 : i32, i32, i32, i32
  }
  func.func @transform_5(%arg0: i32, %arg1: i32) -> (i32, i32, i32) {
    %c0_i32 = arith.constant 0 : i32
    %c0_i32_0 = arith.constant 0 : i32
    %c0_i32_1 = arith.constant 0 : i32
    return %arg0, %c0_i32, %c0_i32_0 : i32, i32, i32
  }
  func.func @transform_6(%arg0: i32, %arg1: i32) -> (i32, i32, i32) {
    %c0_i32 = arith.constant 0 : i32
    %c0_i32_0 = arith.constant 0 : i32
    %c0_i32_1 = arith.constant 0 : i32
    return %arg0, %c0_i32, %c0_i32_0 : i32, i32, i32
  }
}

</mosaic_0001>

<llo_original>
// kernel: tpu_custom_call.1
$region0: #{tpu_custom_call.1}
  #allocation0 [shape = 'u32[]', space=smem, size = 0x4, offset = 0x4, fixed_abs, tag = 'smem constant byte address 0x4 - core index']
  #allocation1 [shape = 'u32[144,128]{1,0:T(1,128)}', space=vmem, size = 0x12000, scoped, tag = 'internal scratch']
  %s0 = inlined_call_operand.hbm [shape: f32[10,256], index: 0, kind: input, shape index: {}]
  %s1 = inlined_call_operand.vmem [shape: s32[1,256], index: 1, kind: input, shape index: {}]
  %s2 = inlined_call_operand.vmem [shape: f32[1,15,10,128], index: 2, kind: output, shape index: {0}]
  %s3 = inlined_call_operand.vmem [shape: f32[1,15,10,128], index: 3, kind: output, shape index: {1}]
  %s4 = inlined_call_operand.vmem [shape: f32[1,15,10,128], index: 4, kind: output, shape index: {2}]
  %s5 = inlined_call_operand.vmem [shape: f32[1,10,128], index: 5, kind: output, shape index: {3}]
  %s6 = inlined_call_operand.vmem [shape: f32[1,10,128], index: 6, kind: output, shape index: {4}]
  %7 = xla_tuple %s2, %s3, %s4, %s5, %s6
  %s8 = sld [smem:[#allocation0]]
  $region58: #{tpu_custom_call.1} parent=0
    _
  %s10 = ssub.s32 1, %s8
  %s11 = scalar_select 0, %s10, %s8
  $region1: #{tpu_custom_call.1} parent=0
    #allocation2 [shape = 'u8[16384]{0}', space=vmem, size = 0x4000, scoped, tag = 'input window, operand 0, single buffered']
    #allocation3 [shape = 's32[1]{0}', space=sflag, size = 0x4, scoped, tag = 'scoped memory for tpu_custom_call.1']
    %12 = vsyncpa [#allocation3], 0
    // Predicated region
    $region2: #{tpu_custom_call.1} parent=1 // pred_check
      _
    $region3: #{tpu_custom_call.1} parent=1 // pred_check_branch
      %14 = sbr.rel (0) target = $region5
    $region4: #{tpu_custom_call.1} parent=1 // pred_region
      %s15 = sadd.s32 0, 0
      %s16 = smul.u32 2, %s15
      %s18 = ssub.s32 512, 512
      %19 = vsyncadd [#allocation3], %s18
      %s20 = smul.addr %s16, 128
      %s21 = scalar_lea.hbm %s0, %s20
      %s22 = sshll.u32 [#allocation2], 4
      %s23 = int_to_ptr.vmem [resolvable:$true] %s22
      %28 = dma.hbm_to_vmem [thread:$0]  %s21, 512, %s23, [#allocation3], 256, 256, 16
    $region5: #{tpu_custom_call.1} parent=1 // pred_fallthru
      _
    // Predicated region
    $region6: #{tpu_custom_call.1} parent=1 // pred_check
      _
    $region7: #{tpu_custom_call.1} parent=1 // pred_check_branch
      %30 = sbr.rel (0) target = $region9
    $region8: #{tpu_custom_call.1} parent=1 // pred_region
      %s31 = sadd.s32 0, 0
      %s32 = smul.u32 2, %s31
      %p33 = scmp.lt.s32.totalorder %s32, 1
      %s34 = scalar_select %p33, %s32, 1
      %s35 = scalar_lea.vmem %s1, %s34
      %s36 = sadd.s32 0, 0
      %s37 = smul.u32 2, %s36
    $region9: #{tpu_custom_call.1} parent=1 // pred_fallthru
      _
    // Predicated region
    $region10: #{tpu_custom_call.1} parent=1 // pred_check
      _
    $region11: #{tpu_custom_call.1} parent=1 // pred_check_branch
      %39 = sbr.rel (0) target = $region13
    $region12: #{tpu_custom_call.1} parent=1 // pred_region
      %40 = dma.done [#allocation3], 512
    $region13: #{tpu_custom_call.1} parent=1 // pred_fallthru
      _
    %s41 = sadd.s32 0, 0
    %s42 = smul.u32 2, %s41
    %p43 = scmp.lt.s32.totalorder %s42, 1
    %s44 = scalar_select %p43, %s42, 1
    %s45 = scalar_lea.vmem %s1, %s44
    %s46 = sadd.s32 0, 0
    %s47 = smul.u32 2, %s46
    %s48 = sadd.s32 0, 0
    %s49 = smul.u32 2, %s48
    %p50 = scmp.lt.s32.totalorder %s49, 1
    %s51 = scalar_select %p50, %s49, 1
    %s52 = scalar_lea.vmem %s1, %s51
    %s53 = sadd.s32 0, 0
    %s54 = smul.u32 2, %s53
    %p55 = scmp.eq.s32.totalorder 0, 0
    // Predicated region
    $region14: #{tpu_custom_call.1} parent=1 // pred_check
      %p56 = pneg %p55
    $region15: #{tpu_custom_call.1} parent=1 // pred_check_branch
      %58 = sbr.rel (%p56) target = $region17
    $region16: #{tpu_custom_call.1} parent=1 // pred_region
      %59 = vst [vmem:[%s2] sm:$0xff] 0.0
      %60 = vst [vmem:[%s2 + $0x8] sm:$0x3] 0.0
      %61 = vst [vmem:[%s2 + $0x10] sm:$0xff] 0.0
      %62 = vst [vmem:[%s2 + $0x18] sm:$0x3] 0.0
      %63 = vst [vmem:[%s2 + $0x20] sm:$0xff] 0.0
      %64 = vst [vmem:[%s2 + $0x28] sm:$0x3] 0.0
      %65 = vst [vmem:[%s2 + $0x30] sm:$0xff] 0.0
      %66 = vst [vmem:[%s2 + $0x38] sm:$0x3] 0.0
      %67 = vst [vmem:[%s2 + $0x40] sm:$0xff] 0.0
      %68 = vst [vmem:[%s2 + $0x48] sm:$0x3] 0.0
      %69 = vst [vmem:[%s2 + $0x50] sm:$0xff] 0.0
      %70 = vst [vmem:[%s2 + $0x58] sm:$0x3] 0.0
      %71 = vst [vmem:[%s2 + $0x60] sm:$0xff] 0.0
      %72 = vst [vmem:[%s2 + $0x68] sm:$0x3] 0.0
      %73 = vst [vmem:[%s2 + $0x70] sm:$0xff] 0.0
      %74 = vst [vmem:[%s2 + $0x78] sm:$0x3] 0.0
      %75 = vst [vmem:[%s2 + $0x80] sm:$0xff] 0.0
      %76 = vst [vmem:[%s2 + $0x88] sm:$0x3] 0.0
      %77 = vst [vmem:[%s2 + $0x90] sm:$0xff] 0.0
      %78 = vst [vmem:[%s2 + $0x98] sm:$0x3] 0.0
      %79 = vst [vmem:[%s2 + $0xa0] sm:$0xff] 0.0
      %80 = vst [vmem:[%s2 + $0xa8] sm:$0x3] 0.0
      %81 = vst [vmem:[%s2 + $0xb0] sm:$0xff] 0.0
      %82 = vst [vmem:[%s2 + $0xb8] sm:$0x3] 0.0
      %83 = vst [vmem:[%s2 + $0xc0] sm:$0xff] 0.0
      %84 = vst [vmem:[%s2 + $0xc8] sm:$0x3] 0.0
      %85 = vst [vmem:[%s2 + $0xd0] sm:$0xff] 0.0
      %86 = vst [vmem:[%s2 + $0xd8] sm:$0x3] 0.0
      %87 = vst [vmem:[%s2 + $0xe0] sm:$0xff] 0.0
      %88 = vst [vmem:[%s2 + $0xe8] sm:$0x3] 0.0
      %89 = vst [vmem:[%s3] sm:$0xff] 0.0
      %90 = vst [vmem:[%s3 + $0x8] sm:$0x3] 0.0
      %91 = vst [vmem:[%s3 + $0x10] sm:$0xff] 0.0
      %92 = vst [vmem:[%s3 + $0x18] sm:$0x3] 0.0
      %93 = vst [vmem:[%s3 + $0x20] sm:$0xff] 0.0
      %94 = vst [vmem:[%s3 + $0x28] sm:$0x3] 0.0
      %95 = vst [vmem:[%s3 + $0x30] sm:$0xff] 0.0
      %96 = vst [vmem:[%s3 + $0x38] sm:$0x3] 0.0
      %97 = vst [vmem:[%s3 + $0x40] sm:$0xff] 0.0
      %98 = vst [vmem:[%s3 + $0x48] sm:$0x3] 0.0
      %99 = vst [vmem:[%s3 + $0x50] sm:$0xff] 0.0
      %100 = vst [vmem:[%s3 + $0x58] sm:$0x3] 0.0
      %101 = vst [vmem:[%s3 + $0x60] sm:$0xff] 0.0
      %102 = vst [vmem:[%s3 + $0x68] sm:$0x3] 0.0
      %103 = vst [vmem:[%s3 + $0x70] sm:$0xff] 0.0
      %104 = vst [vmem:[%s3 + $0x78] sm:$0x3] 0.0
      %105 = vst [vmem:[%s3 + $0x80] sm:$0xff] 0.0
      %106 = vst [vmem:[%s3 + $0x88] sm:$0x3] 0.0
      %107 = vst [vmem:[%s3 + $0x90] sm:$0xff] 0.0
      %108 = vst [vmem:[%s3 + $0x98] sm:$0x3] 0.0
      %109 = vst [vmem:[%s3 + $0xa0] sm:$0xff] 0.0
      %110 = vst [vmem:[%s3 + $0xa8] sm:$0x3] 0.0
      %111 = vst [vmem:[%s3 + $0xb0] sm:$0xff] 0.0
      %112 = vst [vmem:[%s3 + $0xb8] sm:$0x3] 0.0
      %113 = vst [vmem:[%s3 + $0xc0] sm:$0xff] 0.0
      %114 = vst [vmem:[%s3 + $0xc8] sm:$0x3] 0.0
      %115 = vst [vmem:[%s3 + $0xd0] sm:$0xff] 0.0
      %116 = vst [vmem:[%s3 + $0xd8] sm:$0x3] 0.0
      %117 = vst [vmem:[%s3 + $0xe0] sm:$0xff] 0.0
      %118 = vst [vmem:[%s3 + $0xe8] sm:$0x3] 0.0
      %119 = vst [vmem:[%s4] sm:$0xff] 0.0
      %120 = vst [vmem:[%s4 + $0x8] sm:$0x3] 0.0
      %121 = vst [vmem:[%s4 + $0x10] sm:$0xff] 0.0
      %122 = vst [vmem:[%s4 + $0x18] sm:$0x3] 0.0
      %123 = vst [vmem:[%s4 + $0x20] sm:$0xff] 0.0
      %124 = vst [vmem:[%s4 + $0x28] sm:$0x3] 0.0
      %125 = vst [vmem:[%s4 + $0x30] sm:$0xff] 0.0
      %126 = vst [vmem:[%s4 + $0x38] sm:$0x3] 0.0
      %127 = vst [vmem:[%s4 + $0x40] sm:$0xff] 0.0
      %128 = vst [vmem:[%s4 + $0x48] sm:$0x3] 0.0
      %129 = vst [vmem:[%s4 + $0x50] sm:$0xff] 0.0
      %130 = vst [vmem:[%s4 + $0x58] sm:$0x3] 0.0
      %131 = vst [vmem:[%s4 + $0x60] sm:$0xff] 0.0
      %132 = vst [vmem:[%s4 + $0x68] sm:$0x3] 0.0
      %133 = vst [vmem:[%s4 + $0x70] sm:$0xff] 0.0
      %134 = vst [vmem:[%s4 + $0x78] sm:$0x3] 0.0
      %135 = vst [vmem:[%s4 + $0x80] sm:$0xff] 0.0
      %136 = vst [vmem:[%s4 + $0x88] sm:$0x3] 0.0
      %137 = vst [vmem:[%s4 + $0x90] sm:$0xff] 0.0
      %138 = vst [vmem:[%s4 + $0x98] sm:$0x3] 0.0
      %139 = vst [vmem:[%s4 + $0xa0] sm:$0xff] 0.0
      %140 = vst [vmem:[%s4 + $0xa8] sm:$0x3] 0.0
      %141 = vst [vmem:[%s4 + $0xb0] sm:$0xff] 0.0
      %142 = vst [vmem:[%s4 + $0xb8] sm:$0x3] 0.0
      %143 = vst [vmem:[%s4 + $0xc0] sm:$0xff] 0.0
      %144 = vst [vmem:[%s4 + $0xc8] sm:$0x3] 0.0
      %145 = vst [vmem:[%s4 + $0xd0] sm:$0xff] 0.0
      %146 = vst [vmem:[%s4 + $0xd8] sm:$0x3] 0.0
      %147 = vst [vmem:[%s4 + $0xe0] sm:$0xff] 0.0
      %148 = vst [vmem:[%s4 + $0xe8] sm:$0x3] 0.0
      %149 = vst [vmem:[%s5] sm:$0xff] 0.0
      %150 = vst [vmem:[%s5 + $0x8] sm:$0x3] 0.0
      %151 = vst [vmem:[%s6] sm:$0xff] 0.0
      %152 = vst [vmem:[%s6 + $0x8] sm:$0x3] 0.0
    $region17: #{tpu_custom_call.1} parent=1 // pred_fallthru
      _
    %s153 = sadd.s32 0, 0
    %s154 = smul.u32 %s153, 256
    %v155 = vlaneseq
    %v156 = vshrl.u32 %v155, 7
    %v157 = vadd.s32 %v156, 8
    %v158 = vcvt.s32.f32 %v156
    %v159 = vcvt.s32.f32 %v157
    %v160 = vld [vmem:[#allocation2] sm:$0xff]
    %v161 = vld [vmem:[#allocation2 + $0x10] sm:$0x3]
    %v162 = vld [vmem:[%s52] sm:$0x1]
    %v163 = vlaneseq
    %v164 = vand.u32 %v163, 127
    %v165 = vstv %s154
    %v166 = vadd.s32 %v165, %v164
    %vm167 = vcmp.lt.s32.totalorder %v166, 256
    %vm168 = vcmask 1041408
    %v169 = vsel %vm168, %v161, -inf
    %v170 = vmax.f32 %v160, %v169
    %v171 = vrot.slane %v170, 4
    %v172 = vmax.f32 %v170, %v171
    %v173 = vrot.slane %v172, 2
    %v174 = vmax.f32 %v172, %v173
    %v175 = vrot.slane %v174, 1
    %v176 = vmax.f32 %v174, %v175
    %v177 = vsub.f32 %v160, %v176
    %v178 = vsub.f32 %v161, %v176
    %v179 = vmul.f32 %v177, 1.442695
    %v180 = vpow.pop %v179
    %v181 = vmul.f32 %v178, 1.442695
    %v182 = vpow.pop %v181
    %v183 = vsel %vm168, %v182, 0.0
    %v184 = vadd.f32 %v180, %v183
    %v185 = vrot.slane %v184, 4
    %v186 = vadd.f32 %v184, %v185
    %v187 = vrot.slane %v186, 2
    %v188 = vadd.f32 %v186, %v187
    %v189 = vrot.slane %v188, 1
    %v190 = vadd.f32 %v188, %v189
    %v191 = vrcp.pop %v190
    %v192 = vmul.f32 %v180, %v191
    %v193 = vmul.f32 %v182, %v191
    %vm194 = vcmp.eq.f32.partialorder %v160, %v176
    %vm195 = vcmp.eq.f32.partialorder %v161, %v176
    %v196 = vsel %vm194, %v158, 10.0
    %v197 = vsel %vm195, %v159, 10.0
    %v198 = vsel %vm168, %v197, inf
    %v199 = vmin.f32 %v196, %v198
    %v200 = vrot.slane %v199, 4
    %v201 = vmin.f32 %v199, %v200
    %v202 = vrot.slane %v201, 2
    %v203 = vmin.f32 %v201, %v202
    %v204 = vrot.slane %v203, 1
    %v205 = vmin.f32 %v203, %v204
    %vm206 = vcmp.eq.f32.partialorder %v158, %v205
    %vm207 = vcmp.eq.f32.partialorder %v159, %v205
    %v208 = vsel %vm206, 1, 0
    %v209 = vsel %vm207, 1, 0
    %v210 = vcvt.s32.f32 %v208
    %v211 = vcvt.s32.f32 %v209
    %v212 = vlaneseq
    %v213 = vshrl.u32 %v212, 7
    %v214 = vsub.s32 0, %v213
    %v215 = vrot.slane %v162, %v214
    %vm216 = vcmp.eq.s32.totalorder %v156, %v215
    %vm217 = vcmp.eq.s32.totalorder %v157, %v215
    %v218 = vsel %vm216, 1, 0
    %v219 = vsel %vm217, 1, 0
    %v220 = vcvt.s32.f32 %v218
    %v221 = vcvt.s32.f32 %v219
    %v222 = vld [vmem:[%s5] sm:$0xff]
    %v223 = vld [vmem:[%s5 + $0x8] sm:$0x3]
    %v224 = vadd.f32 %v222, %v220
    %v225 = vadd.f32 %v223, %v221
    %226 = vst [vmem:[%s5] sm:$0xff] %v224
    %227 = vst [vmem:[%s5 + $0x8] sm:$0x3] %v225
    %v228 = vld [vmem:[%s6] sm:$0xff]
    %v229 = vld [vmem:[%s6 + $0x8] sm:$0x3]
    %v230 = vmul.f32 %v220, %v210
    %v231 = vmul.f32 %v221, %v211
    %v232 = vadd.f32 %v228, %v230
    %v233 = vadd.f32 %v229, %v231
    %234 = vst [vmem:[%s6] sm:$0xff] %v232
    %235 = vst [vmem:[%s6 + $0x8] sm:$0x3] %v233
    %v236 = vmul.f32 %v192, 15.0
    %v237 = vmul.f32 %v193, 15.0
    %v238 = vceil.f32 %v236
    %v239 = vceil.f32 %v237
    %v240 = vsub.f32 %v238, 1.0
    %v241 = vsub.f32 %v239, 1.0
    %v242 = vmin.f32 %v240, 14.0
    %v243 = vmin.f32 %v241, 14.0
    %v244 = vsel %vm167, 1, 0
    %vm245 = vcmp.eq.s32.totalorder %v244, 1
    %v246 = vsel %vm245, %v242, -1.0
    %v247 = vsel %vm245, %v243, -1.0
    %vm248 = vcmp.eq.f32.partialorder %v246, 0.0
    %vm249 = vcmp.eq.f32.partialorder %v247, 0.0
    %v250 = vld [vmem:[%s2] sm:$0xff]
    %v251 = vld [vmem:[%s2 + $0x8] sm:$0x3]
    %v252 = vsel %vm248, 1.0, 0.0
    %v253 = vsel %vm249, 1.0, 0.0
    %v254 = vadd.f32 %v250, %v252
    %v255 = vadd.f32 %v251, %v253
    %256 = vst [vmem:[%s2] sm:$0xff] %v254
    %257 = vst [vmem:[%s2 + $0x8] sm:$0x3] %v255
    %v258 = vld [vmem:[%s3] sm:$0xff]
    %v259 = vld [vmem:[%s3 + $0x8] sm:$0x3]
    %v260 = vsel %vm248, %v192, 0.0
    %v261 = vsel %vm249, %v193, 0.0
    %v262 = vadd.f32 %v258, %v260
    %v263 = vadd.f32 %v259, %v261
    %264 = vst [vmem:[%s3] sm:$0xff] %v262
    %265 = vst [vmem:[%s3 + $0x8] sm:$0x3] %v263
    %v266 = vld [vmem:[%s4] sm:$0xff]
    %v267 = vld [vmem:[%s4 + $0x8] sm:$0x3]
    %v268 = vsel %vm248, %v220, 0.0
    %v269 = vsel %vm249, %v221, 0.0
    %v270 = vadd.f32 %v266, %v268
    %v271 = vadd.f32 %v267, %v269
    %272 = vst [vmem:[%s4] sm:$0xff] %v270
    %273 = vst [vmem:[%s4 + $0x8] sm:$0x3] %v271
    %vm274 = vcmp.eq.f32.partialorder %v246, 1.0
    %vm275 = vcmp.eq.f32.partialorder %v247, 1.0
    %s276 = scalar_lea.vmem %s2, 16
    %v277 = vld [vmem:[%s276] sm:$0xff]
    %v278 = vld [vmem:[%s276 + $0x8] sm:$0x3]
    %v279 = vsel %vm274, 1.0, 0.0
    %v280 = vsel %vm275, 1.0, 0.0
    %v281 = vadd.f32 %v277, %v279
    %v282 = vadd.f32 %v278, %v280
    %283 = vst [vmem:[%s276] sm:$0xff] %v281
    %284 = vst [vmem:[%s276 + $0x8] sm:$0x3] %v282
    %s285 = scalar_lea.vmem %s3, 16
    %v286 = vld [vmem:[%s285] sm:$0xff]
    %v287 = vld [vmem:[%s285 + $0x8] sm:$0x3]
    %v288 = vsel %vm274, %v192, 0.0
    %v289 = vsel %vm275, %v193, 0.0
    %v290 = vadd.f32 %v286, %v288
    %v291 = vadd.f32 %v287, %v289
    %292 = vst [vmem:[%s285] sm:$0xff] %v290
    %293 = vst [vmem:[%s285 + $0x8] sm:$0x3] %v291
    %s294 = scalar_lea.vmem %s4, 16
    %v295 = vld [vmem:[%s294] sm:$0xff]
    %v296 = vld [vmem:[%s294 + $0x8] sm:$0x3]
    %v297 = vsel %vm274, %v220, 0.0
    %v298 = vsel %vm275, %v221, 0.0
    %v299 = vadd.f32 %v295, %v297
    %v300 = vadd.f32 %v296, %v298
    %301 = vst [vmem:[%s294] sm:$0xff] %v299
    %302 = vst [vmem:[%s294 + $0x8] sm:$0x3] %v300
    %vm303 = vcmp.eq.f32.partialorder %v246, 2.0
    %vm304 = vcmp.eq.f32.partialorder %v247, 2.0
    %s305 = scalar_lea.vmem %s2, 32
    %v306 = vld [vmem:[%s305] sm:$0xff]
    %v307 = vld [vmem:[%s305 + $0x8] sm:$0x3]
    %v308 = vsel %vm303, 1.0, 0.0
    %v309 = vsel %vm304, 1.0, 0.0
    %v310 = vadd.f32 %v306, %v308
    %v311 = vadd.f32 %v307, %v309
    %312 = vst [vmem:[%s305] sm:$0xff] %v310
    %313 = vst [vmem:[%s305 + $0x8] sm:$0x3] %v311
    %s314 = scalar_lea.vmem %s3, 32
    %v315 = vld [vmem:[%s314] sm:$0xff]
    %v316 = vld [vmem:[%s314 + $0x8] sm:$0x3]
    %v317 = vsel %vm303, %v192, 0.0
    %v318 = vsel %vm304, %v193, 0.0
    %v319 = vadd.f32 %v315, %v317
    %v320 = vadd.f32 %v316, %v318
    %321 = vst [vmem:[%s314] sm:$0xff] %v319
    %322 = vst [vmem:[%s314 + $0x8] sm:$0x3] %v320
    %s323 = scalar_lea.vmem %s4, 32
    %v324 = vld [vmem:[%s323] sm:$0xff]
    %v325 = vld [vmem:[%s323 + $0x8] sm:$0x3]
    %v326 = vsel %vm303, %v220, 0.0
    %v327 = vsel %vm304, %v221, 0.0
    %v328 = vadd.f32 %v324, %v326
    %v329 = vadd.f32 %v325, %v327
    %330 = vst [vmem:[%s323] sm:$0xff] %v328
    %331 = vst [vmem:[%s323 + $0x8] sm:$0x3] %v329
    %vm332 = vcmp.eq.f32.partialorder %v246, 3.0
    %vm333 = vcmp.eq.f32.partialorder %v247, 3.0
    %s334 = scalar_lea.vmem %s2, 48
    %v335 = vld [vmem:[%s334] sm:$0xff]
    %v336 = vld [vmem:[%s334 + $0x8] sm:$0x3]
    %v337 = vsel %vm332, 1.0, 0.0
    %v338 = vsel %vm333, 1.0, 0.0
    %v339 = vadd.f32 %v335, %v337
    %v340 = vadd.f32 %v336, %v338
    %341 = vst [vmem:[%s334] sm:$0xff] %v339
    %342 = vst [vmem:[%s334 + $0x8] sm:$0x3] %v340
    %s343 = scalar_lea.vmem %s3, 48
    %v344 = vld [vmem:[%s343] sm:$0xff]
    %v345 = vld [vmem:[%s343 + $0x8] sm:$0x3]
    %v346 = vsel %vm332, %v192, 0.0
    %v347 = vsel %vm333, %v193, 0.0
    %v348 = vadd.f32 %v344, %v346
    %v349 = vadd.f32 %v345, %v347
    %350 = vst [vmem:[%s343] sm:$0xff] %v348
    %351 = vst [vmem:[%s343 + $0x8] sm:$0x3] %v349
    %s352 = scalar_lea.vmem %s4, 48
    %v353 = vld [vmem:[%s352] sm:$0xff]
    %v354 = vld [vmem:[%s352 + $0x8] sm:$0x3]
    %v355 = vsel %vm332, %v220, 0.0
    %v356 = vsel %vm333, %v221, 0.0
    %v357 = vadd.f32 %v353, %v355
    %v358 = vadd.f32 %v354, %v356
    %359 = vst [vmem:[%s352] sm:$0xff] %v357
    %360 = vst [vmem:[%s352 + $0x8] sm:$0x3] %v358
    %vm361 = vcmp.eq.f32.partialorder %v246, 4.0
    %vm362 = vcmp.eq.f32.partialorder %v247, 4.0
    %s363 = scalar_lea.vmem %s2, 64
    %v364 = vld [vmem:[%s363] sm:$0xff]
    %v365 = vld [vmem:[%s363 + $0x8] sm:$0x3]
    %v366 = vsel %vm361, 1.0, 0.0
    %v367 = vsel %vm362, 1.0, 0.0
    %v368 = vadd.f32 %v364, %v366
    %v369 = vadd.f32 %v365, %v367
    %370 = vst [vmem:[%s363] sm:$0xff] %v368
    %371 = vst [vmem:[%s363 + $0x8] sm:$0x3] %v369
    %s372 = scalar_lea.vmem %s3, 64
    %v373 = vld [vmem:[%s372] sm:$0xff]
    %v374 = vld [vmem:[%s372 + $0x8] sm:$0x3]
    %v375 = vsel %vm361, %v192, 0.0
    %v376 = vsel %vm362, %v193, 0.0
    %v377 = vadd.f32 %v373, %v375
    %v378 = vadd.f32 %v374, %v376
    %379 = vst [vmem:[%s372] sm:$0xff] %v377
    %380 = vst [vmem:[%s372 + $0x8] sm:$0x3] %v378
    %s381 = scalar_lea.vmem %s4, 64
    %v382 = vld [vmem:[%s381] sm:$0xff]
    %v383 = vld [vmem:[%s381 + $0x8] sm:$0x3]
    %v384 = vsel %vm361, %v220, 0.0
    %v385 = vsel %vm362, %v221, 0.0
    %v386 = vadd.f32 %v382, %v384
    %v387 = vadd.f32 %v383, %v385
    %388 = vst [vmem:[%s381] sm:$0xff] %v386
    %389 = vst [vmem:[%s381 + $0x8] sm:$0x3] %v387
    %vm390 = vcmp.eq.f32.partialorder %v246, 5.0
    %vm391 = vcmp.eq.f32.partialorder %v247, 5.0
    %s392 = scalar_lea.vmem %s2, 80
    %v393 = vld [vmem:[%s392] sm:$0xff]
    %v394 = vld [vmem:[%s392 + $0x8] sm:$0x3]
    %v395 = vsel %vm390, 1.0, 0.0
    %v396 = vsel %vm391, 1.0, 0.0
    %v397 = vadd.f32 %v393, %v395
    %v398 = vadd.f32 %v394, %v396
    %399 = vst [vmem:[%s392] sm:$0xff] %v397
    %400 = vst [vmem:[%s392 + $0x8] sm:$0x3] %v398
    %s401 = scalar_lea.vmem %s3, 80
    %v402 = vld [vmem:[%s401] sm:$0xff]
    %v403 = vld [vmem:[%s401 + $0x8] sm:$0x3]
    %v404 = vsel %vm390, %v192, 0.0
    %v405 = vsel %vm391, %v193, 0.0
    %v406 = vadd.f32 %v402, %v404
    %v407 = vadd.f32 %v403, %v405
    %408 = vst [vmem:[%s401] sm:$0xff] %v406
    %409 = vst [vmem:[%s401 + $0x8] sm:$0x3] %v407
    %s410 = scalar_lea.vmem %s4, 80
    %v411 = vld [vmem:[%s410] sm:$0xff]
    %v412 = vld [vmem:[%s410 + $0x8] sm:$0x3]
    %v413 = vsel %vm390, %v220, 0.0
    %v414 = vsel %vm391, %v221, 0.0
    %v415 = vadd.f32 %v411, %v413
    %v416 = vadd.f32 %v412, %v414
    %417 = vst [vmem:[%s410] sm:$0xff] %v415
    %418 = vst [vmem:[%s410 + $0x8] sm:$0x3] %v416
    %vm419 = vcmp.eq.f32.partialorder %v246, 6.0
    %vm420 = vcmp.eq.f32.partialorder %v247, 6.0
    %s421 = scalar_lea.vmem %s2, 96
    %v422 = vld [vmem:[%s421] sm:$0xff]
    %v423 = vld [vmem:[%s421 + $0x8] sm:$0x3]
    %v424 = vsel %vm419, 1.0, 0.0
    %v425 = vsel %vm420, 1.0, 0.0
    %v426 = vadd.f32 %v422, %v424
    %v427 = vadd.f32 %v423, %v425
    %428 = vst [vmem:[%s421] sm:$0xff] %v426
    %429 = vst [vmem:[%s421 + $0x8] sm:$0x3] %v427
    %s430 = scalar_lea.vmem %s3, 96
    %v431 = vld [vmem:[%s430] sm:$0xff]
    %v432 = vld [vmem:[%s430 + $0x8] sm:$0x3]
    %v433 = vsel %vm419, %v192, 0.0
    %v434 = vsel %vm420, %v193, 0.0
    %v435 = vadd.f32 %v431, %v433
    %v436 = vadd.f32 %v432, %v434
    %437 = vst [vmem:[%s430] sm:$0xff] %v435
    %438 = vst [vmem:[%s430 + $0x8] sm:$0x3] %v436
    %s439 = scalar_lea.vmem %s4, 96
    %v440 = vld [vmem:[%s439] sm:$0xff]
    %v441 = vld [vmem:[%s439 + $0x8] sm:$0x3]
    %v442 = vsel %vm419, %v220, 0.0
    %v443 = vsel %vm420, %v221, 0.0
    %v444 = vadd.f32 %v440, %v442
    %v445 = vadd.f32 %v441, %v443
    %446 = vst [vmem:[%s439] sm:$0xff] %v444
    %447 = vst [vmem:[%s439 + $0x8] sm:$0x3] %v445
    %vm448 = vcmp.eq.f32.partialorder %v246, 7.0
    %vm449 = vcmp.eq.f32.partialorder %v247, 7.0
    %s450 = scalar_lea.vmem %s2, 112
    %v451 = vld [vmem:[%s450] sm:$0xff]
    %v452 = vld [vmem:[%s450 + $0x8] sm:$0x3]
    %v453 = vsel %vm448, 1.0, 0.0
    %v454 = vsel %vm449, 1.0, 0.0
    %v455 = vadd.f32 %v451, %v453
    %v456 = vadd.f32 %v452, %v454
    %457 = vst [vmem:[%s450] sm:$0xff] %v455
    %458 = vst [vmem:[%s450 + $0x8] sm:$0x3] %v456
    %s459 = scalar_lea.vmem %s3, 112
    %v460 = vld [vmem:[%s459] sm:$0xff]
    %v461 = vld [vmem:[%s459 + $0x8] sm:$0x3]
    %v462 = vsel %vm448, %v192, 0.0
    %v463 = vsel %vm449, %v193, 0.0
    %v464 = vadd.f32 %v460, %v462
    %v465 = vadd.f32 %v461, %v463
    %466 = vst [vmem:[%s459] sm:$0xff] %v464
    %467 = vst [vmem:[%s459 + $0x8] sm:$0x3] %v465
    %s468 = scalar_lea.vmem %s4, 112
    %v469 = vld [vmem:[%s468] sm:$0xff]
    %v470 = vld [vmem:[%s468 + $0x8] sm:$0x3]
    %v471 = vsel %vm448, %v220, 0.0
    %v472 = vsel %vm449, %v221, 0.0
    %v473 = vadd.f32 %v469, %v471
    %v474 = vadd.f32 %v470, %v472
    %475 = vst [vmem:[%s468] sm:$0xff] %v473
    %476 = vst [vmem:[%s468 + $0x8] sm:$0x3] %v474
    %vm477 = vcmp.eq.f32.partialorder %v246, 8.0
    %vm478 = vcmp.eq.f32.partialorder %v247, 8.0
    %s479 = scalar_lea.vmem %s2, 128
    %v480 = vld [vmem:[%s479] sm:$0xff]
    %v481 = vld [vmem:[%s479 + $0x8] sm:$0x3]
    %v482 = vsel %vm477, 1.0, 0.0
    %v483 = vsel %vm478, 1.0, 0.0
    %v484 = vadd.f32 %v480, %v482
    %v485 = vadd.f32 %v481, %v483
    %486 = vst [vmem:[%s479] sm:$0xff] %v484
    %487 = vst [vmem:[%s479 + $0x8] sm:$0x3] %v485
    %s488 = scalar_lea.vmem %s3, 128
    %v489 = vld [vmem:[%s488] sm:$0xff]
    %v490 = vld [vmem:[%s488 + $0x8] sm:$0x3]
    %v491 = vsel %vm477, %v192, 0.0
    %v492 = vsel %vm478, %v193, 0.0
    %v493 = vadd.f32 %v489, %v491
    %v494 = vadd.f32 %v490, %v492
    %495 = vst [vmem:[%s488] sm:$0xff] %v493
    %496 = vst [vmem:[%s488 + $0x8] sm:$0x3] %v494
    %s497 = scalar_lea.vmem %s4, 128
    %v498 = vld [vmem:[%s497] sm:$0xff]
    %v499 = vld [vmem:[%s497 + $0x8] sm:$0x3]
    %v500 = vsel %vm477, %v220, 0.0
    %v501 = vsel %vm478, %v221, 0.0
    %v502 = vadd.f32 %v498, %v500
    %v503 = vadd.f32 %v499, %v501
    %504 = vst [vmem:[%s497] sm:$0xff] %v502
    %505 = vst [vmem:[%s497 + $0x8] sm:$0x3] %v503
    %vm506 = vcmp.eq.f32.partialorder %v246, 9.0
    %vm507 = vcmp.eq.f32.partialorder %v247, 9.0
    %s508 = scalar_lea.vmem %s2, 144
    %v509 = vld [vmem:[%s508] sm:$0xff]
    %v510 = vld [vmem:[%s508 + $0x8] sm:$0x3]
    %v511 = vsel %vm506, 1.0, 0.0
    %v512 = vsel %vm507, 1.0, 0.0
    %v513 = vadd.f32 %v509, %v511
    %v514 = vadd.f32 %v510, %v512
    %515 = vst [vmem:[%s508] sm:$0xff] %v513
    %516 = vst [vmem:[%s508 + $0x8] sm:$0x3] %v514
    %s517 = scalar_lea.vmem %s3, 144
    %v518 = vld [vmem:[%s517] sm:$0xff]
    %v519 = vld [vmem:[%s517 + $0x8] sm:$0x3]
    %v520 = vsel %vm506, %v192, 0.0
    %v521 = vsel %vm507, %v193, 0.0
    %v522 = vadd.f32 %v518, %v520
    %v523 = vadd.f32 %v519, %v521
    %524 = vst [vmem:[%s517] sm:$0xff] %v522
    %525 = vst [vmem:[%s517 + $0x8] sm:$0x3] %v523
    %s526 = scalar_lea.vmem %s4, 144
    %v527 = vld [vmem:[%s526] sm:$0xff]
    %v528 = vld [vmem:[%s526 + $0x8] sm:$0x3]
    %v529 = vsel %vm506, %v220, 0.0
    %v530 = vsel %vm507, %v221, 0.0
    %v531 = vadd.f32 %v527, %v529
    %v532 = vadd.f32 %v528, %v530
    %533 = vst [vmem:[%s526] sm:$0xff] %v531
    %534 = vst [vmem:[%s526 + $0x8] sm:$0x3] %v532
    %vm535 = vcmp.eq.f32.partialorder %v246, 10.0
    %vm536 = vcmp.eq.f32.partialorder %v247, 10.0
    %s537 = scalar_lea.vmem %s2, 160
    %v538 = vld [vmem:[%s537] sm:$0xff]
    %v539 = vld [vmem:[%s537 + $0x8] sm:$0x3]
    %v540 = vsel %vm535, 1.0, 0.0
    %v541 = vsel %vm536, 1.0, 0.0
    %v542 = vadd.f32 %v538, %v540
    %v543 = vadd.f32 %v539, %v541
    %544 = vst [vmem:[%s537] sm:$0xff] %v542
    %545 = vst [vmem:[%s537 + $0x8] sm:$0x3] %v543
    %s546 = scalar_lea.vmem %s3, 160
    %v547 = vld [vmem:[%s546] sm:$0xff]
    %v548 = vld [vmem:[%s546 + $0x8] sm:$0x3]
    %v549 = vsel %vm535, %v192, 0.0
    %v550 = vsel %vm536, %v193, 0.0
    %v551 = vadd.f32 %v547, %v549
    %v552 = vadd.f32 %v548, %v550
    %553 = vst [vmem:[%s546] sm:$0xff] %v551
    %554 = vst [vmem:[%s546 + $0x8] sm:$0x3] %v552
    %s555 = scalar_lea.vmem %s4, 160
    %v556 = vld [vmem:[%s555] sm:$0xff]
    %v557 = vld [vmem:[%s555 + $0x8] sm:$0x3]
    %v558 = vsel %vm535, %v220, 0.0
    %v559 = vsel %vm536, %v221, 0.0
    %v560 = vadd.f32 %v556, %v558
    %v561 = vadd.f32 %v557, %v559
    %562 = vst [vmem:[%s555] sm:$0xff] %v560
    %563 = vst [vmem:[%s555 + $0x8] sm:$0x3] %v561
    %vm564 = vcmp.eq.f32.partialorder %v246, 11.0
    %vm565 = vcmp.eq.f32.partialorder %v247, 11.0
    %s566 = scalar_lea.vmem %s2, 176
    %v567 = vld [vmem:[%s566] sm:$0xff]
    %v568 = vld [vmem:[%s566 + $0x8] sm:$0x3]
    %v569 = vsel %vm564, 1.0, 0.0
    %v570 = vsel %vm565, 1.0, 0.0
    %v571 = vadd.f32 %v567, %v569
    %v572 = vadd.f32 %v568, %v570
    %573 = vst [vmem:[%s566] sm:$0xff] %v571
    %574 = vst [vmem:[%s566 + $0x8] sm:$0x3] %v572
    %s575 = scalar_lea.vmem %s3, 176
    %v576 = vld [vmem:[%s575] sm:$0xff]
    %v577 = vld [vmem:[%s575 + $0x8] sm:$0x3]
    %v578 = vsel %vm564, %v192, 0.0
    %v579 = vsel %vm565, %v193, 0.0
    %v580 = vadd.f32 %v576, %v578
    %v581 = vadd.f32 %v577, %v579
    %582 = vst [vmem:[%s575] sm:$0xff] %v580
    %583 = vst [vmem:[%s575 + $0x8] sm:$0x3] %v581
    %s584 = scalar_lea.vmem %s4, 176
    %v585 = vld [vmem:[%s584] sm:$0xff]
    %v586 = vld [vmem:[%s584 + $0x8] sm:$0x3]
    %v587 = vsel %vm564, %v220, 0.0
    %v588 = vsel %vm565, %v221, 0.0
    %v589 = vadd.f32 %v585, %v587
    %v590 = vadd.f32 %v586, %v588
    %591 = vst [vmem:[%s584] sm:$0xff] %v589
    %592 = vst [vmem:[%s584 + $0x8] sm:$0x3] %v590
    %vm593 = vcmp.eq.f32.partialorder %v246, 12.0
    %vm594 = vcmp.eq.f32.partialorder %v247, 12.0
    %s595 = scalar_lea.vmem %s2, 192
    %v596 = vld [vmem:[%s595] sm:$0xff]
    %v597 = vld [vmem:[%s595 + $0x8] sm:$0x3]
    %v598 = vsel %vm593, 1.0, 0.0
    %v599 = vsel %vm594, 1.0, 0.0
    %v600 = vadd.f32 %v596, %v598
    %v601 = vadd.f32 %v597, %v599
    %602 = vst [vmem:[%s595] sm:$0xff] %v600
    %603 = vst [vmem:[%s595 + $0x8] sm:$0x3] %v601
    %s604 = scalar_lea.vmem %s3, 192
    %v605 = vld [vmem:[%s604] sm:$0xff]
    %v606 = vld [vmem:[%s604 + $0x8] sm:$0x3]
    %v607 = vsel %vm593, %v192, 0.0
    %v608 = vsel %vm594, %v193, 0.0
    %v609 = vadd.f32 %v605, %v607
    %v610 = vadd.f32 %v606, %v608
    %611 = vst [vmem:[%s604] sm:$0xff] %v609
    %612 = vst [vmem:[%s604 + $0x8] sm:$0x3] %v610
    %s613 = scalar_lea.vmem %s4, 192
    %v614 = vld [vmem:[%s613] sm:$0xff]
    %v615 = vld [vmem:[%s613 + $0x8] sm:$0x3]
    %v616 = vsel %vm593, %v220, 0.0
    %v617 = vsel %vm594, %v221, 0.0
    %v618 = vadd.f32 %v614, %v616
    %v619 = vadd.f32 %v615, %v617
    %620 = vst [vmem:[%s613] sm:$0xff] %v618
    %621 = vst [vmem:[%s613 + $0x8] sm:$0x3] %v619
    %vm622 = vcmp.eq.f32.partialorder %v246, 13.0
    %vm623 = vcmp.eq.f32.partialorder %v247, 13.0
    %s624 = scalar_lea.vmem %s2, 208
    %v625 = vld [vmem:[%s624] sm:$0xff]
    %v626 = vld [vmem:[%s624 + $0x8] sm:$0x3]
    %v627 = vsel %vm622, 1.0, 0.0
    %v628 = vsel %vm623, 1.0, 0.0
    %v629 = vadd.f32 %v625, %v627
    %v630 = vadd.f32 %v626, %v628
    %631 = vst [vmem:[%s624] sm:$0xff] %v629
    %632 = vst [vmem:[%s624 + $0x8] sm:$0x3] %v630
    %s633 = scalar_lea.vmem %s3, 208
    %v634 = vld [vmem:[%s633] sm:$0xff]
    %v635 = vld [vmem:[%s633 + $0x8] sm:$0x3]
    %v636 = vsel %vm622, %v192, 0.0
    %v637 = vsel %vm623, %v193, 0.0
    %v638 = vadd.f32 %v634, %v636
    %v639 = vadd.f32 %v635, %v637
    %640 = vst [vmem:[%s633] sm:$0xff] %v638
    %641 = vst [vmem:[%s633 + $0x8] sm:$0x3] %v639
    %s642 = scalar_lea.vmem %s4, 208
    %v643 = vld [vmem:[%s642] sm:$0xff]
    %v644 = vld [vmem:[%s642 + $0x8] sm:$0x3]
    %v645 = vsel %vm622, %v220, 0.0
    %v646 = vsel %vm623, %v221, 0.0
    %v647 = vadd.f32 %v643, %v645
    %v648 = vadd.f32 %v644, %v646
    %649 = vst [vmem:[%s642] sm:$0xff] %v647
    %650 = vst [vmem:[%s642 + $0x8] sm:$0x3] %v648
    %vm651 = vcmp.eq.f32.partialorder %v246, 14.0
    %vm652 = vcmp.eq.f32.partialorder %v247, 14.0
    %s653 = scalar_lea.vmem %s2, 224
    %v654 = vld [vmem:[%s653] sm:$0xff]
    %v655 = vld [vmem:[%s653 + $0x8] sm:$0x3]
    %v656 = vsel %vm651, 1.0, 0.0
    %v657 = vsel %vm652, 1.0, 0.0
    %v658 = vadd.f32 %v654, %v656
    %v659 = vadd.f32 %v655, %v657
    %660 = vst [vmem:[%s653] sm:$0xff] %v658
    %661 = vst [vmem:[%s653 + $0x8] sm:$0x3] %v659
    %s662 = scalar_lea.vmem %s3, 224
    %v663 = vld [vmem:[%s662] sm:$0xff]
    %v664 = vld [vmem:[%s662 + $0x8] sm:$0x3]
    %v665 = vsel %vm651, %v192, 0.0
    %v666 = vsel %vm652, %v193, 0.0
    %v667 = vadd.f32 %v663, %v665
    %v668 = vadd.f32 %v664, %v666
    %669 = vst [vmem:[%s662] sm:$0xff] %v667
    %670 = vst [vmem:[%s662 + $0x8] sm:$0x3] %v668
    %s671 = scalar_lea.vmem %s4, 224
    %v672 = vld [vmem:[%s671] sm:$0xff]
    %v673 = vld [vmem:[%s671 + $0x8] sm:$0x3]
    %v674 = vsel %vm651, %v220, 0.0
    %v675 = vsel %vm652, %v221, 0.0
    %v676 = vadd.f32 %v672, %v674
    %v677 = vadd.f32 %v673, %v675
    %678 = vst [vmem:[%s671] sm:$0xff] %v676
    %679 = vst [vmem:[%s671 + $0x8] sm:$0x3] %v677
    %v680 = vld [vmem:[#allocation2 + $0x8] sm:$0xff]
    %v681 = vld [vmem:[#allocation2 + $0x18] sm:$0x3]
    %v682 = vld [vmem:[%s52 + $0x1] sm:$0x1]
    %s683 = sadd.s32 %s154, 128
    %v684 = vstv %s683
    %v685 = vadd.s32 %v684, %v164
    %vm686 = vcmp.lt.s32.totalorder %v685, 256
    %v687 = vsel %vm168, %v681, -inf
    %v688 = vmax.f32 %v680, %v687
    %v689 = vrot.slane %v688, 4
    %v690 = vmax.f32 %v688, %v689
    %v691 = vrot.slane %v690, 2
    %v692 = vmax.f32 %v690, %v691
    %v693 = vrot.slane %v692, 1
    %v694 = vmax.f32 %v692, %v693
    %v695 = vsub.f32 %v680, %v694
    %v696 = vsub.f32 %v681, %v694
    %v697 = vmul.f32 %v695, 1.442695
    %v698 = vpow.pop %v697
    %v699 = vmul.f32 %v696, 1.442695
    %v700 = vpow.pop %v699
    %v701 = vsel %vm168, %v700, 0.0
    %v702 = vadd.f32 %v698, %v701
    %v703 = vrot.slane %v702, 4
    %v704 = vadd.f32 %v702, %v703
    %v705 = vrot.slane %v704, 2
    %v706 = vadd.f32 %v704, %v705
    %v707 = vrot.slane %v706, 1
    %v708 = vadd.f32 %v706, %v707
    %v709 = vrcp.pop %v708
    %v710 = vmul.f32 %v698, %v709
    %v711 = vmul.f32 %v700, %v709
    %vm712 = vcmp.eq.f32.partialorder %v680, %v694
    %vm713 = vcmp.eq.f32.partialorder %v681, %v694
    %v714 = vsel %vm712, %v158, 10.0
    %v715 = vsel %vm713, %v159, 10.0
    %v716 = vsel %vm168, %v715, inf
    %v717 = vmin.f32 %v714, %v716
    %v718 = vrot.slane %v717, 4
    %v719 = vmin.f32 %v717, %v718
    %v720 = vrot.slane %v719, 2
    %v721 = vmin.f32 %v719, %v720
    %v722 = vrot.slane %v721, 1
    %v723 = vmin.f32 %v721, %v722
    %vm724 = vcmp.eq.f32.partialorder %v158, %v723
    %vm725 = vcmp.eq.f32.partialorder %v159, %v723
    %v726 = vsel %vm724, 1, 0
    %v727 = vsel %vm725, 1, 0
    %v728 = vcvt.s32.f32 %v726
    %v729 = vcvt.s32.f32 %v727
    %v730 = vlaneseq
    %v731 = vshrl.u32 %v730, 7
    %v732 = vsub.s32 0, %v731
    %v733 = vrot.slane %v682, %v732
    %vm734 = vcmp.eq.s32.totalorder %v156, %v733
    %vm735 = vcmp.eq.s32.totalorder %v157, %v733
    %v736 = vsel %vm734, 1, 0
    %v737 = vsel %vm735, 1, 0
    %v738 = vcvt.s32.f32 %v736
    %v739 = vcvt.s32.f32 %v737
    %v740 = vld [vmem:[%s5] sm:$0xff]
    %v741 = vld [vmem:[%s5 + $0x8] sm:$0x3]
    %v742 = vadd.f32 %v740, %v738
    %v743 = vadd.f32 %v741, %v739
    %744 = vst [vmem:[%s5] sm:$0xff] %v742
    %745 = vst [vmem:[%s5 + $0x8] sm:$0x3] %v743
    %v746 = vld [vmem:[%s6] sm:$0xff]
    %v747 = vld [vmem:[%s6 + $0x8] sm:$0x3]
    %v748 = vmul.f32 %v738, %v728
    %v749 = vmul.f32 %v739, %v729
    %v750 = vadd.f32 %v746, %v748
    %v751 = vadd.f32 %v747, %v749
    %752 = vst [vmem:[%s6] sm:$0xff] %v750
    %753 = vst [vmem:[%s6 + $0x8] sm:$0x3] %v751
    %v754 = vmul.f32 %v710, 15.0
    %v755 = vmul.f32 %v711, 15.0
    %v756 = vceil.f32 %v754
    %v757 = vceil.f32 %v755
    %v758 = vsub.f32 %v756, 1.0
    %v759 = vsub.f32 %v757, 1.0
    %v760 = vmin.f32 %v758, 14.0
    %v761 = vmin.f32 %v759, 14.0
    %v762 = vsel %vm686, 1, 0
    %vm763 = vcmp.eq.s32.totalorder %v762, 1
    %v764 = vsel %vm763, %v760, -1.0
    %v765 = vsel %vm763, %v761, -1.0
    %vm766 = vcmp.eq.f32.partialorder %v764, 0.0
    %vm767 = vcmp.eq.f32.partialorder %v765, 0.0
    %v768 = vld [vmem:[%s2] sm:$0xff]
    %v769 = vld [vmem:[%s2 + $0x8] sm:$0x3]
    %v770 = vsel %vm766, 1.0, 0.0
    %v771 = vsel %vm767, 1.0, 0.0
    %v772 = vadd.f32 %v768, %v770
    %v773 = vadd.f32 %v769, %v771
    %774 = vst [vmem:[%s2] sm:$0xff] %v772
    %775 = vst [vmem:[%s2 + $0x8] sm:$0x3] %v773
    %v776 = vld [vmem:[%s3] sm:$0xff]
    %v777 = vld [vmem:[%s3 + $0x8] sm:$0x3]
    %v778 = vsel %vm766, %v710, 0.0
    %v779 = vsel %vm767, %v711, 0.0
    %v780 = vadd.f32 %v776, %v778
    %v781 = vadd.f32 %v777, %v779
    %782 = vst [vmem:[%s3] sm:$0xff] %v780
    %783 = vst [vmem:[%s3 + $0x8] sm:$0x3] %v781
    %v784 = vld [vmem:[%s4] sm:$0xff]
    %v785 = vld [vmem:[%s4 + $0x8] sm:$0x3]
    %v786 = vsel %vm766, %v738, 0.0
    %v787 = vsel %vm767, %v739, 0.0
    %v788 = vadd.f32 %v784, %v786
    %v789 = vadd.f32 %v785, %v787
    %790 = vst [vmem:[%s4] sm:$0xff] %v788
    %791 = vst [vmem:[%s4 + $0x8] sm:$0x3] %v789
    %vm792 = vcmp.eq.f32.partialorder %v764, 1.0
    %vm793 = vcmp.eq.f32.partialorder %v765, 1.0
    %v794 = vld [vmem:[%s276] sm:$0xff]
    %v795 = vld [vmem:[%s276 + $0x8] sm:$0x3]
    %v796 = vsel %vm792, 1.0, 0.0
    %v797 = vsel %vm793, 1.0, 0.0
    %v798 = vadd.f32 %v794, %v796
    %v799 = vadd.f32 %v795, %v797
    %800 = vst [vmem:[%s276] sm:$0xff] %v798
    %801 = vst [vmem:[%s276 + $0x8] sm:$0x3] %v799
    %v802 = vld [vmem:[%s285] sm:$0xff]
    %v803 = vld [vmem:[%s285 + $0x8] sm:$0x3]
    %v804 = vsel %vm792, %v710, 0.0
    %v805 = vsel %vm793, %v711, 0.0
    %v806 = vadd.f32 %v802, %v804
    %v807 = vadd.f32 %v803, %v805
    %808 = vst [vmem:[%s285] sm:$0xff] %v806
    %809 = vst [vmem:[%s285 + $0x8] sm:$0x3] %v807
    %v810 = vld [vmem:[%s294] sm:$0xff]
    %v811 = vld [vmem:[%s294 + $0x8] sm:$0x3]
    %v812 = vsel %vm792, %v738, 0.0
    %v813 = vsel %vm793, %v739, 0.0
    %v814 = vadd.f32 %v810, %v812
    %v815 = vadd.f32 %v811, %v813
    %816 = vst [vmem:[%s294] sm:$0xff] %v814
    %817 = vst [vmem:[%s294 + $0x8] sm:$0x3] %v815
    %vm818 = vcmp.eq.f32.partialorder %v764, 2.0
    %vm819 = vcmp.eq.f32.partialorder %v765, 2.0
    %v820 = vld [vmem:[%s305] sm:$0xff]
    %v821 = vld [vmem:[%s305 + $0x8] sm:$0x3]
    %v822 = vsel %vm818, 1.0, 0.0
    %v823 = vsel %vm819, 1.0, 0.0
    %v824 = vadd.f32 %v820, %v822
    %v825 = vadd.f32 %v821, %v823
    %826 = vst [vmem:[%s305] sm:$0xff] %v824
    %827 = vst [vmem:[%s305 + $0x8] sm:$0x3] %v825
    %v828 = vld [vmem:[%s314] sm:$0xff]
    %v829 = vld [vmem:[%s314 + $0x8] sm:$0x3]
    %v830 = vsel %vm818, %v710, 0.0
    %v831 = vsel %vm819, %v711, 0.0
    %v832 = vadd.f32 %v828, %v830
    %v833 = vadd.f32 %v829, %v831
    %834 = vst [vmem:[%s314] sm:$0xff] %v832
    %835 = vst [vmem:[%s314 + $0x8] sm:$0x3] %v833
    %v836 = vld [vmem:[%s323] sm:$0xff]
    %v837 = vld [vmem:[%s323 + $0x8] sm:$0x3]
    %v838 = vsel %vm818, %v738, 0.0
    %v839 = vsel %vm819, %v739, 0.0
    %v840 = vadd.f32 %v836, %v838
    %v841 = vadd.f32 %v837, %v839
    %842 = vst [vmem:[%s323] sm:$0xff] %v840
    %843 = vst [vmem:[%s323 + $0x8] sm:$0x3] %v841
    %vm844 = vcmp.eq.f32.partialorder %v764, 3.0
    %vm845 = vcmp.eq.f32.partialorder %v765, 3.0
    %v846 = vld [vmem:[%s334] sm:$0xff]
    %v847 = vld [vmem:[%s334 + $0x8] sm:$0x3]
    %v848 = vsel %vm844, 1.0, 0.0
    %v849 = vsel %vm845, 1.0, 0.0
    %v850 = vadd.f32 %v846, %v848
    %v851 = vadd.f32 %v847, %v849
    %852 = vst [vmem:[%s334] sm:$0xff] %v850
    %853 = vst [vmem:[%s334 + $0x8] sm:$0x3] %v851
    %v854 = vld [vmem:[%s343] sm:$0xff]
    %v855 = vld [vmem:[%s343 + $0x8] sm:$0x3]
    %v856 = vsel %vm844, %v710, 0.0
    %v857 = vsel %vm845, %v711, 0.0
    %v858 = vadd.f32 %v854, %v856
    %v859 = vadd.f32 %v855, %v857
    %860 = vst [vmem:[%s343] sm:$0xff] %v858
    %861 = vst [vmem:[%s343 + $0x8] sm:$0x3] %v859
    %v862 = vld [vmem:[%s352] sm:$0xff]
    %v863 = vld [vmem:[%s352 + $0x8] sm:$0x3]
    %v864 = vsel %vm844, %v738, 0.0
    %v865 = vsel %vm845, %v739, 0.0
    %v866 = vadd.f32 %v862, %v864
    %v867 = vadd.f32 %v863, %v865
    %868 = vst [vmem:[%s352] sm:$0xff] %v866
    %869 = vst [vmem:[%s352 + $0x8] sm:$0x3] %v867
    %vm870 = vcmp.eq.f32.partialorder %v764, 4.0
    %vm871 = vcmp.eq.f32.partialorder %v765, 4.0
    %v872 = vld [vmem:[%s363] sm:$0xff]
    %v873 = vld [vmem:[%s363 + $0x8] sm:$0x3]
    %v874 = vsel %vm870, 1.0, 0.0
    %v875 = vsel %vm871, 1.0, 0.0
    %v876 = vadd.f32 %v872, %v874
    %v877 = vadd.f32 %v873, %v875
    %878 = vst [vmem:[%s363] sm:$0xff] %v876
    %879 = vst [vmem:[%s363 + $0x8] sm:$0x3] %v877
    %v880 = vld [vmem:[%s372] sm:$0xff]
    %v881 = vld [vmem:[%s372 + $0x8] sm:$0x3]
    %v882 = vsel %vm870, %v710, 0.0
    %v883 = vsel %vm871, %v711, 0.0
    %v884 = vadd.f32 %v880, %v882
    %v885 = vadd.f32 %v881, %v883
    %886 = vst [vmem:[%s372] sm:$0xff] %v884
    %887 = vst [vmem:[%s372 + $0x8] sm:$0x3] %v885
    %v888 = vld [vmem:[%s381] sm:$0xff]
    %v889 = vld [vmem:[%s381 + $0x8] sm:$0x3]
    %v890 = vsel %vm870, %v738, 0.0
    %v891 = vsel %vm871, %v739, 0.0
    %v892 = vadd.f32 %v888, %v890
    %v893 = vadd.f32 %v889, %v891
    %894 = vst [vmem:[%s381] sm:$0xff] %v892
    %895 = vst [vmem:[%s381 + $0x8] sm:$0x3] %v893
    %vm896 = vcmp.eq.f32.partialorder %v764, 5.0
    %vm897 = vcmp.eq.f32.partialorder %v765, 5.0
    %v898 = vld [vmem:[%s392] sm:$0xff]
    %v899 = vld [vmem:[%s392 + $0x8] sm:$0x3]
    %v900 = vsel %vm896, 1.0, 0.0
    %v901 = vsel %vm897, 1.0, 0.0
    %v902 = vadd.f32 %v898, %v900
    %v903 = vadd.f32 %v899, %v901
    %904 = vst [vmem:[%s392] sm:$0xff] %v902
    %905 = vst [vmem:[%s392 + $0x8] sm:$0x3] %v903
    %v906 = vld [vmem:[%s401] sm:$0xff]
    %v907 = vld [vmem:[%s401 + $0x8] sm:$0x3]
    %v908 = vsel %vm896, %v710, 0.0
    %v909 = vsel %vm897, %v711, 0.0
    %v910 = vadd.f32 %v906, %v908
    %v911 = vadd.f32 %v907, %v909
    %912 = vst [vmem:[%s401] sm:$0xff] %v910
    %913 = vst [vmem:[%s401 + $0x8] sm:$0x3] %v911
    %v914 = vld [vmem:[%s410] sm:$0xff]
    %v915 = vld [vmem:[%s410 + $0x8] sm:$0x3]
    %v916 = vsel %vm896, %v738, 0.0
    %v917 = vsel %vm897, %v739, 0.0
    %v918 = vadd.f32 %v914, %v916
    %v919 = vadd.f32 %v915, %v917
    %920 = vst [vmem:[%s410] sm:$0xff] %v918
    %921 = vst [vmem:[%s410 + $0x8] sm:$0x3] %v919
    %vm922 = vcmp.eq.f32.partialorder %v764, 6.0
    %vm923 = vcmp.eq.f32.partialorder %v765, 6.0
    %v924 = vld [vmem:[%s421] sm:$0xff]
    %v925 = vld [vmem:[%s421 + $0x8] sm:$0x3]
    %v926 = vsel %vm922, 1.0, 0.0
    %v927 = vsel %vm923, 1.0, 0.0
    %v928 = vadd.f32 %v924, %v926
    %v929 = vadd.f32 %v925, %v927
    %930 = vst [vmem:[%s421] sm:$0xff] %v928
    %931 = vst [vmem:[%s421 + $0x8] sm:$0x3] %v929
    %v932 = vld [vmem:[%s430] sm:$0xff]
    %v933 = vld [vmem:[%s430 + $0x8] sm:$0x3]
    %v934 = vsel %vm922, %v710, 0.0
    %v935 = vsel %vm923, %v711, 0.0
    %v936 = vadd.f32 %v932, %v934
    %v937 = vadd.f32 %v933, %v935
    %938 = vst [vmem:[%s430] sm:$0xff] %v936
    %939 = vst [vmem:[%s430 + $0x8] sm:$0x3] %v937
    %v940 = vld [vmem:[%s439] sm:$0xff]
    %v941 = vld [vmem:[%s439 + $0x8] sm:$0x3]
    %v942 = vsel %vm922, %v738, 0.0
    %v943 = vsel %vm923, %v739, 0.0
    %v944 = vadd.f32 %v940, %v942
    %v945 = vadd.f32 %v941, %v943
    %946 = vst [vmem:[%s439] sm:$0xff] %v944
    %947 = vst [vmem:[%s439 + $0x8] sm:$0x3] %v945
    %vm948 = vcmp.eq.f32.partialorder %v764, 7.0
    %vm949 = vcmp.eq.f32.partialorder %v765, 7.0
    %v950 = vld [vmem:[%s450] sm:$0xff]
    %v951 = vld [vmem:[%s450 + $0x8] sm:$0x3]
    %v952 = vsel %vm948, 1.0, 0.0
    %v953 = vsel %vm949, 1.0, 0.0
    %v954 = vadd.f32 %v950, %v952
    %v955 = vadd.f32 %v951, %v953
    %956 = vst [vmem:[%s450] sm:$0xff] %v954
    %957 = vst [vmem:[%s450 + $0x8] sm:$0x3] %v955
    %v958 = vld [vmem:[%s459] sm:$0xff]
    %v959 = vld [vmem:[%s459 + $0x8] sm:$0x3]
    %v960 = vsel %vm948, %v710, 0.0
    %v961 = vsel %vm949, %v711, 0.0
    %v962 = vadd.f32 %v958, %v960
    %v963 = vadd.f32 %v959, %v961
    %964 = vst [vmem:[%s459] sm:$0xff] %v962
    %965 = vst [vmem:[%s459 + $0x8] sm:$0x3] %v963
    %v966 = vld [vmem:[%s468] sm:$0xff]
    %v967 = vld [vmem:[%s468 + $0x8] sm:$0x3]
    %v968 = vsel %vm948, %v738, 0.0
    %v969 = vsel %vm949, %v739, 0.0
    %v970 = vadd.f32 %v966, %v968
    %v971 = vadd.f32 %v967, %v969
    %972 = vst [vmem:[%s468] sm:$0xff] %v970
    %973 = vst [vmem:[%s468 + $0x8] sm:$0x3] %v971
    %vm974 = vcmp.eq.f32.partialorder %v764, 8.0
    %vm975 = vcmp.eq.f32.partialorder %v765, 8.0
    %v976 = vld [vmem:[%s479] sm:$0xff]
    %v977 = vld [vmem:[%s479 + $0x8] sm:$0x3]
    %v978 = vsel %vm974, 1.0, 0.0
    %v979 = vsel %vm975, 1.0, 0.0
    %v980 = vadd.f32 %v976, %v978
    %v981 = vadd.f32 %v977, %v979
    %982 = vst [vmem:[%s479] sm:$0xff] %v980
    %983 = vst [vmem:[%s479 + $0x8] sm:$0x3] %v981
    %v984 = vld [vmem:[%s488] sm:$0xff]
    %v985 = vld [vmem:[%s488 + $0x8] sm:$0x3]
    %v986 = vsel %vm974, %v710, 0.0
    %v987 = vsel %vm975, %v711, 0.0
    %v988 = vadd.f32 %v984, %v986
    %v989 = vadd.f32 %v985, %v987
    %990 = vst [vmem:[%s488] sm:$0xff] %v988
    %991 = vst [vmem:[%s488 + $0x8] sm:$0x3] %v989
    %v992 = vld [vmem:[%s497] sm:$0xff]
    %v993 = vld [vmem:[%s497 + $0x8] sm:$0x3]
    %v994 = vsel %vm974, %v738, 0.0
    %v995 = vsel %vm975, %v739, 0.0
    %v996 = vadd.f32 %v992, %v994
    %v997 = vadd.f32 %v993, %v995
    %998 = vst [vmem:[%s497] sm:$0xff] %v996
    %999 = vst [vmem:[%s497 + $0x8] sm:$0x3] %v997
    %vm1000 = vcmp.eq.f32.partialorder %v764, 9.0
    %vm1001 = vcmp.eq.f32.partialorder %v765, 9.0
    %v1002 = vld [vmem:[%s508] sm:$0xff]
    %v1003 = vld [vmem:[%s508 + $0x8] sm:$0x3]
    %v1004 = vsel %vm1000, 1.0, 0.0
    %v1005 = vsel %vm1001, 1.0, 0.0
    %v1006 = vadd.f32 %v1002, %v1004
    %v1007 = vadd.f32 %v1003, %v1005
    %1008 = vst [vmem:[%s508] sm:$0xff] %v1006
    %1009 = vst [vmem:[%s508 + $0x8] sm:$0x3] %v1007
    %v1010 = vld [vmem:[%s517] sm:$0xff]
    %v1011 = vld [vmem:[%s517 + $0x8] sm:$0x3]
    %v1012 = vsel %vm1000, %v710, 0.0
    %v1013 = vsel %vm1001, %v711, 0.0
    %v1014 = vadd.f32 %v1010, %v1012
    %v1015 = vadd.f32 %v1011, %v1013
    %1016 = vst [vmem:[%s517] sm:$0xff] %v1014
    %1017 = vst [vmem:[%s517 + $0x8] sm:$0x3] %v1015
    %v1018 = vld [vmem:[%s526] sm:$0xff]
    %v1019 = vld [vmem:[%s526 + $0x8] sm:$0x3]
    %v1020 = vsel %vm1000, %v738, 0.0
    %v1021 = vsel %vm1001, %v739, 0.0
    %v1022 = vadd.f32 %v1018, %v1020
    %v1023 = vadd.f32 %v1019, %v1021
    %1024 = vst [vmem:[%s526] sm:$0xff] %v1022
    %1025 = vst [vmem:[%s526 + $0x8] sm:$0x3] %v1023
    %vm1026 = vcmp.eq.f32.partialorder %v764, 10.0
    %vm1027 = vcmp.eq.f32.partialorder %v765, 10.0
    %v1028 = vld [vmem:[%s537] sm:$0xff]
    %v1029 = vld [vmem:[%s537 + $0x8] sm:$0x3]
    %v1030 = vsel %vm1026, 1.0, 0.0
    %v1031 = vsel %vm1027, 1.0, 0.0
    %v1032 = vadd.f32 %v1028, %v1030
    %v1033 = vadd.f32 %v1029, %v1031
    %1034 = vst [vmem:[%s537] sm:$0xff] %v1032
    %1035 = vst [vmem:[%s537 + $0x8] sm:$0x3] %v1033
    %v1036 = vld [vmem:[%s546] sm:$0xff]
    %v1037 = vld [vmem:[%s546 + $0x8] sm:$0x3]
    %v1038 = vsel %vm1026, %v710, 0.0
    %v1039 = vsel %vm1027, %v711, 0.0
    %v1040 = vadd.f32 %v1036, %v1038
    %v1041 = vadd.f32 %v1037, %v1039
    %1042 = vst [vmem:[%s546] sm:$0xff] %v1040
    %1043 = vst [vmem:[%s546 + $0x8] sm:$0x3] %v1041
    %v1044 = vld [vmem:[%s555] sm:$0xff]
    %v1045 = vld [vmem:[%s555 + $0x8] sm:$0x3]
    %v1046 = vsel %vm1026, %v738, 0.0
    %v1047 = vsel %vm1027, %v739, 0.0
    %v1048 = vadd.f32 %v1044, %v1046
    %v1049 = vadd.f32 %v1045, %v1047
    %1050 = vst [vmem:[%s555] sm:$0xff] %v1048
    %1051 = vst [vmem:[%s555 + $0x8] sm:$0x3] %v1049
    %vm1052 = vcmp.eq.f32.partialorder %v764, 11.0
    %vm1053 = vcmp.eq.f32.partialorder %v765, 11.0
    %v1054 = vld [vmem:[%s566] sm:$0xff]
    %v1055 = vld [vmem:[%s566 + $0x8] sm:$0x3]
    %v1056 = vsel %vm1052, 1.0, 0.0
    %v1057 = vsel %vm1053, 1.0, 0.0
    %v1058 = vadd.f32 %v1054, %v1056
    %v1059 = vadd.f32 %v1055, %v1057
    %1060 = vst [vmem:[%s566] sm:$0xff] %v1058
    %1061 = vst [vmem:[%s566 + $0x8] sm:$0x3] %v1059
    %v1062 = vld [vmem:[%s575] sm:$0xff]
    %v1063 = vld [vmem:[%s575 + $0x8] sm:$0x3]
    %v1064 = vsel %vm1052, %v710, 0.0
    %v1065 = vsel %vm1053, %v711, 0.0
    %v1066 = vadd.f32 %v1062, %v1064
    %v1067 = vadd.f32 %v1063, %v1065
    %1068 = vst [vmem:[%s575] sm:$0xff] %v1066
    %1069 = vst [vmem:[%s575 + $0x8] sm:$0x3] %v1067
    %v1070 = vld [vmem:[%s584] sm:$0xff]
    %v1071 = vld [vmem:[%s584 + $0x8] sm:$0x3]
    %v1072 = vsel %vm1052, %v738, 0.0
    %v1073 = vsel %vm1053, %v739, 0.0
    %v1074 = vadd.f32 %v1070, %v1072
    %v1075 = vadd.f32 %v1071, %v1073
    %1076 = vst [vmem:[%s584] sm:$0xff] %v1074
    %1077 = vst [vmem:[%s584 + $0x8] sm:$0x3] %v1075
    %vm1078 = vcmp.eq.f32.partialorder %v764, 12.0
    %vm1079 = vcmp.eq.f32.partialorder %v765, 12.0
    %v1080 = vld [vmem:[%s595] sm:$0xff]
    %v1081 = vld [vmem:[%s595 + $0x8] sm:$0x3]
    %v1082 = vsel %vm1078, 1.0, 0.0
    %v1083 = vsel %vm1079, 1.0, 0.0
    %v1084 = vadd.f32 %v1080, %v1082
    %v1085 = vadd.f32 %v1081, %v1083
    %1086 = vst [vmem:[%s595] sm:$0xff] %v1084
    %1087 = vst [vmem:[%s595 + $0x8] sm:$0x3] %v1085
    %v1088 = vld [vmem:[%s604] sm:$0xff]
    %v1089 = vld [vmem:[%s604 + $0x8] sm:$0x3]
    %v1090 = vsel %vm1078, %v710, 0.0
    %v1091 = vsel %vm1079, %v711, 0.0
    %v1092 = vadd.f32 %v1088, %v1090
    %v1093 = vadd.f32 %v1089, %v1091
    %1094 = vst [vmem:[%s604] sm:$0xff] %v1092
    %1095 = vst [vmem:[%s604 + $0x8] sm:$0x3] %v1093
    %v1096 = vld [vmem:[%s613] sm:$0xff]
    %v1097 = vld [vmem:[%s613 + $0x8] sm:$0x3]
    %v1098 = vsel %vm1078, %v738, 0.0
    %v1099 = vsel %vm1079, %v739, 0.0
    %v1100 = vadd.f32 %v1096, %v1098
    %v1101 = vadd.f32 %v1097, %v1099
    %1102 = vst [vmem:[%s613] sm:$0xff] %v1100
    %1103 = vst [vmem:[%s613 + $0x8] sm:$0x3] %v1101
    %vm1104 = vcmp.eq.f32.partialorder %v764, 13.0
    %vm1105 = vcmp.eq.f32.partialorder %v765, 13.0
    %v1106 = vld [vmem:[%s624] sm:$0xff]
    %v1107 = vld [vmem:[%s624 + $0x8] sm:$0x3]
    %v1108 = vsel %vm1104, 1.0, 0.0
    %v1109 = vsel %vm1105, 1.0, 0.0
    %v1110 = vadd.f32 %v1106, %v1108
    %v1111 = vadd.f32 %v1107, %v1109
    %1112 = vst [vmem:[%s624] sm:$0xff] %v1110
    %1113 = vst [vmem:[%s624 + $0x8] sm:$0x3] %v1111
    %v1114 = vld [vmem:[%s633] sm:$0xff]
    %v1115 = vld [vmem:[%s633 + $0x8] sm:$0x3]
    %v1116 = vsel %vm1104, %v710, 0.0
    %v1117 = vsel %vm1105, %v711, 0.0
    %v1118 = vadd.f32 %v1114, %v1116
    %v1119 = vadd.f32 %v1115, %v1117
    %1120 = vst [vmem:[%s633] sm:$0xff] %v1118
    %1121 = vst [vmem:[%s633 + $0x8] sm:$0x3] %v1119
    %v1122 = vld [vmem:[%s642] sm:$0xff]
    %v1123 = vld [vmem:[%s642 + $0x8] sm:$0x3]
    %v1124 = vsel %vm1104, %v738, 0.0
    %v1125 = vsel %vm1105, %v739, 0.0
    %v1126 = vadd.f32 %v1122, %v1124
    %v1127 = vadd.f32 %v1123, %v1125
    %1128 = vst [vmem:[%s642] sm:$0xff] %v1126
    %1129 = vst [vmem:[%s642 + $0x8] sm:$0x3] %v1127
    %vm1130 = vcmp.eq.f32.partialorder %v764, 14.0
    %vm1131 = vcmp.eq.f32.partialorder %v765, 14.0
    %v1132 = vld [vmem:[%s653] sm:$0xff]
    %v1133 = vld [vmem:[%s653 + $0x8] sm:$0x3]
    %v1134 = vsel %vm1130, 1.0, 0.0
    %v1135 = vsel %vm1131, 1.0, 0.0
    %v1136 = vadd.f32 %v1132, %v1134
    %v1137 = vadd.f32 %v1133, %v1135
    %1138 = vst [vmem:[%s653] sm:$0xff] %v1136
    %1139 = vst [vmem:[%s653 + $0x8] sm:$0x3] %v1137
    %v1140 = vld [vmem:[%s662] sm:$0xff]
    %v1141 = vld [vmem:[%s662 + $0x8] sm:$0x3]
    %v1142 = vsel %vm1130, %v710, 0.0
    %v1143 = vsel %vm1131, %v711, 0.0
    %v1144 = vadd.f32 %v1140, %v1142
    %v1145 = vadd.f32 %v1141, %v1143
    %1146 = vst [vmem:[%s662] sm:$0xff] %v1144
    %1147 = vst [vmem:[%s662 + $0x8] sm:$0x3] %v1145
    %v1148 = vld [vmem:[%s671] sm:$0xff]
    %v1149 = vld [vmem:[%s671 + $0x8] sm:$0x3]
    %v1150 = vsel %vm1130, %v738, 0.0
    %v1151 = vsel %vm1131, %v739, 0.0
    %v1152 = vadd.f32 %v1148, %v1150
    %v1153 = vadd.f32 %v1149, %v1151
    %1154 = vst [vmem:[%s671] sm:$0xff] %v1152
    %1155 = vst [vmem:[%s671 + $0x8] sm:$0x3] %v1153
    // Predicated region
    $region18: #{tpu_custom_call.1} parent=1 // pred_check
      _
    $region19: #{tpu_custom_call.1} parent=1 // pred_check_branch
      %1157 = sbr.rel (0) target = $region21
    $region20: #{tpu_custom_call.1} parent=1 // pred_region
      _
    $region21: #{tpu_custom_call.1} parent=1 // pred_fallthru
      _
    // Predicated region
    $region22: #{tpu_custom_call.1} parent=1 // pred_check
      _
    $region23: #{tpu_custom_call.1} parent=1 // pred_check_branch
      %1159 = sbr.rel (0) target = $region25
    $region24: #{tpu_custom_call.1} parent=1 // pred_region
      _
    $region25: #{tpu_custom_call.1} parent=1 // pred_fallthru
      _
    // Predicated region
    $region26: #{tpu_custom_call.1} parent=1 // pred_check
      _
    $region27: #{tpu_custom_call.1} parent=1 // pred_check_branch
      %1161 = sbr.rel (0) target = $region29
    $region28: #{tpu_custom_call.1} parent=1 // pred_region
      _
    $region29: #{tpu_custom_call.1} parent=1 // pred_fallthru
      _
    // Predicated region
    $region30: #{tpu_custom_call.1} parent=1 // pred_check
      _
    $region31: #{tpu_custom_call.1} parent=1 // pred_check_branch
      %1163 = sbr.rel (0) target = $region33
    $region32: #{tpu_custom_call.1} parent=1 // pred_region
      _
    $region33: #{tpu_custom_call.1} parent=1 // pred_fallthru
      _
    // Predicated region
    $region34: #{tpu_custom_call.1} parent=1 // pred_check
      _
    $region35: #{tpu_custom_call.1} parent=1 // pred_check_branch
      %1165 = sbr.rel (0) target = $region37
    $region36: #{tpu_custom_call.1} parent=1 // pred_region
      _
    $region37: #{tpu_custom_call.1} parent=1 // pred_fallthru
      _
    // Predicated region
    $region38: #{tpu_custom_call.1} parent=1 // pred_check
      _
    $region39: #{tpu_custom_call.1} parent=1 // pred_check_branch
      %1167 = sbr.rel (0) target = $region41
    $region40: #{tpu_custom_call.1} parent=1 // pred_region
      _
    $region41: #{tpu_custom_call.1} parent=1 // pred_fallthru
      _
    // Predicated region
    $region42: #{tpu_custom_call.1} parent=1 // pred_check
      _
    $region43: #{tpu_custom_call.1} parent=1 // pred_check_branch
      %1169 = sbr.rel (0) target = $region45
    $region44: #{tpu_custom_call.1} parent=1 // pred_region
      _
    $region45: #{tpu_custom_call.1} parent=1 // pred_fallthru
      _
    // Predicated region
    $region46: #{tpu_custom_call.1} parent=1 // pred_check
      _
    $region47: #{tpu_custom_call.1} parent=1 // pred_check_branch
      %1171 = sbr.rel (0) target = $region49
    $region48: #{tpu_custom_call.1} parent=1 // pred_region
      _
    $region49: #{tpu_custom_call.1} parent=1 // pred_fallthru
      _
    // Predicated region
    $region50: #{tpu_custom_call.1} parent=1 // pred_check
      _
    $region51: #{tpu_custom_call.1} parent=1 // pred_check_branch
      %1173 = sbr.rel (0) target = $region53
    $region52: #{tpu_custom_call.1} parent=1 // pred_region
      _
    $region53: #{tpu_custom_call.1} parent=1 // pred_fallthru
      _
    // Predicated region
    $region54: #{tpu_custom_call.1} parent=1 // pred_check
      _
    $region55: #{tpu_custom_call.1} parent=1 // pred_check_branch
      %1175 = sbr.rel (0) target = $region57
    $region56: #{tpu_custom_call.1} parent=1 // pred_region
      _
    $region57: #{tpu_custom_call.1} parent=1 // pred_fallthru
      _
    %1176 = vsyncpa [#allocation3], 1

</llo_original>
